<compile_context>
chip_gen: v7x
topology: tpu7x:2x2x1
jax: 0.10.0
libtpu: 0.0.40
codegen_flags: <defaults>
</compile_context>

<pallas_src>
import functools

import numpy as np
import jax
import jax.numpy as jnp
from jax.experimental import pallas as pl
from jax.experimental.pallas import tpu as pltpu


def _round_up(x, m):
    return (x + m - 1) // m * m


def _pick_batch_block(batch, bytes_per_batch, budget_bytes=4 << 20, max_bb=8):
    """Largest batch block <= max_bb that divides `batch` and fits the VMEM budget."""
    bb = 1
    for cand in range(1, min(batch, max_bb) + 1):
        if batch % cand == 0 and cand * bytes_per_batch <= budget_bytes:
            bb = cand
    return bb


def _dcl_head_kernel(feat_ref, wcat_ref, pmat_ref, bm_ref, cs_ref, mask_ref,
                     *, bb, inv_hw):
    # feat_ref: (BB, C, HW)     BB batch elements, NCHW-derived layout (HW on lanes)
    # wcat_ref: (Nc, C)         rows = [w_mask ; w_cls ; w_swap ; zero pad] (resident)
    # pmat_ref: (HW, HWp_pad)   2x2 average-pool matrix (0.25 entries), lane-padded
    # bm_ref:   (1, 1) SMEM     conv-mask bias
    # cs_ref:   (BB, Nc, 1)     per-row spatial means -> pooled logits (rows 1..3*ncls)
    # mask_ref: (BB, 1, HWp_pad) tanh(pooled conv-mask), lane-padded
    bias = bm_ref[0, 0]
    wcat = wcat_ref[...]
    pmat = pmat_ref[...]
    for b in range(bb):                                      # compile-time unrolled
        feat = feat_ref[b]                                   # (C, HW)

        # One MXU matmul: 1x1 conv AND both classifiers' contraction over C.
        z = jnp.dot(wcat, feat,
                    preferred_element_type=jnp.float32)      # (Nc, HW) f32

        # AdaptiveAvgPool2d(1) + Linear == mean over HW of per-position logits.
        cs_ref[b] = jnp.sum(z, axis=1, keepdims=True) * inv_hw   # (Nc, 1)

        # Convmask row: + bias, AvgPool2d(2,2) as a tiny matmul, tanh (EUP).
        mrow = z[0:1, :] + bias                              # (1, HW)
        mp = jnp.dot(mrow, pmat,
                     preferred_element_type=jnp.float32)     # (1, HWp_pad)
        mask_ref[b] = jnp.tanh(mp)


def dcl_forward(x_nchw, params):
    """x_nchw: (B, 2048, H, W) backbone feature map (NCHW, like PyTorch).

    params use the PyTorch layouts:
      w_cls  : (ncls, 2048)      classifier.weight        (no bias)
      w_swap : (2*ncls, 2048)    classifier_swap.weight   (no bias)
      w_mask : (1, 2048, 1, 1)   Convmask.weight
      b_mask : (1,)              Convmask.bias
    Returns [out_cls, out_swap, mask] like DCLModel.forward.
    """
    B, C, H, W = x_nchw.shape
    assert H % 2 == 0 and W % 2 == 0
    Hp, Wp = H // 2, W // 2
    HW, HWp = H * W, Hp * Wp
    HWp_pad = _round_up(HWp, 128)

    # Free reshape (contiguous dims merge): no transpose, no dtype change of the
    # big feature tensor.
    feat = x_nchw.reshape(B, C, HW)

    w_cls = params["w_cls"]
    w_swap = params["w_swap"]
    w_mask = params["w_mask"].reshape(1, C)
    b_mask = params["b_mask"].reshape(1, 1).astype(jnp.float32)
    ncls = w_cls.shape[0]

    nrows = 1 + 3 * ncls
    Nc = _round_up(nrows, 128)
    wcat = jnp.concatenate([w_mask, w_cls, w_swap], axis=0)
    wcat = jnp.pad(wcat, ((0, Nc - nrows), (0, 0))).astype(feat.dtype)   # (Nc, C)

    # 2x2 average-pool matrix: flat (h, w) -> flat (h//2, w//2), lane-padded to 128.
    rows = np.arange(HW)
    cols = ((rows // W) // 2) * Wp + (rows % W) // 2
    pmat_np = np.zeros((HW, HWp_pad), np.float32)
    pmat_np[rows, cols] = 0.25
    pmat = jnp.asarray(pmat_np)

    bytes_per_batch = C * HW * feat.dtype.itemsize
    BB = _pick_batch_block(B, bytes_per_batch)

    kernel = functools.partial(_dcl_head_kernel, bb=BB, inv_hw=1.0 / HW)

    cs, maskp = pl.pallas_call(
        kernel,
        out_shape=(
            jax.ShapeDtypeStruct((B, Nc, 1), jnp.float32),
            jax.ShapeDtypeStruct((B, 1, HWp_pad), jnp.float32),
        ),
        grid=(B // BB,),
        in_specs=[
            pl.BlockSpec((BB, C, HW), lambda g: (g, 0, 0)),       # streamed batch block
            pl.BlockSpec((Nc, C), lambda g: (0, 0)),              # resident weights
            pl.BlockSpec((HW, HWp_pad), lambda g: (0, 0)),        # resident pool matrix
            pl.BlockSpec(memory_space=pltpu.MemorySpace.SMEM),    # conv bias scalar
        ],
        out_specs=(
            pl.BlockSpec((BB, Nc, 1), lambda g: (g, 0, 0)),
            pl.BlockSpec((BB, 1, HWp_pad), lambda g: (g, 0, 0)),
        ),
        compiler_params=pltpu.CompilerParams(
            dimension_semantics=("parallel",)),
    )(feat, wcat, pmat, b_mask)

    out_cls = cs[:, 1:1 + ncls, 0]
    out_swap = cs[:, 1 + ncls:1 + 3 * ncls, 0]
    mask = maskp[:, 0, :HWp]
    return [out_cls, out_swap, mask]


def dcl_reference(x, params):
    """Numpy reference mirroring the PyTorch forward (on the feature map), in f32."""
    x32 = np.asarray(x.astype(jnp.float32))
    wc = np.asarray(params["w_cls"].astype(jnp.float32))
    ws = np.asarray(params["w_swap"].astype(jnp.float32))
    wm = np.asarray(params["w_mask"].astype(jnp.float32)).reshape(-1)
    bm = float(np.asarray(params["b_mask"].astype(jnp.float32)).reshape(-1)[0])

    B, C, H, W = x32.shape
    mask = np.einsum("bchw,c->bhw", x32, wm) + bm
    mask = mask.reshape(B, H // 2, 2, W // 2, 2).mean(axis=(2, 4))
    mask = np.tanh(mask).reshape(B, -1)
    pooled = x32.mean(axis=(2, 3))
    return [pooled @ wc.T, pooled @ ws.T, mask]


if __name__ == "__main__":
    # TODO(synk): the pretrained ResNet50 backbone (self.model) has no clean Pallas
    # equivalent here; `x` below stands in for its (B, 2048, H, W) output feature map.
    key = jax.random.PRNGKey(0)
    k1, k2, k3, k4, k5 = jax.random.split(key, 5)

    B, C, H, W = 2, 2048, 8, 8
    NCLS = 8  # config.numcls

    x = (jax.random.normal(k1, (B, C, H, W), jnp.float32) * 0.1).astype(jnp.bfloat16)
    params = {
        "w_cls": (jax.random.normal(k2, (NCLS, C), jnp.float32) * 0.02).astype(jnp.bfloat16),
        "w_swap": (jax.random.normal(k3, (2 * NCLS, C), jnp.float32) * 0.02).astype(jnp.bfloat16),
        "w_mask": (jax.random.normal(k4, (1, C, 1, 1), jnp.float32) * 0.02).astype(jnp.bfloat16),
        "b_mask": jax.random.normal(k5, (1,), jnp.float32) * 0.02,
    }

    outs = jax.block_until_ready(dcl_forward(x, params))
    refs = dcl_reference(x, params)

    expected_shapes = [(B, NCLS), (B, 2 * NCLS), (B, (H // 2) * (W // 2))]
    for o, r, s in zip(outs, refs, expected_shapes):
        assert o.shape == s, (o.shape, s)
        np.testing.assert_allclose(np.asarray(o), r, rtol=2e-3, atol=2e-3)

    print("KERNEL_OK")
</pallas_src>

<mosaic_0001>
module attributes {stable_mosaic.version = 11 : i64} {
  func.func @_dcl_head_kernel(%arg0: i32, %arg1: memref<2x2048x64xbf16, #tpu.memory_space<vmem>>, %arg2: memref<128x2048xbf16, #tpu.memory_space<vmem>>, %arg3: memref<64x128xf32, #tpu.memory_space<vmem>>, %arg4: memref<1x1xf32, #tpu.memory_space<smem>>, %arg5: memref<2x128x1xf32, #tpu.memory_space<vmem>>, %arg6: memref<2x1x128xf32, #tpu.memory_space<vmem>>) attributes {dimension_semantics = [#tpu.dimension_semantics<parallel>], iteration_bounds = array<i64: 1>, scalar_prefetch = 0 : i64, scratch_operands = 0 : i64, tpu.core_type = #tpu.core_type<tc>, window_params = [{transform_indices = @transform_0, window_bounds = array<i64: 2, 2048, 64>}, {pipeline_mode = #tpu.pipeline_mode<synchronous>, transform_indices = @transform_1, window_bounds = array<i64: 128, 2048>}, {pipeline_mode = #tpu.pipeline_mode<synchronous>, transform_indices = @transform_2, window_bounds = array<i64: 64, 128>}, {transform_indices = @transform_3, window_bounds = array<i64: 1, 1>}, {transform_indices = @transform_4, window_bounds = array<i64: 2, 128, 1>}, {transform_indices = @transform_5, window_bounds = array<i64: 2, 1, 128>}]} {
    %c0 = arith.constant 0 : index
    %c0_0 = arith.constant 0 : index
    %0 = memref.load %arg4[%c0, %c0_0] : memref<1x1xf32, #tpu.memory_space<smem>>
    %c0_1 = arith.constant 0 : index
    %c0_2 = arith.constant 0 : index
    %1 = vector.load %arg2[%c0_1, %c0_2] : memref<128x2048xbf16, #tpu.memory_space<vmem>>, vector<128x2048xbf16>
    %c0_3 = arith.constant 0 : index
    %c0_4 = arith.constant 0 : index
    %2 = vector.load %arg3[%c0_3, %c0_4] : memref<64x128xf32, #tpu.memory_space<vmem>>, vector<64x128xf32>
    %c0_5 = arith.constant 0 : index
    %c0_6 = arith.constant 0 : index
    %c0_7 = arith.constant 0 : index
    %3 = vector.load %arg1[%c0_5, %c0_6, %c0_7] : memref<2x2048x64xbf16, #tpu.memory_space<vmem>>, vector<1x2048x64xbf16>
    %4 = vector.shape_cast %3 : vector<1x2048x64xbf16> to vector<2048x64xbf16>
    %cst = arith.constant dense<0.000000e+00> : vector<128x64xf32>
    %5 = tpu.matmul %1, %4, %cst {dimension_numbers = #tpu.dot_dimension_numbers<[1], [0], [0], [1], [0, 0, 1, 1], [], []>} : vector<128x2048xbf16>, vector<2048x64xbf16>, vector<128x64xf32> -> vector<128x64xf32>
    %cst_8 = arith.constant dense<0.000000e+00> : vector<128xf32>
    %6 = vector.multi_reduction <add>, %5, %cst_8 [1] : vector<128x64xf32> to vector<128xf32>
    %7 = vector.shape_cast %6 : vector<128xf32> to vector<128x1xf32>
    %cst_9 = arith.constant 1.562500e-02 : f32
    %8 = vector.broadcast %cst_9 : f32 to vector<128x1xf32>
    %9 = arith.mulf %7, %8 : vector<128x1xf32>
    %c0_10 = arith.constant 0 : index
    %c0_11 = arith.constant 0 : index
    %c0_12 = arith.constant 0 : index
    %10 = vector.load %arg5[%c0_10, %c0_11, %c0_12] : memref<2x128x1xf32, #tpu.memory_space<vmem>>, vector<1x128x1xf32>
    %11 = vector.shape_cast %10 : vector<1x128x1xf32> to vector<128x1xf32>
    %12 = vector.shape_cast %9 : vector<128x1xf32> to vector<1x128x1xf32>
    tpu.vector_store %arg5[%c0_10, %c0_11, %c0_12], %12 {strides = array<i32>} : memref<2x128x1xf32, #tpu.memory_space<vmem>>, vector<1x128x1xf32>,
    %13 = vector.extract_strided_slice %5 {offsets = [0, 0], sizes = [1, 64], strides = [1, 1]} : vector<128x64xf32> to vector<1x64xf32>
    %14 = vector.broadcast %0 : f32 to vector<1x64xf32>
    %15 = arith.addf %13, %14 : vector<1x64xf32>
    %cst_13 = arith.constant dense<0.000000e+00> : vector<1x128xf32>
    %16 = tpu.matmul %15, %2, %cst_13 {dimension_numbers = #tpu.dot_dimension_numbers<[1], [0], [0], [1], [0, 0, 1, 1], [], []>} : vector<1x64xf32>, vector<64x128xf32>, vector<1x128xf32> -> vector<1x128xf32>
    %17 = math.tanh %16 : vector<1x128xf32>
    %c0_14 = arith.constant 0 : index
    %c0_15 = arith.constant 0 : index
    %c0_16 = arith.constant 0 : index
    %18 = vector.load %arg6[%c0_14, %c0_15, %c0_16] : memref<2x1x128xf32, #tpu.memory_space<vmem>>, vector<1x1x128xf32>
    %19 = vector.shape_cast %18 : vector<1x1x128xf32> to vector<1x128xf32>
    %20 = vector.shape_cast %17 : vector<1x128xf32> to vector<1x1x128xf32>
    tpu.vector_store %arg6[%c0_14, %c0_15, %c0_16], %20 {strides = array<i32>} : memref<2x1x128xf32, #tpu.memory_space<vmem>>, vector<1x1x128xf32>,
    %c1 = arith.constant 1 : index
    %c0_17 = arith.constant 0 : index
    %c0_18 = arith.constant 0 : index
    %21 = vector.load %arg1[%c1, %c0_17, %c0_18] : memref<2x2048x64xbf16, #tpu.memory_space<vmem>>, vector<1x2048x64xbf16>
    %22 = vector.shape_cast %21 : vector<1x2048x64xbf16> to vector<2048x64xbf16>
    %cst_19 = arith.constant dense<0.000000e+00> : vector<128x64xf32>
    %23 = tpu.matmul %1, %22, %cst_19 {dimension_numbers = #tpu.dot_dimension_numbers<[1], [0], [0], [1], [0, 0, 1, 1], [], []>} : vector<128x2048xbf16>, vector<2048x64xbf16>, vector<128x64xf32> -> vector<128x64xf32>
    %cst_20 = arith.constant dense<0.000000e+00> : vector<128xf32>
    %24 = vector.multi_reduction <add>, %23, %cst_20 [1] : vector<128x64xf32> to vector<128xf32>
    %25 = vector.shape_cast %24 : vector<128xf32> to vector<128x1xf32>
    %cst_21 = arith.constant 1.562500e-02 : f32
    %26 = vector.broadcast %cst_21 : f32 to vector<128x1xf32>
    %27 = arith.mulf %25, %26 : vector<128x1xf32>
    %c1_22 = arith.constant 1 : index
    %c0_23 = arith.constant 0 : index
    %c0_24 = arith.constant 0 : index
    %28 = vector.load %arg5[%c1_22, %c0_23, %c0_24] : memref<2x128x1xf32, #tpu.memory_space<vmem>>, vector<1x128x1xf32>
    %29 = vector.shape_cast %28 : vector<1x128x1xf32> to vector<128x1xf32>
    %30 = vector.shape_cast %27 : vector<128x1xf32> to vector<1x128x1xf32>
    tpu.vector_store %arg5[%c1_22, %c0_23, %c0_24], %30 {strides = array<i32>} : memref<2x128x1xf32, #tpu.memory_space<vmem>>, vector<1x128x1xf32>,
    %31 = vector.extract_strided_slice %23 {offsets = [0, 0], sizes = [1, 64], strides = [1, 1]} : vector<128x64xf32> to vector<1x64xf32>
    %32 = vector.broadcast %0 : f32 to vector<1x64xf32>
    %33 = arith.addf %31, %32 : vector<1x64xf32>
    %cst_25 = arith.constant dense<0.000000e+00> : vector<1x128xf32>
    %34 = tpu.matmul %33, %2, %cst_25 {dimension_numbers = #tpu.dot_dimension_numbers<[1], [0], [0], [1], [0, 0, 1, 1], [], []>} : vector<1x64xf32>, vector<64x128xf32>, vector<1x128xf32> -> vector<1x128xf32>
    %35 = math.tanh %34 : vector<1x128xf32>
    %c1_26 = arith.constant 1 : index
    %c0_27 = arith.constant 0 : index
    %c0_28 = arith.constant 0 : index
    %36 = vector.load %arg6[%c1_26, %c0_27, %c0_28] : memref<2x1x128xf32, #tpu.memory_space<vmem>>, vector<1x1x128xf32>
    %37 = vector.shape_cast %36 : vector<1x1x128xf32> to vector<1x128xf32>
    %38 = vector.shape_cast %35 : vector<1x128xf32> to vector<1x1x128xf32>
    tpu.vector_store %arg6[%c1_26, %c0_27, %c0_28], %38 {strides = array<i32>} : memref<2x1x128xf32, #tpu.memory_space<vmem>>, vector<1x1x128xf32>,
    return
  }
  func.func @transform_0(%arg0: i32) -> (i32, i32, i32) {
    %c0_i32 = arith.constant 0 : i32
    %c0_i32_0 = arith.constant 0 : i32
    %c0_i32_1 = arith.constant 0 : i32
    return %arg0, %c0_i32, %c0_i32_0 : i32, i32, i32
  }
  func.func @transform_1(%arg0: i32) -> (i32, i32) {
    %c0_i32 = arith.constant 0 : i32
    %c0_i32_0 = arith.constant 0 : i32
    %c0_i32_1 = arith.constant 0 : i32
    return %c0_i32, %c0_i32_0 : i32, i32
  }
  func.func @transform_2(%arg0: i32) -> (i32, i32) {
    %c0_i32 = arith.constant 0 : i32
    %c0_i32_0 = arith.constant 0 : i32
    %c0_i32_1 = arith.constant 0 : i32
    return %c0_i32, %c0_i32_0 : i32, i32
  }
  func.func @transform_3(%arg0: i32) -> (i32, i32) {
    %c0_i32 = arith.constant 0 : i32
    %c0_i32_0 = arith.constant 0 : i32
    %c0_i32_1 = arith.constant 0 : i32
    return %c0_i32, %c0_i32_0 : i32, i32
  }
  func.func @transform_4(%arg0: i32) -> (i32, i32, i32) {
    %c0_i32 = arith.constant 0 : i32
    %c0_i32_0 = arith.constant 0 : i32
    %c0_i32_1 = arith.constant 0 : i32
    return %arg0, %c0_i32, %c0_i32_0 : i32, i32, i32
  }
  func.func @transform_5(%arg0: i32) -> (i32, i32, i32) {
    %c0_i32 = arith.constant 0 : i32
    %c0_i32_0 = arith.constant 0 : i32
    %c0_i32_1 = arith.constant 0 : i32
    return %arg0, %c0_i32, %c0_i32_0 : i32, i32, i32
  }
}

</mosaic_0001>

<llo_original>
// kernel: tpu_custom_call.1
$region0: #{tpu_custom_call.1}
  #allocation0 [shape = 'u32[]', space=smem, size = 0x4, offset = 0x4, fixed_abs, tag = 'smem constant byte address 0x4 - core index']
  #allocation1 [shape = 'u32[144,128]{1,0:T(1,128)}', space=vmem, size = 0x12000, scoped, tag = 'internal scratch']
  #allocation2 [shape = 'f32[1,1]{1,0:T(1,128)S(6)}', space=smem, size = 0x200, scoped, tag = 'scoped memory for tpu_custom_call.1']
  %s0 = inlined_call_operand.vmem [shape: bf16[2,2048,64], index: 0, kind: input, shape index: {}]
  %s1 = inlined_call_operand.vmem [shape: bf16[128,2048], index: 1, kind: input, shape index: {}]
  %s2 = inlined_call_operand.vmem [shape: f32[64,128], index: 2, kind: input, shape index: {}]
  %s3 = inlined_call_operand.<no memory space> [shape: f32[1,1], index: 3, kind: input, shape index: {}]
  %s4 = inlined_call_operand.vmem [shape: f32[2,128,1], index: 4, kind: output, shape index: {0}]
  %s5 = inlined_call_operand.hbm [shape: f32[2,1,128], index: 5, kind: output, shape index: {1}]
  %6 = xla_tuple %s4, %s5
  %s7 = sld [smem:[#allocation0]]
  $region34: #{tpu_custom_call.1} parent=0
    _
  %s9 = ssub.s32 1, %s7
  %s10 = scalar_select 0, %s9, %s7
  %11 = sst [smem:[#allocation2]] %s3
  $region1: #{tpu_custom_call.1} parent=0
    #allocation3 [shape = 'u8[1024]{0}', space=vmem, size = 0x400, scoped, tag = 'output window, operand 1, single buffered']
    #allocation4 [shape = 's32[1]{0}', space=sflag, size = 0x4, scoped, tag = 'scoped memory for tpu_custom_call.1']
    %12 = vsyncpa [#allocation4], 0
    // Predicated region
    $region2: #{tpu_custom_call.1} parent=1 // pred_check
      _
    $region3: #{tpu_custom_call.1} parent=1 // pred_check_branch
      %14 = sbr.rel (0) target = $region5
    $region4: #{tpu_custom_call.1} parent=1 // pred_region
      _
    $region5: #{tpu_custom_call.1} parent=1 // pred_fallthru
      _
    // Predicated region
    $region6: #{tpu_custom_call.1} parent=1 // pred_check
      _
    $region7: #{tpu_custom_call.1} parent=1 // pred_check_branch
      %16 = sbr.rel (0) target = $region9
    $region8: #{tpu_custom_call.1} parent=1 // pred_region
      _
    $region9: #{tpu_custom_call.1} parent=1 // pred_fallthru
      _
    // Predicated region
    $region10: #{tpu_custom_call.1} parent=1 // pred_check
      _
    $region11: #{tpu_custom_call.1} parent=1 // pred_check_branch
      %18 = sbr.rel (0) target = $region13
    $region12: #{tpu_custom_call.1} parent=1 // pred_region
      _
    $region13: #{tpu_custom_call.1} parent=1 // pred_fallthru
      _
    // Predicated region
    $region14: #{tpu_custom_call.1} parent=1 // pred_check
      _
    $region15: #{tpu_custom_call.1} parent=1 // pred_check_branch
      %20 = sbr.rel (0) target = $region17
    $region16: #{tpu_custom_call.1} parent=1 // pred_region
      _
    $region17: #{tpu_custom_call.1} parent=1 // pred_fallthru
      _
    %s22 = sld [smem:[#allocation2]]
    %v23 = vld [vmem:[%s1] sm:$0xff]
    %v24 = vld [vmem:[%s1 + $0x8] sm:$0xff]
    %v25 = vld [vmem:[%s1 + $0x10] sm:$0xff]
    %v26 = vld [vmem:[%s1 + $0x18] sm:$0xff]
    %v27 = vld [vmem:[%s1 + $0x20] sm:$0xff]
    %v28 = vld [vmem:[%s1 + $0x28] sm:$0xff]
    %v29 = vld [vmem:[%s1 + $0x30] sm:$0xff]
    %v30 = vld [vmem:[%s1 + $0x38] sm:$0xff]
    %v31 = vld [vmem:[%s1 + $0x40] sm:$0xff]
    %v32 = vld [vmem:[%s1 + $0x48] sm:$0xff]
    %v33 = vld [vmem:[%s1 + $0x50] sm:$0xff]
    %v34 = vld [vmem:[%s1 + $0x58] sm:$0xff]
    %v35 = vld [vmem:[%s1 + $0x60] sm:$0xff]
    %v36 = vld [vmem:[%s1 + $0x68] sm:$0xff]
    %v37 = vld [vmem:[%s1 + $0x70] sm:$0xff]
    %v38 = vld [vmem:[%s1 + $0x78] sm:$0xff]
    %v39 = vld [vmem:[%s1 + $0x80] sm:$0xff]
    %v40 = vld [vmem:[%s1 + $0x88] sm:$0xff]
    %v41 = vld [vmem:[%s1 + $0x90] sm:$0xff]
    %v42 = vld [vmem:[%s1 + $0x98] sm:$0xff]
    %v43 = vld [vmem:[%s1 + $0xa0] sm:$0xff]
    %v44 = vld [vmem:[%s1 + $0xa8] sm:$0xff]
    %v45 = vld [vmem:[%s1 + $0xb0] sm:$0xff]
    %v46 = vld [vmem:[%s1 + $0xb8] sm:$0xff]
    %v47 = vld [vmem:[%s1 + $0xc0] sm:$0xff]
    %v48 = vld [vmem:[%s1 + $0xc8] sm:$0xff]
    %v49 = vld [vmem:[%s1 + $0xd0] sm:$0xff]
    %v50 = vld [vmem:[%s1 + $0xd8] sm:$0xff]
    %v51 = vld [vmem:[%s1 + $0xe0] sm:$0xff]
    %v52 = vld [vmem:[%s1 + $0xe8] sm:$0xff]
    %v53 = vld [vmem:[%s1 + $0xf0] sm:$0xff]
    %v54 = vld [vmem:[%s1 + $0xf8] sm:$0xff]
    %v55 = vld [vmem:[%s1 + $0x100] sm:$0xff]
    %v56 = vld [vmem:[%s1 + $0x108] sm:$0xff]
    %v57 = vld [vmem:[%s1 + $0x110] sm:$0xff]
    %v58 = vld [vmem:[%s1 + $0x118] sm:$0xff]
    %v59 = vld [vmem:[%s1 + $0x120] sm:$0xff]
    %v60 = vld [vmem:[%s1 + $0x128] sm:$0xff]
    %v61 = vld [vmem:[%s1 + $0x130] sm:$0xff]
    %v62 = vld [vmem:[%s1 + $0x138] sm:$0xff]
    %v63 = vld [vmem:[%s1 + $0x140] sm:$0xff]
    %v64 = vld [vmem:[%s1 + $0x148] sm:$0xff]
    %v65 = vld [vmem:[%s1 + $0x150] sm:$0xff]
    %v66 = vld [vmem:[%s1 + $0x158] sm:$0xff]
    %v67 = vld [vmem:[%s1 + $0x160] sm:$0xff]
    %v68 = vld [vmem:[%s1 + $0x168] sm:$0xff]
    %v69 = vld [vmem:[%s1 + $0x170] sm:$0xff]
    %v70 = vld [vmem:[%s1 + $0x178] sm:$0xff]
    %v71 = vld [vmem:[%s1 + $0x180] sm:$0xff]
    %v72 = vld [vmem:[%s1 + $0x188] sm:$0xff]
    %v73 = vld [vmem:[%s1 + $0x190] sm:$0xff]
    %v74 = vld [vmem:[%s1 + $0x198] sm:$0xff]
    %v75 = vld [vmem:[%s1 + $0x1a0] sm:$0xff]
    %v76 = vld [vmem:[%s1 + $0x1a8] sm:$0xff]
    %v77 = vld [vmem:[%s1 + $0x1b0] sm:$0xff]
    %v78 = vld [vmem:[%s1 + $0x1b8] sm:$0xff]
    %v79 = vld [vmem:[%s1 + $0x1c0] sm:$0xff]
    %v80 = vld [vmem:[%s1 + $0x1c8] sm:$0xff]
    %v81 = vld [vmem:[%s1 + $0x1d0] sm:$0xff]
    %v82 = vld [vmem:[%s1 + $0x1d8] sm:$0xff]
    %v83 = vld [vmem:[%s1 + $0x1e0] sm:$0xff]
    %v84 = vld [vmem:[%s1 + $0x1e8] sm:$0xff]
    %v85 = vld [vmem:[%s1 + $0x1f0] sm:$0xff]
    %v86 = vld [vmem:[%s1 + $0x1f8] sm:$0xff]
    %v87 = vld [vmem:[%s1 + $0x200] sm:$0xff]
    %v88 = vld [vmem:[%s1 + $0x208] sm:$0xff]
    %v89 = vld [vmem:[%s1 + $0x210] sm:$0xff]
    %v90 = vld [vmem:[%s1 + $0x218] sm:$0xff]
    %v91 = vld [vmem:[%s1 + $0x220] sm:$0xff]
    %v92 = vld [vmem:[%s1 + $0x228] sm:$0xff]
    %v93 = vld [vmem:[%s1 + $0x230] sm:$0xff]
    %v94 = vld [vmem:[%s1 + $0x238] sm:$0xff]
    %v95 = vld [vmem:[%s1 + $0x240] sm:$0xff]
    %v96 = vld [vmem:[%s1 + $0x248] sm:$0xff]
    %v97 = vld [vmem:[%s1 + $0x250] sm:$0xff]
    %v98 = vld [vmem:[%s1 + $0x258] sm:$0xff]
    %v99 = vld [vmem:[%s1 + $0x260] sm:$0xff]
    %v100 = vld [vmem:[%s1 + $0x268] sm:$0xff]
    %v101 = vld [vmem:[%s1 + $0x270] sm:$0xff]
    %v102 = vld [vmem:[%s1 + $0x278] sm:$0xff]
    %v103 = vld [vmem:[%s1 + $0x280] sm:$0xff]
    %v104 = vld [vmem:[%s1 + $0x288] sm:$0xff]
    %v105 = vld [vmem:[%s1 + $0x290] sm:$0xff]
    %v106 = vld [vmem:[%s1 + $0x298] sm:$0xff]
    %v107 = vld [vmem:[%s1 + $0x2a0] sm:$0xff]
    %v108 = vld [vmem:[%s1 + $0x2a8] sm:$0xff]
    %v109 = vld [vmem:[%s1 + $0x2b0] sm:$0xff]
    %v110 = vld [vmem:[%s1 + $0x2b8] sm:$0xff]
    %v111 = vld [vmem:[%s1 + $0x2c0] sm:$0xff]
    %v112 = vld [vmem:[%s1 + $0x2c8] sm:$0xff]
    %v113 = vld [vmem:[%s1 + $0x2d0] sm:$0xff]
    %v114 = vld [vmem:[%s1 + $0x2d8] sm:$0xff]
    %v115 = vld [vmem:[%s1 + $0x2e0] sm:$0xff]
    %v116 = vld [vmem:[%s1 + $0x2e8] sm:$0xff]
    %v117 = vld [vmem:[%s1 + $0x2f0] sm:$0xff]
    %v118 = vld [vmem:[%s1 + $0x2f8] sm:$0xff]
    %v119 = vld [vmem:[%s1 + $0x300] sm:$0xff]
    %v120 = vld [vmem:[%s1 + $0x308] sm:$0xff]
    %v121 = vld [vmem:[%s1 + $0x310] sm:$0xff]
    %v122 = vld [vmem:[%s1 + $0x318] sm:$0xff]
    %v123 = vld [vmem:[%s1 + $0x320] sm:$0xff]
    %v124 = vld [vmem:[%s1 + $0x328] sm:$0xff]
    %v125 = vld [vmem:[%s1 + $0x330] sm:$0xff]
    %v126 = vld [vmem:[%s1 + $0x338] sm:$0xff]
    %v127 = vld [vmem:[%s1 + $0x340] sm:$0xff]
    %v128 = vld [vmem:[%s1 + $0x348] sm:$0xff]
    %v129 = vld [vmem:[%s1 + $0x350] sm:$0xff]
    %v130 = vld [vmem:[%s1 + $0x358] sm:$0xff]
    %v131 = vld [vmem:[%s1 + $0x360] sm:$0xff]
    %v132 = vld [vmem:[%s1 + $0x368] sm:$0xff]
    %v133 = vld [vmem:[%s1 + $0x370] sm:$0xff]
    %v134 = vld [vmem:[%s1 + $0x378] sm:$0xff]
    %v135 = vld [vmem:[%s1 + $0x380] sm:$0xff]
    %v136 = vld [vmem:[%s1 + $0x388] sm:$0xff]
    %v137 = vld [vmem:[%s1 + $0x390] sm:$0xff]
    %v138 = vld [vmem:[%s1 + $0x398] sm:$0xff]
    %v139 = vld [vmem:[%s1 + $0x3a0] sm:$0xff]
    %v140 = vld [vmem:[%s1 + $0x3a8] sm:$0xff]
    %v141 = vld [vmem:[%s1 + $0x3b0] sm:$0xff]
    %v142 = vld [vmem:[%s1 + $0x3b8] sm:$0xff]
    %v143 = vld [vmem:[%s1 + $0x3c0] sm:$0xff]
    %v144 = vld [vmem:[%s1 + $0x3c8] sm:$0xff]
    %v145 = vld [vmem:[%s1 + $0x3d0] sm:$0xff]
    %v146 = vld [vmem:[%s1 + $0x3d8] sm:$0xff]
    %v147 = vld [vmem:[%s1 + $0x3e0] sm:$0xff]
    %v148 = vld [vmem:[%s1 + $0x3e8] sm:$0xff]
    %v149 = vld [vmem:[%s1 + $0x3f0] sm:$0xff]
    %v150 = vld [vmem:[%s1 + $0x3f8] sm:$0xff]
    %v151 = vld [vmem:[%s2] sm:$0xff]
    %v152 = vld [vmem:[%s2 + $0x8] sm:$0xff]
    %v153 = vld [vmem:[%s2 + $0x10] sm:$0xff]
    %v154 = vld [vmem:[%s2 + $0x18] sm:$0xff]
    %v155 = vld [vmem:[%s2 + $0x20] sm:$0xff]
    %v156 = vld [vmem:[%s2 + $0x28] sm:$0xff]
    %v157 = vld [vmem:[%s2 + $0x30] sm:$0xff]
    %v158 = vld [vmem:[%s2 + $0x38] sm:$0xff]
    %v159 = vld [vmem:[%s0] sm:$0xf]
    %v160 = vld [vmem:[%s0 + $0x4] sm:$0xf]
    %v161 = vld [vmem:[%s0 + $0x8] sm:$0xf]
    %v162 = vld [vmem:[%s0 + $0xc] sm:$0xf]
    %v163 = vld [vmem:[%s0 + $0x10] sm:$0xf]
    %v164 = vld [vmem:[%s0 + $0x14] sm:$0xf]
    %v165 = vld [vmem:[%s0 + $0x18] sm:$0xf]
    %v166 = vld [vmem:[%s0 + $0x1c] sm:$0xf]
    %v167 = vld [vmem:[%s0 + $0x20] sm:$0xf]
    %v168 = vld [vmem:[%s0 + $0x24] sm:$0xf]
    %v169 = vld [vmem:[%s0 + $0x28] sm:$0xf]
    %v170 = vld [vmem:[%s0 + $0x2c] sm:$0xf]
    %v171 = vld [vmem:[%s0 + $0x30] sm:$0xf]
    %v172 = vld [vmem:[%s0 + $0x34] sm:$0xf]
    %v173 = vld [vmem:[%s0 + $0x38] sm:$0xf]
    %v174 = vld [vmem:[%s0 + $0x3c] sm:$0xf]
    %v175 = vld [vmem:[%s0 + $0x40] sm:$0xf]
    %v176 = vld [vmem:[%s0 + $0x44] sm:$0xf]
    %v177 = vld [vmem:[%s0 + $0x48] sm:$0xf]
    %v178 = vld [vmem:[%s0 + $0x4c] sm:$0xf]
    %v179 = vld [vmem:[%s0 + $0x50] sm:$0xf]
    %v180 = vld [vmem:[%s0 + $0x54] sm:$0xf]
    %v181 = vld [vmem:[%s0 + $0x58] sm:$0xf]
    %v182 = vld [vmem:[%s0 + $0x5c] sm:$0xf]
    %v183 = vld [vmem:[%s0 + $0x60] sm:$0xf]
    %v184 = vld [vmem:[%s0 + $0x64] sm:$0xf]
    %v185 = vld [vmem:[%s0 + $0x68] sm:$0xf]
    %v186 = vld [vmem:[%s0 + $0x6c] sm:$0xf]
    %v187 = vld [vmem:[%s0 + $0x70] sm:$0xf]
    %v188 = vld [vmem:[%s0 + $0x74] sm:$0xf]
    %v189 = vld [vmem:[%s0 + $0x78] sm:$0xf]
    %v190 = vld [vmem:[%s0 + $0x7c] sm:$0xf]
    %v191 = vld [vmem:[%s0 + $0x80] sm:$0xf]
    %v192 = vld [vmem:[%s0 + $0x84] sm:$0xf]
    %v193 = vld [vmem:[%s0 + $0x88] sm:$0xf]
    %v194 = vld [vmem:[%s0 + $0x8c] sm:$0xf]
    %v195 = vld [vmem:[%s0 + $0x90] sm:$0xf]
    %v196 = vld [vmem:[%s0 + $0x94] sm:$0xf]
    %v197 = vld [vmem:[%s0 + $0x98] sm:$0xf]
    %v198 = vld [vmem:[%s0 + $0x9c] sm:$0xf]
    %v199 = vld [vmem:[%s0 + $0xa0] sm:$0xf]
    %v200 = vld [vmem:[%s0 + $0xa4] sm:$0xf]
    %v201 = vld [vmem:[%s0 + $0xa8] sm:$0xf]
    %v202 = vld [vmem:[%s0 + $0xac] sm:$0xf]
    %v203 = vld [vmem:[%s0 + $0xb0] sm:$0xf]
    %v204 = vld [vmem:[%s0 + $0xb4] sm:$0xf]
    %v205 = vld [vmem:[%s0 + $0xb8] sm:$0xf]
    %v206 = vld [vmem:[%s0 + $0xbc] sm:$0xf]
    %v207 = vld [vmem:[%s0 + $0xc0] sm:$0xf]
    %v208 = vld [vmem:[%s0 + $0xc4] sm:$0xf]
    %v209 = vld [vmem:[%s0 + $0xc8] sm:$0xf]
    %v210 = vld [vmem:[%s0 + $0xcc] sm:$0xf]
    %v211 = vld [vmem:[%s0 + $0xd0] sm:$0xf]
    %v212 = vld [vmem:[%s0 + $0xd4] sm:$0xf]
    %v213 = vld [vmem:[%s0 + $0xd8] sm:$0xf]
    %v214 = vld [vmem:[%s0 + $0xdc] sm:$0xf]
    %v215 = vld [vmem:[%s0 + $0xe0] sm:$0xf]
    %v216 = vld [vmem:[%s0 + $0xe4] sm:$0xf]
    %v217 = vld [vmem:[%s0 + $0xe8] sm:$0xf]
    %v218 = vld [vmem:[%s0 + $0xec] sm:$0xf]
    %v219 = vld [vmem:[%s0 + $0xf0] sm:$0xf]
    %v220 = vld [vmem:[%s0 + $0xf4] sm:$0xf]
    %v221 = vld [vmem:[%s0 + $0xf8] sm:$0xf]
    %v222 = vld [vmem:[%s0 + $0xfc] sm:$0xf]
    %v223 = vld [vmem:[%s0 + $0x100] sm:$0xf]
    %v224 = vld [vmem:[%s0 + $0x104] sm:$0xf]
    %v225 = vld [vmem:[%s0 + $0x108] sm:$0xf]
    %v226 = vld [vmem:[%s0 + $0x10c] sm:$0xf]
    %v227 = vld [vmem:[%s0 + $0x110] sm:$0xf]
    %v228 = vld [vmem:[%s0 + $0x114] sm:$0xf]
    %v229 = vld [vmem:[%s0 + $0x118] sm:$0xf]
    %v230 = vld [vmem:[%s0 + $0x11c] sm:$0xf]
    %v231 = vld [vmem:[%s0 + $0x120] sm:$0xf]
    %v232 = vld [vmem:[%s0 + $0x124] sm:$0xf]
    %v233 = vld [vmem:[%s0 + $0x128] sm:$0xf]
    %v234 = vld [vmem:[%s0 + $0x12c] sm:$0xf]
    %v235 = vld [vmem:[%s0 + $0x130] sm:$0xf]
    %v236 = vld [vmem:[%s0 + $0x134] sm:$0xf]
    %v237 = vld [vmem:[%s0 + $0x138] sm:$0xf]
    %v238 = vld [vmem:[%s0 + $0x13c] sm:$0xf]
    %v239 = vld [vmem:[%s0 + $0x140] sm:$0xf]
    %v240 = vld [vmem:[%s0 + $0x144] sm:$0xf]
    %v241 = vld [vmem:[%s0 + $0x148] sm:$0xf]
    %v242 = vld [vmem:[%s0 + $0x14c] sm:$0xf]
    %v243 = vld [vmem:[%s0 + $0x150] sm:$0xf]
    %v244 = vld [vmem:[%s0 + $0x154] sm:$0xf]
    %v245 = vld [vmem:[%s0 + $0x158] sm:$0xf]
    %v246 = vld [vmem:[%s0 + $0x15c] sm:$0xf]
    %v247 = vld [vmem:[%s0 + $0x160] sm:$0xf]
    %v248 = vld [vmem:[%s0 + $0x164] sm:$0xf]
    %v249 = vld [vmem:[%s0 + $0x168] sm:$0xf]
    %v250 = vld [vmem:[%s0 + $0x16c] sm:$0xf]
    %v251 = vld [vmem:[%s0 + $0x170] sm:$0xf]
    %v252 = vld [vmem:[%s0 + $0x174] sm:$0xf]
    %v253 = vld [vmem:[%s0 + $0x178] sm:$0xf]
    %v254 = vld [vmem:[%s0 + $0x17c] sm:$0xf]
    %v255 = vld [vmem:[%s0 + $0x180] sm:$0xf]
    %v256 = vld [vmem:[%s0 + $0x184] sm:$0xf]
    %v257 = vld [vmem:[%s0 + $0x188] sm:$0xf]
    %v258 = vld [vmem:[%s0 + $0x18c] sm:$0xf]
    %v259 = vld [vmem:[%s0 + $0x190] sm:$0xf]
    %v260 = vld [vmem:[%s0 + $0x194] sm:$0xf]
    %v261 = vld [vmem:[%s0 + $0x198] sm:$0xf]
    %v262 = vld [vmem:[%s0 + $0x19c] sm:$0xf]
    %v263 = vld [vmem:[%s0 + $0x1a0] sm:$0xf]
    %v264 = vld [vmem:[%s0 + $0x1a4] sm:$0xf]
    %v265 = vld [vmem:[%s0 + $0x1a8] sm:$0xf]
    %v266 = vld [vmem:[%s0 + $0x1ac] sm:$0xf]
    %v267 = vld [vmem:[%s0 + $0x1b0] sm:$0xf]
    %v268 = vld [vmem:[%s0 + $0x1b4] sm:$0xf]
    %v269 = vld [vmem:[%s0 + $0x1b8] sm:$0xf]
    %v270 = vld [vmem:[%s0 + $0x1bc] sm:$0xf]
    %v271 = vld [vmem:[%s0 + $0x1c0] sm:$0xf]
    %v272 = vld [vmem:[%s0 + $0x1c4] sm:$0xf]
    %v273 = vld [vmem:[%s0 + $0x1c8] sm:$0xf]
    %v274 = vld [vmem:[%s0 + $0x1cc] sm:$0xf]
    %v275 = vld [vmem:[%s0 + $0x1d0] sm:$0xf]
    %v276 = vld [vmem:[%s0 + $0x1d4] sm:$0xf]
    %v277 = vld [vmem:[%s0 + $0x1d8] sm:$0xf]
    %v278 = vld [vmem:[%s0 + $0x1dc] sm:$0xf]
    %v279 = vld [vmem:[%s0 + $0x1e0] sm:$0xf]
    %v280 = vld [vmem:[%s0 + $0x1e4] sm:$0xf]
    %v281 = vld [vmem:[%s0 + $0x1e8] sm:$0xf]
    %v282 = vld [vmem:[%s0 + $0x1ec] sm:$0xf]
    %v283 = vld [vmem:[%s0 + $0x1f0] sm:$0xf]
    %v284 = vld [vmem:[%s0 + $0x1f4] sm:$0xf]
    %v285 = vld [vmem:[%s0 + $0x1f8] sm:$0xf]
    %v286 = vld [vmem:[%s0 + $0x1fc] sm:$0xf]
    %v287 = vld [vmem:[%s0 + $0x200] sm:$0xf]
    %v288 = vld [vmem:[%s0 + $0x204] sm:$0xf]
    %v289 = vld [vmem:[%s0 + $0x208] sm:$0xf]
    %v290 = vld [vmem:[%s0 + $0x20c] sm:$0xf]
    %v291 = vld [vmem:[%s0 + $0x210] sm:$0xf]
    %v292 = vld [vmem:[%s0 + $0x214] sm:$0xf]
    %v293 = vld [vmem:[%s0 + $0x218] sm:$0xf]
    %v294 = vld [vmem:[%s0 + $0x21c] sm:$0xf]
    %v295 = vld [vmem:[%s0 + $0x220] sm:$0xf]
    %v296 = vld [vmem:[%s0 + $0x224] sm:$0xf]
    %v297 = vld [vmem:[%s0 + $0x228] sm:$0xf]
    %v298 = vld [vmem:[%s0 + $0x22c] sm:$0xf]
    %v299 = vld [vmem:[%s0 + $0x230] sm:$0xf]
    %v300 = vld [vmem:[%s0 + $0x234] sm:$0xf]
    %v301 = vld [vmem:[%s0 + $0x238] sm:$0xf]
    %v302 = vld [vmem:[%s0 + $0x23c] sm:$0xf]
    %v303 = vld [vmem:[%s0 + $0x240] sm:$0xf]
    %v304 = vld [vmem:[%s0 + $0x244] sm:$0xf]
    %v305 = vld [vmem:[%s0 + $0x248] sm:$0xf]
    %v306 = vld [vmem:[%s0 + $0x24c] sm:$0xf]
    %v307 = vld [vmem:[%s0 + $0x250] sm:$0xf]
    %v308 = vld [vmem:[%s0 + $0x254] sm:$0xf]
    %v309 = vld [vmem:[%s0 + $0x258] sm:$0xf]
    %v310 = vld [vmem:[%s0 + $0x25c] sm:$0xf]
    %v311 = vld [vmem:[%s0 + $0x260] sm:$0xf]
    %v312 = vld [vmem:[%s0 + $0x264] sm:$0xf]
    %v313 = vld [vmem:[%s0 + $0x268] sm:$0xf]
    %v314 = vld [vmem:[%s0 + $0x26c] sm:$0xf]
    %v315 = vld [vmem:[%s0 + $0x270] sm:$0xf]
    %v316 = vld [vmem:[%s0 + $0x274] sm:$0xf]
    %v317 = vld [vmem:[%s0 + $0x278] sm:$0xf]
    %v318 = vld [vmem:[%s0 + $0x27c] sm:$0xf]
    %v319 = vld [vmem:[%s0 + $0x280] sm:$0xf]
    %v320 = vld [vmem:[%s0 + $0x284] sm:$0xf]
    %v321 = vld [vmem:[%s0 + $0x288] sm:$0xf]
    %v322 = vld [vmem:[%s0 + $0x28c] sm:$0xf]
    %v323 = vld [vmem:[%s0 + $0x290] sm:$0xf]
    %v324 = vld [vmem:[%s0 + $0x294] sm:$0xf]
    %v325 = vld [vmem:[%s0 + $0x298] sm:$0xf]
    %v326 = vld [vmem:[%s0 + $0x29c] sm:$0xf]
    %v327 = vld [vmem:[%s0 + $0x2a0] sm:$0xf]
    %v328 = vld [vmem:[%s0 + $0x2a4] sm:$0xf]
    %v329 = vld [vmem:[%s0 + $0x2a8] sm:$0xf]
    %v330 = vld [vmem:[%s0 + $0x2ac] sm:$0xf]
    %v331 = vld [vmem:[%s0 + $0x2b0] sm:$0xf]
    %v332 = vld [vmem:[%s0 + $0x2b4] sm:$0xf]
    %v333 = vld [vmem:[%s0 + $0x2b8] sm:$0xf]
    %v334 = vld [vmem:[%s0 + $0x2bc] sm:$0xf]
    %v335 = vld [vmem:[%s0 + $0x2c0] sm:$0xf]
    %v336 = vld [vmem:[%s0 + $0x2c4] sm:$0xf]
    %v337 = vld [vmem:[%s0 + $0x2c8] sm:$0xf]
    %v338 = vld [vmem:[%s0 + $0x2cc] sm:$0xf]
    %v339 = vld [vmem:[%s0 + $0x2d0] sm:$0xf]
    %v340 = vld [vmem:[%s0 + $0x2d4] sm:$0xf]
    %v341 = vld [vmem:[%s0 + $0x2d8] sm:$0xf]
    %v342 = vld [vmem:[%s0 + $0x2dc] sm:$0xf]
    %v343 = vld [vmem:[%s0 + $0x2e0] sm:$0xf]
    %v344 = vld [vmem:[%s0 + $0x2e4] sm:$0xf]
    %v345 = vld [vmem:[%s0 + $0x2e8] sm:$0xf]
    %v346 = vld [vmem:[%s0 + $0x2ec] sm:$0xf]
    %v347 = vld [vmem:[%s0 + $0x2f0] sm:$0xf]
    %v348 = vld [vmem:[%s0 + $0x2f4] sm:$0xf]
    %v349 = vld [vmem:[%s0 + $0x2f8] sm:$0xf]
    %v350 = vld [vmem:[%s0 + $0x2fc] sm:$0xf]
    %v351 = vld [vmem:[%s0 + $0x300] sm:$0xf]
    %v352 = vld [vmem:[%s0 + $0x304] sm:$0xf]
    %v353 = vld [vmem:[%s0 + $0x308] sm:$0xf]
    %v354 = vld [vmem:[%s0 + $0x30c] sm:$0xf]
    %v355 = vld [vmem:[%s0 + $0x310] sm:$0xf]
    %v356 = vld [vmem:[%s0 + $0x314] sm:$0xf]
    %v357 = vld [vmem:[%s0 + $0x318] sm:$0xf]
    %v358 = vld [vmem:[%s0 + $0x31c] sm:$0xf]
    %v359 = vld [vmem:[%s0 + $0x320] sm:$0xf]
    %v360 = vld [vmem:[%s0 + $0x324] sm:$0xf]
    %v361 = vld [vmem:[%s0 + $0x328] sm:$0xf]
    %v362 = vld [vmem:[%s0 + $0x32c] sm:$0xf]
    %v363 = vld [vmem:[%s0 + $0x330] sm:$0xf]
    %v364 = vld [vmem:[%s0 + $0x334] sm:$0xf]
    %v365 = vld [vmem:[%s0 + $0x338] sm:$0xf]
    %v366 = vld [vmem:[%s0 + $0x33c] sm:$0xf]
    %v367 = vld [vmem:[%s0 + $0x340] sm:$0xf]
    %v368 = vld [vmem:[%s0 + $0x344] sm:$0xf]
    %v369 = vld [vmem:[%s0 + $0x348] sm:$0xf]
    %v370 = vld [vmem:[%s0 + $0x34c] sm:$0xf]
    %v371 = vld [vmem:[%s0 + $0x350] sm:$0xf]
    %v372 = vld [vmem:[%s0 + $0x354] sm:$0xf]
    %v373 = vld [vmem:[%s0 + $0x358] sm:$0xf]
    %v374 = vld [vmem:[%s0 + $0x35c] sm:$0xf]
    %v375 = vld [vmem:[%s0 + $0x360] sm:$0xf]
    %v376 = vld [vmem:[%s0 + $0x364] sm:$0xf]
    %v377 = vld [vmem:[%s0 + $0x368] sm:$0xf]
    %v378 = vld [vmem:[%s0 + $0x36c] sm:$0xf]
    %v379 = vld [vmem:[%s0 + $0x370] sm:$0xf]
    %v380 = vld [vmem:[%s0 + $0x374] sm:$0xf]
    %v381 = vld [vmem:[%s0 + $0x378] sm:$0xf]
    %v382 = vld [vmem:[%s0 + $0x37c] sm:$0xf]
    %v383 = vld [vmem:[%s0 + $0x380] sm:$0xf]
    %v384 = vld [vmem:[%s0 + $0x384] sm:$0xf]
    %v385 = vld [vmem:[%s0 + $0x388] sm:$0xf]
    %v386 = vld [vmem:[%s0 + $0x38c] sm:$0xf]
    %v387 = vld [vmem:[%s0 + $0x390] sm:$0xf]
    %v388 = vld [vmem:[%s0 + $0x394] sm:$0xf]
    %v389 = vld [vmem:[%s0 + $0x398] sm:$0xf]
    %v390 = vld [vmem:[%s0 + $0x39c] sm:$0xf]
    %v391 = vld [vmem:[%s0 + $0x3a0] sm:$0xf]
    %v392 = vld [vmem:[%s0 + $0x3a4] sm:$0xf]
    %v393 = vld [vmem:[%s0 + $0x3a8] sm:$0xf]
    %v394 = vld [vmem:[%s0 + $0x3ac] sm:$0xf]
    %v395 = vld [vmem:[%s0 + $0x3b0] sm:$0xf]
    %v396 = vld [vmem:[%s0 + $0x3b4] sm:$0xf]
    %v397 = vld [vmem:[%s0 + $0x3b8] sm:$0xf]
    %v398 = vld [vmem:[%s0 + $0x3bc] sm:$0xf]
    %v399 = vld [vmem:[%s0 + $0x3c0] sm:$0xf]
    %v400 = vld [vmem:[%s0 + $0x3c4] sm:$0xf]
    %v401 = vld [vmem:[%s0 + $0x3c8] sm:$0xf]
    %v402 = vld [vmem:[%s0 + $0x3cc] sm:$0xf]
    %v403 = vld [vmem:[%s0 + $0x3d0] sm:$0xf]
    %v404 = vld [vmem:[%s0 + $0x3d4] sm:$0xf]
    %v405 = vld [vmem:[%s0 + $0x3d8] sm:$0xf]
    %v406 = vld [vmem:[%s0 + $0x3dc] sm:$0xf]
    %v407 = vld [vmem:[%s0 + $0x3e0] sm:$0xf]
    %v408 = vld [vmem:[%s0 + $0x3e4] sm:$0xf]
    %v409 = vld [vmem:[%s0 + $0x3e8] sm:$0xf]
    %v410 = vld [vmem:[%s0 + $0x3ec] sm:$0xf]
    %v411 = vld [vmem:[%s0 + $0x3f0] sm:$0xf]
    %v412 = vld [vmem:[%s0 + $0x3f4] sm:$0xf]
    %v413 = vld [vmem:[%s0 + $0x3f8] sm:$0xf]
    %v414 = vld [vmem:[%s0 + $0x3fc] sm:$0xf]
    %v543 = vunpack.c.l.b16 %v23
    %v544 = vunpack.c.h.b16 %v23
    %v545 = vunpack.c.l.b16 %v24
    %v546 = vunpack.c.h.b16 %v24
    %v547 = vunpack.c.l.b16 %v25
    %v548 = vunpack.c.h.b16 %v25
    %v549 = vunpack.c.l.b16 %v26
    %v550 = vunpack.c.h.b16 %v26
    %v551 = vunpack.c.l.b16 %v27
    %v552 = vunpack.c.h.b16 %v27
    %v553 = vunpack.c.l.b16 %v28
    %v554 = vunpack.c.h.b16 %v28
    %v555 = vunpack.c.l.b16 %v29
    %v556 = vunpack.c.h.b16 %v29
    %v557 = vunpack.c.l.b16 %v30
    %v558 = vunpack.c.h.b16 %v30
    %v559 = vunpack.c.l.b16 %v31
    %v560 = vunpack.c.h.b16 %v31
    %v561 = vunpack.c.l.b16 %v32
    %v562 = vunpack.c.h.b16 %v32
    %v563 = vunpack.c.l.b16 %v33
    %v564 = vunpack.c.h.b16 %v33
    %v565 = vunpack.c.l.b16 %v34
    %v566 = vunpack.c.h.b16 %v34
    %v567 = vunpack.c.l.b16 %v35
    %v568 = vunpack.c.h.b16 %v35
    %v569 = vunpack.c.l.b16 %v36
    %v570 = vunpack.c.h.b16 %v36
    %v571 = vunpack.c.l.b16 %v37
    %v572 = vunpack.c.h.b16 %v37
    %v573 = vunpack.c.l.b16 %v38
    %v574 = vunpack.c.h.b16 %v38
    %v575 = vunpack.c.l.b16 %v39
    %v576 = vunpack.c.h.b16 %v39
    %v577 = vunpack.c.l.b16 %v40
    %v578 = vunpack.c.h.b16 %v40
    %v579 = vunpack.c.l.b16 %v41
    %v580 = vunpack.c.h.b16 %v41
    %v581 = vunpack.c.l.b16 %v42
    %v582 = vunpack.c.h.b16 %v42
    %v583 = vunpack.c.l.b16 %v43
    %v584 = vunpack.c.h.b16 %v43
    %v585 = vunpack.c.l.b16 %v44
    %v586 = vunpack.c.h.b16 %v44
    %v587 = vunpack.c.l.b16 %v45
    %v588 = vunpack.c.h.b16 %v45
    %v589 = vunpack.c.l.b16 %v46
    %v590 = vunpack.c.h.b16 %v46
    %v591 = vunpack.c.l.b16 %v47
    %v592 = vunpack.c.h.b16 %v47
    %v593 = vunpack.c.l.b16 %v48
    %v594 = vunpack.c.h.b16 %v48
    %v595 = vunpack.c.l.b16 %v49
    %v596 = vunpack.c.h.b16 %v49
    %v597 = vunpack.c.l.b16 %v50
    %v598 = vunpack.c.h.b16 %v50
    %v599 = vunpack.c.l.b16 %v51
    %v600 = vunpack.c.h.b16 %v51
    %v601 = vunpack.c.l.b16 %v52
    %v602 = vunpack.c.h.b16 %v52
    %v603 = vunpack.c.l.b16 %v53
    %v604 = vunpack.c.h.b16 %v53
    %v605 = vunpack.c.l.b16 %v54
    %v606 = vunpack.c.h.b16 %v54
    %v607 = vunpack.c.l.b16 %v55
    %v608 = vunpack.c.h.b16 %v55
    %v609 = vunpack.c.l.b16 %v56
    %v610 = vunpack.c.h.b16 %v56
    %v611 = vunpack.c.l.b16 %v57
    %v612 = vunpack.c.h.b16 %v57
    %v613 = vunpack.c.l.b16 %v58
    %v614 = vunpack.c.h.b16 %v58
    %v615 = vunpack.c.l.b16 %v59
    %v616 = vunpack.c.h.b16 %v59
    %v617 = vunpack.c.l.b16 %v60
    %v618 = vunpack.c.h.b16 %v60
    %v619 = vunpack.c.l.b16 %v61
    %v620 = vunpack.c.h.b16 %v61
    %v621 = vunpack.c.l.b16 %v62
    %v622 = vunpack.c.h.b16 %v62
    %v623 = vunpack.c.l.b16 %v63
    %v624 = vunpack.c.h.b16 %v63
    %v625 = vunpack.c.l.b16 %v64
    %v626 = vunpack.c.h.b16 %v64
    %v627 = vunpack.c.l.b16 %v65
    %v628 = vunpack.c.h.b16 %v65
    %v629 = vunpack.c.l.b16 %v66
    %v630 = vunpack.c.h.b16 %v66
    %v631 = vunpack.c.l.b16 %v67
    %v632 = vunpack.c.h.b16 %v67
    %v633 = vunpack.c.l.b16 %v68
    %v634 = vunpack.c.h.b16 %v68
    %v635 = vunpack.c.l.b16 %v69
    %v636 = vunpack.c.h.b16 %v69
    %v637 = vunpack.c.l.b16 %v70
    %v638 = vunpack.c.h.b16 %v70
    %v639 = vunpack.c.l.b16 %v71
    %v640 = vunpack.c.h.b16 %v71
    %v641 = vunpack.c.l.b16 %v72
    %v642 = vunpack.c.h.b16 %v72
    %v643 = vunpack.c.l.b16 %v73
    %v644 = vunpack.c.h.b16 %v73
    %v645 = vunpack.c.l.b16 %v74
    %v646 = vunpack.c.h.b16 %v74
    %v647 = vunpack.c.l.b16 %v75
    %v648 = vunpack.c.h.b16 %v75
    %v649 = vunpack.c.l.b16 %v76
    %v650 = vunpack.c.h.b16 %v76
    %v651 = vunpack.c.l.b16 %v77
    %v652 = vunpack.c.h.b16 %v77
    %v653 = vunpack.c.l.b16 %v78
    %v654 = vunpack.c.h.b16 %v78
    %v655 = vunpack.c.l.b16 %v79
    %v656 = vunpack.c.h.b16 %v79
    %v657 = vunpack.c.l.b16 %v80
    %v658 = vunpack.c.h.b16 %v80
    %v659 = vunpack.c.l.b16 %v81
    %v660 = vunpack.c.h.b16 %v81
    %v661 = vunpack.c.l.b16 %v82
    %v662 = vunpack.c.h.b16 %v82
    %v663 = vunpack.c.l.b16 %v83
    %v664 = vunpack.c.h.b16 %v83
    %v665 = vunpack.c.l.b16 %v84
    %v666 = vunpack.c.h.b16 %v84
    %v667 = vunpack.c.l.b16 %v85
    %v668 = vunpack.c.h.b16 %v85
    %v669 = vunpack.c.l.b16 %v86
    %v670 = vunpack.c.h.b16 %v86
    %v671 = vunpack.c.l.b16 %v87
    %v672 = vunpack.c.h.b16 %v87
    %v673 = vunpack.c.l.b16 %v88
    %v674 = vunpack.c.h.b16 %v88
    %v675 = vunpack.c.l.b16 %v89
    %v676 = vunpack.c.h.b16 %v89
    %v677 = vunpack.c.l.b16 %v90
    %v678 = vunpack.c.h.b16 %v90
    %v679 = vunpack.c.l.b16 %v91
    %v680 = vunpack.c.h.b16 %v91
    %v681 = vunpack.c.l.b16 %v92
    %v682 = vunpack.c.h.b16 %v92
    %v683 = vunpack.c.l.b16 %v93
    %v684 = vunpack.c.h.b16 %v93
    %v685 = vunpack.c.l.b16 %v94
    %v686 = vunpack.c.h.b16 %v94
    %v687 = vunpack.c.l.b16 %v95
    %v688 = vunpack.c.h.b16 %v95
    %v689 = vunpack.c.l.b16 %v96
    %v690 = vunpack.c.h.b16 %v96
    %v691 = vunpack.c.l.b16 %v97
    %v692 = vunpack.c.h.b16 %v97
    %v693 = vunpack.c.l.b16 %v98
    %v694 = vunpack.c.h.b16 %v98
    %v695 = vunpack.c.l.b16 %v99
    %v696 = vunpack.c.h.b16 %v99
    %v697 = vunpack.c.l.b16 %v100
    %v698 = vunpack.c.h.b16 %v100
    %v699 = vunpack.c.l.b16 %v101
    %v700 = vunpack.c.h.b16 %v101
    %v701 = vunpack.c.l.b16 %v102
    %v702 = vunpack.c.h.b16 %v102
    %v703 = vunpack.c.l.b16 %v103
    %v704 = vunpack.c.h.b16 %v103
    %v705 = vunpack.c.l.b16 %v104
    %v706 = vunpack.c.h.b16 %v104
    %v707 = vunpack.c.l.b16 %v105
    %v708 = vunpack.c.h.b16 %v105
    %v709 = vunpack.c.l.b16 %v106
    %v710 = vunpack.c.h.b16 %v106
    %v711 = vunpack.c.l.b16 %v107
    %v712 = vunpack.c.h.b16 %v107
    %v713 = vunpack.c.l.b16 %v108
    %v714 = vunpack.c.h.b16 %v108
    %v715 = vunpack.c.l.b16 %v109
    %v716 = vunpack.c.h.b16 %v109
    %v717 = vunpack.c.l.b16 %v110
    %v718 = vunpack.c.h.b16 %v110
    %v719 = vunpack.c.l.b16 %v111
    %v720 = vunpack.c.h.b16 %v111
    %v721 = vunpack.c.l.b16 %v112
    %v722 = vunpack.c.h.b16 %v112
    %v723 = vunpack.c.l.b16 %v113
    %v724 = vunpack.c.h.b16 %v113
    %v725 = vunpack.c.l.b16 %v114
    %v726 = vunpack.c.h.b16 %v114
    %v727 = vunpack.c.l.b16 %v115
    %v728 = vunpack.c.h.b16 %v115
    %v729 = vunpack.c.l.b16 %v116
    %v730 = vunpack.c.h.b16 %v116
    %v731 = vunpack.c.l.b16 %v117
    %v732 = vunpack.c.h.b16 %v117
    %v733 = vunpack.c.l.b16 %v118
    %v734 = vunpack.c.h.b16 %v118
    %v735 = vunpack.c.l.b16 %v119
    %v736 = vunpack.c.h.b16 %v119
    %v737 = vunpack.c.l.b16 %v120
    %v738 = vunpack.c.h.b16 %v120
    %v739 = vunpack.c.l.b16 %v121
    %v740 = vunpack.c.h.b16 %v121
    %v741 = vunpack.c.l.b16 %v122
    %v742 = vunpack.c.h.b16 %v122
    %v743 = vunpack.c.l.b16 %v123
    %v744 = vunpack.c.h.b16 %v123
    %v745 = vunpack.c.l.b16 %v124
    %v746 = vunpack.c.h.b16 %v124
    %v747 = vunpack.c.l.b16 %v125
    %v748 = vunpack.c.h.b16 %v125
    %v749 = vunpack.c.l.b16 %v126
    %v750 = vunpack.c.h.b16 %v126
    %v751 = vunpack.c.l.b16 %v127
    %v752 = vunpack.c.h.b16 %v127
    %v753 = vunpack.c.l.b16 %v128
    %v754 = vunpack.c.h.b16 %v128
    %v755 = vunpack.c.l.b16 %v129
    %v756 = vunpack.c.h.b16 %v129
    %v757 = vunpack.c.l.b16 %v130
    %v758 = vunpack.c.h.b16 %v130
    %v759 = vunpack.c.l.b16 %v131
    %v760 = vunpack.c.h.b16 %v131
    %v761 = vunpack.c.l.b16 %v132
    %v762 = vunpack.c.h.b16 %v132
    %v763 = vunpack.c.l.b16 %v133
    %v764 = vunpack.c.h.b16 %v133
    %v765 = vunpack.c.l.b16 %v134
    %v766 = vunpack.c.h.b16 %v134
    %v767 = vunpack.c.l.b16 %v135
    %v768 = vunpack.c.h.b16 %v135
    %v769 = vunpack.c.l.b16 %v136
    %v770 = vunpack.c.h.b16 %v136
    %v771 = vunpack.c.l.b16 %v137
    %v772 = vunpack.c.h.b16 %v137
    %v773 = vunpack.c.l.b16 %v138
    %v774 = vunpack.c.h.b16 %v138
    %v775 = vunpack.c.l.b16 %v139
    %v776 = vunpack.c.h.b16 %v139
    %v777 = vunpack.c.l.b16 %v140
    %v778 = vunpack.c.h.b16 %v140
    %v779 = vunpack.c.l.b16 %v141
    %v780 = vunpack.c.h.b16 %v141
    %v781 = vunpack.c.l.b16 %v142
    %v782 = vunpack.c.h.b16 %v142
    %v783 = vunpack.c.l.b16 %v143
    %v784 = vunpack.c.h.b16 %v143
    %v785 = vunpack.c.l.b16 %v144
    %v786 = vunpack.c.h.b16 %v144
    %v787 = vunpack.c.l.b16 %v145
    %v788 = vunpack.c.h.b16 %v145
    %v789 = vunpack.c.l.b16 %v146
    %v790 = vunpack.c.h.b16 %v146
    %v791 = vunpack.c.l.b16 %v147
    %v792 = vunpack.c.h.b16 %v147
    %v793 = vunpack.c.l.b16 %v148
    %v794 = vunpack.c.h.b16 %v148
    %v795 = vunpack.c.l.b16 %v149
    %v796 = vunpack.c.h.b16 %v149
    %v797 = vunpack.c.l.b16 %v150
    %v798 = vunpack.c.h.b16 %v150
    %v799 = vpack.c.b16 %v559, %v543
    %v800 = vpack.c.b16 %v560, %v544
    %v801 = vpack.c.b16 %v561, %v545
    %v802 = vpack.c.b16 %v562, %v546
    %v803 = vpack.c.b16 %v563, %v547
    %v804 = vpack.c.b16 %v564, %v548
    %v805 = vpack.c.b16 %v565, %v549
    %v806 = vpack.c.b16 %v566, %v550
    %v807 = vpack.c.b16 %v567, %v551
    %v808 = vpack.c.b16 %v568, %v552
    %v809 = vpack.c.b16 %v569, %v553
    %v810 = vpack.c.b16 %v570, %v554
    %v811 = vpack.c.b16 %v571, %v555
    %v812 = vpack.c.b16 %v572, %v556
    %v813 = vpack.c.b16 %v573, %v557
    %v814 = vpack.c.b16 %v574, %v558
    %v815 = vpack.c.b16 %v591, %v575
    %v816 = vpack.c.b16 %v592, %v576
    %v817 = vpack.c.b16 %v593, %v577
    %v818 = vpack.c.b16 %v594, %v578
    %v819 = vpack.c.b16 %v595, %v579
    %v820 = vpack.c.b16 %v596, %v580
    %v821 = vpack.c.b16 %v597, %v581
    %v822 = vpack.c.b16 %v598, %v582
    %v823 = vpack.c.b16 %v599, %v583
    %v824 = vpack.c.b16 %v600, %v584
    %v825 = vpack.c.b16 %v601, %v585
    %v826 = vpack.c.b16 %v602, %v586
    %v827 = vpack.c.b16 %v603, %v587
    %v828 = vpack.c.b16 %v604, %v588
    %v829 = vpack.c.b16 %v605, %v589
    %v830 = vpack.c.b16 %v606, %v590
    %v831 = vpack.c.b16 %v623, %v607
    %v832 = vpack.c.b16 %v624, %v608
    %v833 = vpack.c.b16 %v625, %v609
    %v834 = vpack.c.b16 %v626, %v610
    %v835 = vpack.c.b16 %v627, %v611
    %v836 = vpack.c.b16 %v628, %v612
    %v837 = vpack.c.b16 %v629, %v613
    %v838 = vpack.c.b16 %v630, %v614
    %v839 = vpack.c.b16 %v631, %v615
    %v840 = vpack.c.b16 %v632, %v616
    %v841 = vpack.c.b16 %v633, %v617
    %v842 = vpack.c.b16 %v634, %v618
    %v843 = vpack.c.b16 %v635, %v619
    %v844 = vpack.c.b16 %v636, %v620
    %v845 = vpack.c.b16 %v637, %v621
    %v846 = vpack.c.b16 %v638, %v622
    %v847 = vpack.c.b16 %v655, %v639
    %v848 = vpack.c.b16 %v656, %v640
    %v849 = vpack.c.b16 %v657, %v641
    %v850 = vpack.c.b16 %v658, %v642
    %v851 = vpack.c.b16 %v659, %v643
    %v852 = vpack.c.b16 %v660, %v644
    %v853 = vpack.c.b16 %v661, %v645
    %v854 = vpack.c.b16 %v662, %v646
    %v855 = vpack.c.b16 %v663, %v647
    %v856 = vpack.c.b16 %v664, %v648
    %v857 = vpack.c.b16 %v665, %v649
    %v858 = vpack.c.b16 %v666, %v650
    %v859 = vpack.c.b16 %v667, %v651
    %v860 = vpack.c.b16 %v668, %v652
    %v861 = vpack.c.b16 %v669, %v653
    %v862 = vpack.c.b16 %v670, %v654
    %v863 = vpack.c.b16 %v687, %v671
    %v864 = vpack.c.b16 %v688, %v672
    %v865 = vpack.c.b16 %v689, %v673
    %v866 = vpack.c.b16 %v690, %v674
    %v867 = vpack.c.b16 %v691, %v675
    %v868 = vpack.c.b16 %v692, %v676
    %v869 = vpack.c.b16 %v693, %v677
    %v870 = vpack.c.b16 %v694, %v678
    %v871 = vpack.c.b16 %v695, %v679
    %v872 = vpack.c.b16 %v696, %v680
    %v873 = vpack.c.b16 %v697, %v681
    %v874 = vpack.c.b16 %v698, %v682
    %v875 = vpack.c.b16 %v699, %v683
    %v876 = vpack.c.b16 %v700, %v684
    %v877 = vpack.c.b16 %v701, %v685
    %v878 = vpack.c.b16 %v702, %v686
    %v879 = vpack.c.b16 %v719, %v703
    %v880 = vpack.c.b16 %v720, %v704
    %v881 = vpack.c.b16 %v721, %v705
    %v882 = vpack.c.b16 %v722, %v706
    %v883 = vpack.c.b16 %v723, %v707
    %v884 = vpack.c.b16 %v724, %v708
    %v885 = vpack.c.b16 %v725, %v709
    %v886 = vpack.c.b16 %v726, %v710
    %v887 = vpack.c.b16 %v727, %v711
    %v888 = vpack.c.b16 %v728, %v712
    %v889 = vpack.c.b16 %v729, %v713
    %v890 = vpack.c.b16 %v730, %v714
    %v891 = vpack.c.b16 %v731, %v715
    %v892 = vpack.c.b16 %v732, %v716
    %v893 = vpack.c.b16 %v733, %v717
    %v894 = vpack.c.b16 %v734, %v718
    %v895 = vpack.c.b16 %v751, %v735
    %v896 = vpack.c.b16 %v752, %v736
    %v897 = vpack.c.b16 %v753, %v737
    %v898 = vpack.c.b16 %v754, %v738
    %v899 = vpack.c.b16 %v755, %v739
    %v900 = vpack.c.b16 %v756, %v740
    %v901 = vpack.c.b16 %v757, %v741
    %v902 = vpack.c.b16 %v758, %v742
    %v903 = vpack.c.b16 %v759, %v743
    %v904 = vpack.c.b16 %v760, %v744
    %v905 = vpack.c.b16 %v761, %v745
    %v906 = vpack.c.b16 %v762, %v746
    %v907 = vpack.c.b16 %v763, %v747
    %v908 = vpack.c.b16 %v764, %v748
    %v909 = vpack.c.b16 %v765, %v749
    %v910 = vpack.c.b16 %v766, %v750
    %v911 = vpack.c.b16 %v783, %v767
    %v912 = vpack.c.b16 %v784, %v768
    %v913 = vpack.c.b16 %v785, %v769
    %v914 = vpack.c.b16 %v786, %v770
    %v915 = vpack.c.b16 %v787, %v771
    %v916 = vpack.c.b16 %v788, %v772
    %v917 = vpack.c.b16 %v789, %v773
    %v918 = vpack.c.b16 %v790, %v774
    %v919 = vpack.c.b16 %v791, %v775
    %v920 = vpack.c.b16 %v792, %v776
    %v921 = vpack.c.b16 %v793, %v777
    %v922 = vpack.c.b16 %v794, %v778
    %v923 = vpack.c.b16 %v795, %v779
    %v924 = vpack.c.b16 %v796, %v780
    %v925 = vpack.c.b16 %v797, %v781
    %v926 = vpack.c.b16 %v798, %v782
    %v1311 = vunpack.c.l.b16 %v159
    %v1312 = vunpack.c.l.b16 %v160
    %v1313 = vunpack.c.l.b16 %v161
    %v1314 = vunpack.c.l.b16 %v162
    %v1315 = vunpack.c.l.b16 %v163
    %v1316 = vunpack.c.l.b16 %v164
    %v1317 = vunpack.c.l.b16 %v165
    %v1318 = vunpack.c.l.b16 %v166
    %v1319 = vunpack.c.l.b16 %v167
    %v1320 = vunpack.c.l.b16 %v168
    %v1321 = vunpack.c.l.b16 %v169
    %v1322 = vunpack.c.l.b16 %v170
    %v1323 = vunpack.c.l.b16 %v171
    %v1324 = vunpack.c.l.b16 %v172
    %v1325 = vunpack.c.l.b16 %v173
    %v1326 = vunpack.c.l.b16 %v174
    %v1327 = vunpack.c.l.b16 %v175
    %v1328 = vunpack.c.l.b16 %v176
    %v1329 = vunpack.c.l.b16 %v177
    %v1330 = vunpack.c.l.b16 %v178
    %v1331 = vunpack.c.l.b16 %v179
    %v1332 = vunpack.c.l.b16 %v180
    %v1333 = vunpack.c.l.b16 %v181
    %v1334 = vunpack.c.l.b16 %v182
    %v1335 = vunpack.c.l.b16 %v183
    %v1336 = vunpack.c.l.b16 %v184
    %v1337 = vunpack.c.l.b16 %v185
    %v1338 = vunpack.c.l.b16 %v186
    %v1339 = vunpack.c.l.b16 %v187
    %v1340 = vunpack.c.l.b16 %v188
    %v1341 = vunpack.c.l.b16 %v189
    %v1342 = vunpack.c.l.b16 %v190
    %v1343 = vunpack.c.l.b16 %v191
    %v1344 = vunpack.c.l.b16 %v192
    %v1345 = vunpack.c.l.b16 %v193
    %v1346 = vunpack.c.l.b16 %v194
    %v1347 = vunpack.c.l.b16 %v195
    %v1348 = vunpack.c.l.b16 %v196
    %v1349 = vunpack.c.l.b16 %v197
    %v1350 = vunpack.c.l.b16 %v198
    %v1351 = vunpack.c.l.b16 %v199
    %v1352 = vunpack.c.l.b16 %v200
    %v1353 = vunpack.c.l.b16 %v201
    %v1354 = vunpack.c.l.b16 %v202
    %v1355 = vunpack.c.l.b16 %v203
    %v1356 = vunpack.c.l.b16 %v204
    %v1357 = vunpack.c.l.b16 %v205
    %v1358 = vunpack.c.l.b16 %v206
    %v1359 = vunpack.c.l.b16 %v207
    %v1360 = vunpack.c.l.b16 %v208
    %v1361 = vunpack.c.l.b16 %v209
    %v1362 = vunpack.c.l.b16 %v210
    %v1363 = vunpack.c.l.b16 %v211
    %v1364 = vunpack.c.l.b16 %v212
    %v1365 = vunpack.c.l.b16 %v213
    %v1366 = vunpack.c.l.b16 %v214
    %v1367 = vunpack.c.l.b16 %v215
    %v1368 = vunpack.c.l.b16 %v216
    %v1369 = vunpack.c.l.b16 %v217
    %v1370 = vunpack.c.l.b16 %v218
    %v1371 = vunpack.c.l.b16 %v219
    %v1372 = vunpack.c.l.b16 %v220
    %v1373 = vunpack.c.l.b16 %v221
    %v1374 = vunpack.c.l.b16 %v222
    %v1375 = vunpack.c.l.b16 %v223
    %v1376 = vunpack.c.l.b16 %v224
    %v1377 = vunpack.c.l.b16 %v225
    %v1378 = vunpack.c.l.b16 %v226
    %v1379 = vunpack.c.l.b16 %v227
    %v1380 = vunpack.c.l.b16 %v228
    %v1381 = vunpack.c.l.b16 %v229
    %v1382 = vunpack.c.l.b16 %v230
    %v1383 = vunpack.c.l.b16 %v231
    %v1384 = vunpack.c.l.b16 %v232
    %v1385 = vunpack.c.l.b16 %v233
    %v1386 = vunpack.c.l.b16 %v234
    %v1387 = vunpack.c.l.b16 %v235
    %v1388 = vunpack.c.l.b16 %v236
    %v1389 = vunpack.c.l.b16 %v237
    %v1390 = vunpack.c.l.b16 %v238
    %v1391 = vunpack.c.l.b16 %v239
    %v1392 = vunpack.c.l.b16 %v240
    %v1393 = vunpack.c.l.b16 %v241
    %v1394 = vunpack.c.l.b16 %v242
    %v1395 = vunpack.c.l.b16 %v243
    %v1396 = vunpack.c.l.b16 %v244
    %v1397 = vunpack.c.l.b16 %v245
    %v1398 = vunpack.c.l.b16 %v246
    %v1399 = vunpack.c.l.b16 %v247
    %v1400 = vunpack.c.l.b16 %v248
    %v1401 = vunpack.c.l.b16 %v249
    %v1402 = vunpack.c.l.b16 %v250
    %v1403 = vunpack.c.l.b16 %v251
    %v1404 = vunpack.c.l.b16 %v252
    %v1405 = vunpack.c.l.b16 %v253
    %v1406 = vunpack.c.l.b16 %v254
    %v1407 = vunpack.c.l.b16 %v255
    %v1408 = vunpack.c.l.b16 %v256
    %v1409 = vunpack.c.l.b16 %v257
    %v1410 = vunpack.c.l.b16 %v258
    %v1411 = vunpack.c.l.b16 %v259
    %v1412 = vunpack.c.l.b16 %v260
    %v1413 = vunpack.c.l.b16 %v261
    %v1414 = vunpack.c.l.b16 %v262
    %v1415 = vunpack.c.l.b16 %v263
    %v1416 = vunpack.c.l.b16 %v264
    %v1417 = vunpack.c.l.b16 %v265
    %v1418 = vunpack.c.l.b16 %v266
    %v1419 = vunpack.c.l.b16 %v267
    %v1420 = vunpack.c.l.b16 %v268
    %v1421 = vunpack.c.l.b16 %v269
    %v1422 = vunpack.c.l.b16 %v270
    %v1423 = vunpack.c.l.b16 %v271
    %v1424 = vunpack.c.l.b16 %v272
    %v1425 = vunpack.c.l.b16 %v273
    %v1426 = vunpack.c.l.b16 %v274
    %v1427 = vunpack.c.l.b16 %v275
    %v1428 = vunpack.c.l.b16 %v276
    %v1429 = vunpack.c.l.b16 %v277
    %v1430 = vunpack.c.l.b16 %v278
    %v1431 = vunpack.c.l.b16 %v279
    %v1432 = vunpack.c.l.b16 %v280
    %v1433 = vunpack.c.l.b16 %v281
    %v1434 = vunpack.c.l.b16 %v282
    %v1435 = vunpack.c.l.b16 %v283
    %v1436 = vunpack.c.l.b16 %v284
    %v1437 = vunpack.c.l.b16 %v285
    %v1438 = vunpack.c.l.b16 %v286
    %v1439 = vunpack.c.l.b16 %v287
    %v1440 = vunpack.c.l.b16 %v288
    %v1441 = vunpack.c.l.b16 %v289
    %v1442 = vunpack.c.l.b16 %v290
    %v1443 = vunpack.c.l.b16 %v291
    %v1444 = vunpack.c.l.b16 %v292
    %v1445 = vunpack.c.l.b16 %v293
    %v1446 = vunpack.c.l.b16 %v294
    %v1447 = vunpack.c.l.b16 %v295
    %v1448 = vunpack.c.l.b16 %v296
    %v1449 = vunpack.c.l.b16 %v297
    %v1450 = vunpack.c.l.b16 %v298
    %v1451 = vunpack.c.l.b16 %v299
    %v1452 = vunpack.c.l.b16 %v300
    %v1453 = vunpack.c.l.b16 %v301
    %v1454 = vunpack.c.l.b16 %v302
    %v1455 = vunpack.c.l.b16 %v303
    %v1456 = vunpack.c.l.b16 %v304
    %v1457 = vunpack.c.l.b16 %v305
    %v1458 = vunpack.c.l.b16 %v306
    %v1459 = vunpack.c.l.b16 %v307
    %v1460 = vunpack.c.l.b16 %v308
    %v1461 = vunpack.c.l.b16 %v309
    %v1462 = vunpack.c.l.b16 %v310
    %v1463 = vunpack.c.l.b16 %v311
    %v1464 = vunpack.c.l.b16 %v312
    %v1465 = vunpack.c.l.b16 %v313
    %v1466 = vunpack.c.l.b16 %v314
    %v1467 = vunpack.c.l.b16 %v315
    %v1468 = vunpack.c.l.b16 %v316
    %v1469 = vunpack.c.l.b16 %v317
    %v1470 = vunpack.c.l.b16 %v318
    %v1471 = vunpack.c.l.b16 %v319
    %v1472 = vunpack.c.l.b16 %v320
    %v1473 = vunpack.c.l.b16 %v321
    %v1474 = vunpack.c.l.b16 %v322
    %v1475 = vunpack.c.l.b16 %v323
    %v1476 = vunpack.c.l.b16 %v324
    %v1477 = vunpack.c.l.b16 %v325
    %v1478 = vunpack.c.l.b16 %v326
    %v1479 = vunpack.c.l.b16 %v327
    %v1480 = vunpack.c.l.b16 %v328
    %v1481 = vunpack.c.l.b16 %v329
    %v1482 = vunpack.c.l.b16 %v330
    %v1483 = vunpack.c.l.b16 %v331
    %v1484 = vunpack.c.l.b16 %v332
    %v1485 = vunpack.c.l.b16 %v333
    %v1486 = vunpack.c.l.b16 %v334
    %v1487 = vunpack.c.l.b16 %v335
    %v1488 = vunpack.c.l.b16 %v336
    %v1489 = vunpack.c.l.b16 %v337
    %v1490 = vunpack.c.l.b16 %v338
    %v1491 = vunpack.c.l.b16 %v339
    %v1492 = vunpack.c.l.b16 %v340
    %v1493 = vunpack.c.l.b16 %v341
    %v1494 = vunpack.c.l.b16 %v342
    %v1495 = vunpack.c.l.b16 %v343
    %v1496 = vunpack.c.l.b16 %v344
    %v1497 = vunpack.c.l.b16 %v345
    %v1498 = vunpack.c.l.b16 %v346
    %v1499 = vunpack.c.l.b16 %v347
    %v1500 = vunpack.c.l.b16 %v348
    %v1501 = vunpack.c.l.b16 %v349
    %v1502 = vunpack.c.l.b16 %v350
    %v1503 = vunpack.c.l.b16 %v351
    %v1504 = vunpack.c.l.b16 %v352
    %v1505 = vunpack.c.l.b16 %v353
    %v1506 = vunpack.c.l.b16 %v354
    %v1507 = vunpack.c.l.b16 %v355
    %v1508 = vunpack.c.l.b16 %v356
    %v1509 = vunpack.c.l.b16 %v357
    %v1510 = vunpack.c.l.b16 %v358
    %v1511 = vunpack.c.l.b16 %v359
    %v1512 = vunpack.c.l.b16 %v360
    %v1513 = vunpack.c.l.b16 %v361
    %v1514 = vunpack.c.l.b16 %v362
    %v1515 = vunpack.c.l.b16 %v363
    %v1516 = vunpack.c.l.b16 %v364
    %v1517 = vunpack.c.l.b16 %v365
    %v1518 = vunpack.c.l.b16 %v366
    %v1519 = vunpack.c.l.b16 %v367
    %v1520 = vunpack.c.l.b16 %v368
    %v1521 = vunpack.c.l.b16 %v369
    %v1522 = vunpack.c.l.b16 %v370
    %v1523 = vunpack.c.l.b16 %v371
    %v1524 = vunpack.c.l.b16 %v372
    %v1525 = vunpack.c.l.b16 %v373
    %v1526 = vunpack.c.l.b16 %v374
    %v1527 = vunpack.c.l.b16 %v375
    %v1528 = vunpack.c.l.b16 %v376
    %v1529 = vunpack.c.l.b16 %v377
    %v1530 = vunpack.c.l.b16 %v378
    %v1531 = vunpack.c.l.b16 %v379
    %v1532 = vunpack.c.l.b16 %v380
    %v1533 = vunpack.c.l.b16 %v381
    %v1534 = vunpack.c.l.b16 %v382
    %v1535 = vunpack.c.l.b16 %v383
    %v1536 = vunpack.c.l.b16 %v384
    %v1537 = vunpack.c.l.b16 %v385
    %v1538 = vunpack.c.l.b16 %v386
    %v1539 = vunpack.c.l.b16 %v387
    %v1540 = vunpack.c.l.b16 %v388
    %v1541 = vunpack.c.l.b16 %v389
    %v1542 = vunpack.c.l.b16 %v390
    %v1543 = vunpack.c.l.b16 %v391
    %v1544 = vunpack.c.l.b16 %v392
    %v1545 = vunpack.c.l.b16 %v393
    %v1546 = vunpack.c.l.b16 %v394
    %v1547 = vunpack.c.l.b16 %v395
    %v1548 = vunpack.c.l.b16 %v396
    %v1549 = vunpack.c.l.b16 %v397
    %v1550 = vunpack.c.l.b16 %v398
    %v1551 = vunpack.c.l.b16 %v399
    %v1552 = vunpack.c.l.b16 %v400
    %v1553 = vunpack.c.l.b16 %v401
    %v1554 = vunpack.c.l.b16 %v402
    %v1555 = vunpack.c.l.b16 %v403
    %v1556 = vunpack.c.l.b16 %v404
    %v1557 = vunpack.c.l.b16 %v405
    %v1558 = vunpack.c.l.b16 %v406
    %v1559 = vunpack.c.l.b16 %v407
    %v1560 = vunpack.c.l.b16 %v408
    %v1561 = vunpack.c.l.b16 %v409
    %v1562 = vunpack.c.l.b16 %v410
    %v1563 = vunpack.c.l.b16 %v411
    %v1564 = vunpack.c.l.b16 %v412
    %v1565 = vunpack.c.l.b16 %v413
    %v1566 = vunpack.c.l.b16 %v414
    %v1567 = vpack.c.b16 %v1312, %v1311
    %v1568 = vpack.c.b16 %v1314, %v1313
    %v1569 = vpack.c.b16 %v1316, %v1315
    %v1570 = vpack.c.b16 %v1318, %v1317
    %v1571 = vpack.c.b16 %v1320, %v1319
    %v1572 = vpack.c.b16 %v1322, %v1321
    %v1573 = vpack.c.b16 %v1324, %v1323
    %v1574 = vpack.c.b16 %v1326, %v1325
    %v1575 = vpack.c.b16 %v1328, %v1327
    %v1576 = vpack.c.b16 %v1330, %v1329
    %v1577 = vpack.c.b16 %v1332, %v1331
    %v1578 = vpack.c.b16 %v1334, %v1333
    %v1579 = vpack.c.b16 %v1336, %v1335
    %v1580 = vpack.c.b16 %v1338, %v1337
    %v1581 = vpack.c.b16 %v1340, %v1339
    %v1582 = vpack.c.b16 %v1342, %v1341
    %v1583 = vpack.c.b16 %v1344, %v1343
    %v1584 = vpack.c.b16 %v1346, %v1345
    %v1585 = vpack.c.b16 %v1348, %v1347
    %v1586 = vpack.c.b16 %v1350, %v1349
    %v1587 = vpack.c.b16 %v1352, %v1351
    %v1588 = vpack.c.b16 %v1354, %v1353
    %v1589 = vpack.c.b16 %v1356, %v1355
    %v1590 = vpack.c.b16 %v1358, %v1357
    %v1591 = vpack.c.b16 %v1360, %v1359
    %v1592 = vpack.c.b16 %v1362, %v1361
    %v1593 = vpack.c.b16 %v1364, %v1363
    %v1594 = vpack.c.b16 %v1366, %v1365
    %v1595 = vpack.c.b16 %v1368, %v1367
    %v1596 = vpack.c.b16 %v1370, %v1369
    %v1597 = vpack.c.b16 %v1372, %v1371
    %v1598 = vpack.c.b16 %v1374, %v1373
    %v1599 = vpack.c.b16 %v1376, %v1375
    %v1600 = vpack.c.b16 %v1378, %v1377
    %v1601 = vpack.c.b16 %v1380, %v1379
    %v1602 = vpack.c.b16 %v1382, %v1381
    %v1603 = vpack.c.b16 %v1384, %v1383
    %v1604 = vpack.c.b16 %v1386, %v1385
    %v1605 = vpack.c.b16 %v1388, %v1387
    %v1606 = vpack.c.b16 %v1390, %v1389
    %v1607 = vpack.c.b16 %v1392, %v1391
    %v1608 = vpack.c.b16 %v1394, %v1393
    %v1609 = vpack.c.b16 %v1396, %v1395
    %v1610 = vpack.c.b16 %v1398, %v1397
    %v1611 = vpack.c.b16 %v1400, %v1399
    %v1612 = vpack.c.b16 %v1402, %v1401
    %v1613 = vpack.c.b16 %v1404, %v1403
    %v1614 = vpack.c.b16 %v1406, %v1405
    %v1615 = vpack.c.b16 %v1408, %v1407
    %v1616 = vpack.c.b16 %v1410, %v1409
    %v1617 = vpack.c.b16 %v1412, %v1411
    %v1618 = vpack.c.b16 %v1414, %v1413
    %v1619 = vpack.c.b16 %v1416, %v1415
    %v1620 = vpack.c.b16 %v1418, %v1417
    %v1621 = vpack.c.b16 %v1420, %v1419
    %v1622 = vpack.c.b16 %v1422, %v1421
    %v1623 = vpack.c.b16 %v1424, %v1423
    %v1624 = vpack.c.b16 %v1426, %v1425
    %v1625 = vpack.c.b16 %v1428, %v1427
    %v1626 = vpack.c.b16 %v1430, %v1429
    %v1627 = vpack.c.b16 %v1432, %v1431
    %v1628 = vpack.c.b16 %v1434, %v1433
    %v1629 = vpack.c.b16 %v1436, %v1435
    %v1630 = vpack.c.b16 %v1438, %v1437
    %v1631 = vpack.c.b16 %v1440, %v1439
    %v1632 = vpack.c.b16 %v1442, %v1441
    %v1633 = vpack.c.b16 %v1444, %v1443
    %v1634 = vpack.c.b16 %v1446, %v1445
    %v1635 = vpack.c.b16 %v1448, %v1447
    %v1636 = vpack.c.b16 %v1450, %v1449
    %v1637 = vpack.c.b16 %v1452, %v1451
    %v1638 = vpack.c.b16 %v1454, %v1453
    %v1639 = vpack.c.b16 %v1456, %v1455
    %v1640 = vpack.c.b16 %v1458, %v1457
    %v1641 = vpack.c.b16 %v1460, %v1459
    %v1642 = vpack.c.b16 %v1462, %v1461
    %v1643 = vpack.c.b16 %v1464, %v1463
    %v1644 = vpack.c.b16 %v1466, %v1465
    %v1645 = vpack.c.b16 %v1468, %v1467
    %v1646 = vpack.c.b16 %v1470, %v1469
    %v1647 = vpack.c.b16 %v1472, %v1471
    %v1648 = vpack.c.b16 %v1474, %v1473
    %v1649 = vpack.c.b16 %v1476, %v1475
    %v1650 = vpack.c.b16 %v1478, %v1477
    %v1651 = vpack.c.b16 %v1480, %v1479
    %v1652 = vpack.c.b16 %v1482, %v1481
    %v1653 = vpack.c.b16 %v1484, %v1483
    %v1654 = vpack.c.b16 %v1486, %v1485
    %v1655 = vpack.c.b16 %v1488, %v1487
    %v1656 = vpack.c.b16 %v1490, %v1489
    %v1657 = vpack.c.b16 %v1492, %v1491
    %v1658 = vpack.c.b16 %v1494, %v1493
    %v1659 = vpack.c.b16 %v1496, %v1495
    %v1660 = vpack.c.b16 %v1498, %v1497
    %v1661 = vpack.c.b16 %v1500, %v1499
    %v1662 = vpack.c.b16 %v1502, %v1501
    %v1663 = vpack.c.b16 %v1504, %v1503
    %v1664 = vpack.c.b16 %v1506, %v1505
    %v1665 = vpack.c.b16 %v1508, %v1507
    %v1666 = vpack.c.b16 %v1510, %v1509
    %v1667 = vpack.c.b16 %v1512, %v1511
    %v1668 = vpack.c.b16 %v1514, %v1513
    %v1669 = vpack.c.b16 %v1516, %v1515
    %v1670 = vpack.c.b16 %v1518, %v1517
    %v1671 = vpack.c.b16 %v1520, %v1519
    %v1672 = vpack.c.b16 %v1522, %v1521
    %v1673 = vpack.c.b16 %v1524, %v1523
    %v1674 = vpack.c.b16 %v1526, %v1525
    %v1675 = vpack.c.b16 %v1528, %v1527
    %v1676 = vpack.c.b16 %v1530, %v1529
    %v1677 = vpack.c.b16 %v1532, %v1531
    %v1678 = vpack.c.b16 %v1534, %v1533
    %v1679 = vpack.c.b16 %v1536, %v1535
    %v1680 = vpack.c.b16 %v1538, %v1537
    %v1681 = vpack.c.b16 %v1540, %v1539
    %v1682 = vpack.c.b16 %v1542, %v1541
    %v1683 = vpack.c.b16 %v1544, %v1543
    %v1684 = vpack.c.b16 %v1546, %v1545
    %v1685 = vpack.c.b16 %v1548, %v1547
    %v1686 = vpack.c.b16 %v1550, %v1549
    %v1687 = vpack.c.b16 %v1552, %v1551
    %v1688 = vpack.c.b16 %v1554, %v1553
    %v1689 = vpack.c.b16 %v1556, %v1555
    %v1690 = vpack.c.b16 %v1558, %v1557
    %v1691 = vpack.c.b16 %v1560, %v1559
    %v1692 = vpack.c.b16 %v1562, %v1561
    %v1693 = vpack.c.b16 %v1564, %v1563
    %v1694 = vpack.c.b16 %v1566, %v1565
    %1823 = vmatprep.subr.bf16.mxu0 0
    %1824 = vmatpush1.bf16.msra.mxu0 %v1567
    %1825 = vmatprep.subr.bf16.mxu0 0
    %1826 = vmatpush1.bf16.msra.mxu0 %v1568
    %1827 = vmatprep.subr.bf16.mxu0 0
    %1828 = vmatpush1.bf16.msra.mxu0 %v1569
    %1829 = vmatprep.subr.bf16.mxu0 0
    %1830 = vmatpush1.bf16.msra.mxu0 %v1570
    %1831 = vmatprep.subr.bf16.mxu0 0
    %1832 = vmatpush1.bf16.msra.mxu0 %v1571
    %1833 = vmatprep.subr.bf16.mxu0 0
    %1834 = vmatpush1.bf16.msra.mxu0 %v1572
    %1835 = vmatprep.subr.bf16.mxu0 0
    %1836 = vmatpush1.bf16.msra.mxu0 %v1573
    %1837 = vmatprep.subr.bf16.mxu0 0
    %1838 = vmatpush1.bf16.msra.mxu0 %v1574
    %1839 = vmatprep.subr.bf16.mxu0 0
    %1840 = vmatpush1.bf16.msra.mxu0 %v1575
    %1841 = vmatprep.subr.bf16.mxu0 0
    %1842 = vmatpush1.bf16.msra.mxu0 %v1576
    %1843 = vmatprep.subr.bf16.mxu0 0
    %1844 = vmatpush1.bf16.msra.mxu0 %v1577
    %1845 = vmatprep.subr.bf16.mxu0 0
    %1846 = vmatpush1.bf16.msra.mxu0 %v1578
    %1847 = vmatprep.subr.bf16.mxu0 0
    %1848 = vmatpush1.bf16.msra.mxu0 %v1579
    %1849 = vmatprep.subr.bf16.mxu0 0
    %1850 = vmatpush1.bf16.msra.mxu0 %v1580
    %1851 = vmatprep.subr.bf16.mxu0 0
    %1852 = vmatpush1.bf16.msra.mxu0 %v1581
    %1853 = vmatprep.subr.bf16.mxu0 0
    %1854 = vmatpush1.bf16.msra.mxu0 %v1582
    %1855 = vmatprep.mubr.bf16.mxu0 %v800
    %1856 = vmatmul.mubr.bf16.gmra.mrb[0].mxu0 %v799
    %v1857 = vpop.f32.mrb[0].mxu0
    %v1858 = vadd.f32 0.0, %v1857
    %v1859 = vpop.f32.mrb[0].mxu0
    %v1860 = vpop.f32.mrb[0].mxu0
    %v1861 = vadd.f32 0.0, %v1860
    %v1862 = vpop.f32.mrb[0].mxu0
    %1863 = vmatprep.mubr.bf16.mxu0 %v816
    %1864 = vmatmul.mubr.bf16.gmra.mrb[0].mxu0 %v815
    %v1865 = vpop.f32.mrb[0].mxu0
    %v1866 = vadd.f32 0.0, %v1865
    %v1867 = vpop.f32.mrb[0].mxu0
    %v1868 = vpop.f32.mrb[0].mxu0
    %v1869 = vadd.f32 0.0, %v1868
    %v1870 = vpop.f32.mrb[0].mxu0
    %1871 = vmatprep.mubr.bf16.mxu0 %v832
    %1872 = vmatmul.mubr.bf16.gmra.mrb[0].mxu0 %v831
    %v1873 = vpop.f32.mrb[0].mxu0
    %v1874 = vadd.f32 0.0, %v1873
    %v1875 = vpop.f32.mrb[0].mxu0
    %v1876 = vpop.f32.mrb[0].mxu0
    %v1877 = vadd.f32 0.0, %v1876
    %v1878 = vpop.f32.mrb[0].mxu0
    %1879 = vmatprep.mubr.bf16.mxu0 %v848
    %1880 = vmatmul.mubr.bf16.gmra.mrb[0].mxu0 %v847
    %v1881 = vpop.f32.mrb[0].mxu0
    %v1882 = vadd.f32 0.0, %v1881
    %v1883 = vpop.f32.mrb[0].mxu0
    %v1884 = vpop.f32.mrb[0].mxu0
    %v1885 = vadd.f32 0.0, %v1884
    %v1886 = vpop.f32.mrb[0].mxu0
    %1887 = vmatprep.mubr.bf16.mxu0 %v864
    %1888 = vmatmul.mubr.bf16.gmra.mrb[0].mxu0 %v863
    %v1889 = vpop.f32.mrb[0].mxu0
    %v1890 = vadd.f32 0.0, %v1889
    %v1891 = vpop.f32.mrb[0].mxu0
    %v1892 = vpop.f32.mrb[0].mxu0
    %v1893 = vadd.f32 0.0, %v1892
    %v1894 = vpop.f32.mrb[0].mxu0
    %1895 = vmatprep.mubr.bf16.mxu0 %v880
    %1896 = vmatmul.mubr.bf16.gmra.mrb[0].mxu0 %v879
    %v1897 = vpop.f32.mrb[0].mxu0
    %v1898 = vadd.f32 0.0, %v1897
    %v1899 = vpop.f32.mrb[0].mxu0
    %v1900 = vpop.f32.mrb[0].mxu0
    %v1901 = vadd.f32 0.0, %v1900
    %v1902 = vpop.f32.mrb[0].mxu0
    %1903 = vmatprep.mubr.bf16.mxu0 %v896
    %1904 = vmatmul.mubr.bf16.gmra.mrb[0].mxu0 %v895
    %v1905 = vpop.f32.mrb[0].mxu0
    %v1906 = vadd.f32 0.0, %v1905
    %v1907 = vpop.f32.mrb[0].mxu0
    %v1908 = vpop.f32.mrb[0].mxu0
    %v1909 = vadd.f32 0.0, %v1908
    %v1910 = vpop.f32.mrb[0].mxu0
    %1911 = vmatprep.mubr.bf16.mxu0 %v912
    %1912 = vmatmul.mubr.bf16.gmra.mrb[0].mxu0 %v911
    %v1913 = vpop.f32.mrb[0].mxu0
    %v1914 = vadd.f32 0.0, %v1913
    %v1915 = vpop.f32.mrb[0].mxu0
    %v1916 = vpop.f32.mrb[0].mxu0
    %v1917 = vadd.f32 0.0, %v1916
    %v1918 = vpop.f32.mrb[0].mxu0
    %1919 = vdwg.mxu0
    %1920 = vmatprep.subr.bf16.mxu0 0
    %1921 = vmatpush1.bf16.msra.mxu0 %v1583
    %1922 = vmatprep.subr.bf16.mxu0 0
    %1923 = vmatpush1.bf16.msra.mxu0 %v1584
    %1924 = vmatprep.subr.bf16.mxu0 0
    %1925 = vmatpush1.bf16.msra.mxu0 %v1585
    %1926 = vmatprep.subr.bf16.mxu0 0
    %1927 = vmatpush1.bf16.msra.mxu0 %v1586
    %1928 = vmatprep.subr.bf16.mxu0 0
    %1929 = vmatpush1.bf16.msra.mxu0 %v1587
    %1930 = vmatprep.subr.bf16.mxu0 0
    %1931 = vmatpush1.bf16.msra.mxu0 %v1588
    %1932 = vmatprep.subr.bf16.mxu0 0
    %1933 = vmatpush1.bf16.msra.mxu0 %v1589
    %1934 = vmatprep.subr.bf16.mxu0 0
    %1935 = vmatpush1.bf16.msra.mxu0 %v1590
    %1936 = vmatprep.subr.bf16.mxu0 0
    %1937 = vmatpush1.bf16.msra.mxu0 %v1591
    %1938 = vmatprep.subr.bf16.mxu0 0
    %1939 = vmatpush1.bf16.msra.mxu0 %v1592
    %1940 = vmatprep.subr.bf16.mxu0 0
    %1941 = vmatpush1.bf16.msra.mxu0 %v1593
    %1942 = vmatprep.subr.bf16.mxu0 0
    %1943 = vmatpush1.bf16.msra.mxu0 %v1594
    %1944 = vmatprep.subr.bf16.mxu0 0
    %1945 = vmatpush1.bf16.msra.mxu0 %v1595
    %1946 = vmatprep.subr.bf16.mxu0 0
    %1947 = vmatpush1.bf16.msra.mxu0 %v1596
    %1948 = vmatprep.subr.bf16.mxu0 0
    %1949 = vmatpush1.bf16.msra.mxu0 %v1597
    %1950 = vmatprep.subr.bf16.mxu0 0
    %1951 = vmatpush1.bf16.msra.mxu0 %v1598
    %1952 = vmatprep.mubr.bf16.mxu0 %v802
    %1953 = vmatmul.mubr.bf16.gmra.mrb[0].mxu0 %v801
    %v1954 = vpop.f32.mrb[0].mxu0
    %v1955 = vadd.f32 %v1858, %v1954
    %v1956 = vpop.f32.mrb[0].mxu0
    %v1957 = vpop.f32.mrb[0].mxu0
    %v1958 = vadd.f32 %v1861, %v1957
    %v1959 = vpop.f32.mrb[0].mxu0
    %1960 = vmatprep.mubr.bf16.mxu0 %v818
    %1961 = vmatmul.mubr.bf16.gmra.mrb[0].mxu0 %v817
    %v1962 = vpop.f32.mrb[0].mxu0
    %v1963 = vadd.f32 %v1866, %v1962
    %v1964 = vpop.f32.mrb[0].mxu0
    %v1965 = vpop.f32.mrb[0].mxu0
    %v1966 = vadd.f32 %v1869, %v1965
    %v1967 = vpop.f32.mrb[0].mxu0
    %1968 = vmatprep.mubr.bf16.mxu0 %v834
    %1969 = vmatmul.mubr.bf16.gmra.mrb[0].mxu0 %v833
    %v1970 = vpop.f32.mrb[0].mxu0
    %v1971 = vadd.f32 %v1874, %v1970
    %v1972 = vpop.f32.mrb[0].mxu0
    %v1973 = vpop.f32.mrb[0].mxu0
    %v1974 = vadd.f32 %v1877, %v1973
    %v1975 = vpop.f32.mrb[0].mxu0
    %1976 = vmatprep.mubr.bf16.mxu0 %v850
    %1977 = vmatmul.mubr.bf16.gmra.mrb[0].mxu0 %v849
    %v1978 = vpop.f32.mrb[0].mxu0
    %v1979 = vadd.f32 %v1882, %v1978
    %v1980 = vpop.f32.mrb[0].mxu0
    %v1981 = vpop.f32.mrb[0].mxu0
    %v1982 = vadd.f32 %v1885, %v1981
    %v1983 = vpop.f32.mrb[0].mxu0
    %1984 = vmatprep.mubr.bf16.mxu0 %v866
    %1985 = vmatmul.mubr.bf16.gmra.mrb[0].mxu0 %v865
    %v1986 = vpop.f32.mrb[0].mxu0
    %v1987 = vadd.f32 %v1890, %v1986
    %v1988 = vpop.f32.mrb[0].mxu0
    %v1989 = vpop.f32.mrb[0].mxu0
    %v1990 = vadd.f32 %v1893, %v1989
    %v1991 = vpop.f32.mrb[0].mxu0
    %1992 = vmatprep.mubr.bf16.mxu0 %v882
    %1993 = vmatmul.mubr.bf16.gmra.mrb[0].mxu0 %v881
    %v1994 = vpop.f32.mrb[0].mxu0
    %v1995 = vadd.f32 %v1898, %v1994
    %v1996 = vpop.f32.mrb[0].mxu0
    %v1997 = vpop.f32.mrb[0].mxu0
    %v1998 = vadd.f32 %v1901, %v1997
    %v1999 = vpop.f32.mrb[0].mxu0
    %2000 = vmatprep.mubr.bf16.mxu0 %v898
    %2001 = vmatmul.mubr.bf16.gmra.mrb[0].mxu0 %v897
    %v2002 = vpop.f32.mrb[0].mxu0
    %v2003 = vadd.f32 %v1906, %v2002
    %v2004 = vpop.f32.mrb[0].mxu0
    %v2005 = vpop.f32.mrb[0].mxu0
    %v2006 = vadd.f32 %v1909, %v2005
    %v2007 = vpop.f32.mrb[0].mxu0
    %2008 = vmatprep.mubr.bf16.mxu0 %v914
    %2009 = vmatmul.mubr.bf16.gmra.mrb[0].mxu0 %v913
    %v2010 = vpop.f32.mrb[0].mxu0
    %v2011 = vadd.f32 %v1914, %v2010
    %v2012 = vpop.f32.mrb[0].mxu0
    %v2013 = vpop.f32.mrb[0].mxu0
    %v2014 = vadd.f32 %v1917, %v2013
    %v2015 = vpop.f32.mrb[0].mxu0
    %2016 = vdwg.mxu0
    %2017 = vmatprep.subr.bf16.mxu0 0
    %2018 = vmatpush1.bf16.msra.mxu0 %v1599
    %2019 = vmatprep.subr.bf16.mxu0 0
    %2020 = vmatpush1.bf16.msra.mxu0 %v1600
    %2021 = vmatprep.subr.bf16.mxu0 0
    %2022 = vmatpush1.bf16.msra.mxu0 %v1601
    %2023 = vmatprep.subr.bf16.mxu0 0
    %2024 = vmatpush1.bf16.msra.mxu0 %v1602
    %2025 = vmatprep.subr.bf16.mxu0 0
    %2026 = vmatpush1.bf16.msra.mxu0 %v1603
    %2027 = vmatprep.subr.bf16.mxu0 0
    %2028 = vmatpush1.bf16.msra.mxu0 %v1604
    %2029 = vmatprep.subr.bf16.mxu0 0
    %2030 = vmatpush1.bf16.msra.mxu0 %v1605
    %2031 = vmatprep.subr.bf16.mxu0 0
    %2032 = vmatpush1.bf16.msra.mxu0 %v1606
    %2033 = vmatprep.subr.bf16.mxu0 0
    %2034 = vmatpush1.bf16.msra.mxu0 %v1607
    %2035 = vmatprep.subr.bf16.mxu0 0
    %2036 = vmatpush1.bf16.msra.mxu0 %v1608
    %2037 = vmatprep.subr.bf16.mxu0 0
    %2038 = vmatpush1.bf16.msra.mxu0 %v1609
    %2039 = vmatprep.subr.bf16.mxu0 0
    %2040 = vmatpush1.bf16.msra.mxu0 %v1610
    %2041 = vmatprep.subr.bf16.mxu0 0
    %2042 = vmatpush1.bf16.msra.mxu0 %v1611
    %2043 = vmatprep.subr.bf16.mxu0 0
    %2044 = vmatpush1.bf16.msra.mxu0 %v1612
    %2045 = vmatprep.subr.bf16.mxu0 0
    %2046 = vmatpush1.bf16.msra.mxu0 %v1613
    %2047 = vmatprep.subr.bf16.mxu0 0
    %2048 = vmatpush1.bf16.msra.mxu0 %v1614
    %2049 = vmatprep.mubr.bf16.mxu0 %v804
    %2050 = vmatmul.mubr.bf16.gmra.mrb[0].mxu0 %v803
    %v2051 = vpop.f32.mrb[0].mxu0
    %v2052 = vadd.f32 %v1955, %v2051
    %v2053 = vpop.f32.mrb[0].mxu0
    %v2054 = vpop.f32.mrb[0].mxu0
    %v2055 = vadd.f32 %v1958, %v2054
    %v2056 = vpop.f32.mrb[0].mxu0
    %2057 = vmatprep.mubr.bf16.mxu0 %v820
    %2058 = vmatmul.mubr.bf16.gmra.mrb[0].mxu0 %v819
    %v2059 = vpop.f32.mrb[0].mxu0
    %v2060 = vadd.f32 %v1963, %v2059
    %v2061 = vpop.f32.mrb[0].mxu0
    %v2062 = vpop.f32.mrb[0].mxu0
    %v2063 = vadd.f32 %v1966, %v2062
    %v2064 = vpop.f32.mrb[0].mxu0
    %2065 = vmatprep.mubr.bf16.mxu0 %v836
    %2066 = vmatmul.mubr.bf16.gmra.mrb[0].mxu0 %v835
    %v2067 = vpop.f32.mrb[0].mxu0
    %v2068 = vadd.f32 %v1971, %v2067
    %v2069 = vpop.f32.mrb[0].mxu0
    %v2070 = vpop.f32.mrb[0].mxu0
    %v2071 = vadd.f32 %v1974, %v2070
    %v2072 = vpop.f32.mrb[0].mxu0
    %2073 = vmatprep.mubr.bf16.mxu0 %v852
    %2074 = vmatmul.mubr.bf16.gmra.mrb[0].mxu0 %v851
    %v2075 = vpop.f32.mrb[0].mxu0
    %v2076 = vadd.f32 %v1979, %v2075
    %v2077 = vpop.f32.mrb[0].mxu0
    %v2078 = vpop.f32.mrb[0].mxu0
    %v2079 = vadd.f32 %v1982, %v2078
    %v2080 = vpop.f32.mrb[0].mxu0
    %2081 = vmatprep.mubr.bf16.mxu0 %v868
    %2082 = vmatmul.mubr.bf16.gmra.mrb[0].mxu0 %v867
    %v2083 = vpop.f32.mrb[0].mxu0
    %v2084 = vadd.f32 %v1987, %v2083
    %v2085 = vpop.f32.mrb[0].mxu0
    %v2086 = vpop.f32.mrb[0].mxu0
    %v2087 = vadd.f32 %v1990, %v2086
    %v2088 = vpop.f32.mrb[0].mxu0
    %2089 = vmatprep.mubr.bf16.mxu0 %v884
    %2090 = vmatmul.mubr.bf16.gmra.mrb[0].mxu0 %v883
    %v2091 = vpop.f32.mrb[0].mxu0
    %v2092 = vadd.f32 %v1995, %v2091
    %v2093 = vpop.f32.mrb[0].mxu0
    %v2094 = vpop.f32.mrb[0].mxu0
    %v2095 = vadd.f32 %v1998, %v2094
    %v2096 = vpop.f32.mrb[0].mxu0
    %2097 = vmatprep.mubr.bf16.mxu0 %v900
    %2098 = vmatmul.mubr.bf16.gmra.mrb[0].mxu0 %v899
    %v2099 = vpop.f32.mrb[0].mxu0
    %v2100 = vadd.f32 %v2003, %v2099
    %v2101 = vpop.f32.mrb[0].mxu0
    %v2102 = vpop.f32.mrb[0].mxu0
    %v2103 = vadd.f32 %v2006, %v2102
    %v2104 = vpop.f32.mrb[0].mxu0
    %2105 = vmatprep.mubr.bf16.mxu0 %v916
    %2106 = vmatmul.mubr.bf16.gmra.mrb[0].mxu0 %v915
    %v2107 = vpop.f32.mrb[0].mxu0
    %v2108 = vadd.f32 %v2011, %v2107
    %v2109 = vpop.f32.mrb[0].mxu0
    %v2110 = vpop.f32.mrb[0].mxu0
    %v2111 = vadd.f32 %v2014, %v2110
    %v2112 = vpop.f32.mrb[0].mxu0
    %2113 = vdwg.mxu0
    %2114 = vmatprep.subr.bf16.mxu0 0
    %2115 = vmatpush1.bf16.msra.mxu0 %v1615
    %2116 = vmatprep.subr.bf16.mxu0 0
    %2117 = vmatpush1.bf16.msra.mxu0 %v1616
    %2118 = vmatprep.subr.bf16.mxu0 0
    %2119 = vmatpush1.bf16.msra.mxu0 %v1617
    %2120 = vmatprep.subr.bf16.mxu0 0
    %2121 = vmatpush1.bf16.msra.mxu0 %v1618
    %2122 = vmatprep.subr.bf16.mxu0 0
    %2123 = vmatpush1.bf16.msra.mxu0 %v1619
    %2124 = vmatprep.subr.bf16.mxu0 0
    %2125 = vmatpush1.bf16.msra.mxu0 %v1620
    %2126 = vmatprep.subr.bf16.mxu0 0
    %2127 = vmatpush1.bf16.msra.mxu0 %v1621
    %2128 = vmatprep.subr.bf16.mxu0 0
    %2129 = vmatpush1.bf16.msra.mxu0 %v1622
    %2130 = vmatprep.subr.bf16.mxu0 0
    %2131 = vmatpush1.bf16.msra.mxu0 %v1623
    %2132 = vmatprep.subr.bf16.mxu0 0
    %2133 = vmatpush1.bf16.msra.mxu0 %v1624
    %2134 = vmatprep.subr.bf16.mxu0 0
    %2135 = vmatpush1.bf16.msra.mxu0 %v1625
    %2136 = vmatprep.subr.bf16.mxu0 0
    %2137 = vmatpush1.bf16.msra.mxu0 %v1626
    %2138 = vmatprep.subr.bf16.mxu0 0
    %2139 = vmatpush1.bf16.msra.mxu0 %v1627
    %2140 = vmatprep.subr.bf16.mxu0 0
    %2141 = vmatpush1.bf16.msra.mxu0 %v1628
    %2142 = vmatprep.subr.bf16.mxu0 0
    %2143 = vmatpush1.bf16.msra.mxu0 %v1629
    %2144 = vmatprep.subr.bf16.mxu0 0
    %2145 = vmatpush1.bf16.msra.mxu0 %v1630
    %2146 = vmatprep.mubr.bf16.mxu0 %v806
    %2147 = vmatmul.mubr.bf16.gmra.mrb[0].mxu0 %v805
    %v2148 = vpop.f32.mrb[0].mxu0
    %v2149 = vadd.f32 %v2052, %v2148
    %v2150 = vpop.f32.mrb[0].mxu0
    %v2151 = vpop.f32.mrb[0].mxu0
    %v2152 = vadd.f32 %v2055, %v2151
    %v2153 = vpop.f32.mrb[0].mxu0
    %2154 = vmatprep.mubr.bf16.mxu0 %v822
    %2155 = vmatmul.mubr.bf16.gmra.mrb[0].mxu0 %v821
    %v2156 = vpop.f32.mrb[0].mxu0
    %v2157 = vadd.f32 %v2060, %v2156
    %v2158 = vpop.f32.mrb[0].mxu0
    %v2159 = vpop.f32.mrb[0].mxu0
    %v2160 = vadd.f32 %v2063, %v2159
    %v2161 = vpop.f32.mrb[0].mxu0
    %2162 = vmatprep.mubr.bf16.mxu0 %v838
    %2163 = vmatmul.mubr.bf16.gmra.mrb[0].mxu0 %v837
    %v2164 = vpop.f32.mrb[0].mxu0
    %v2165 = vadd.f32 %v2068, %v2164
    %v2166 = vpop.f32.mrb[0].mxu0
    %v2167 = vpop.f32.mrb[0].mxu0
    %v2168 = vadd.f32 %v2071, %v2167
    %v2169 = vpop.f32.mrb[0].mxu0
    %2170 = vmatprep.mubr.bf16.mxu0 %v854
    %2171 = vmatmul.mubr.bf16.gmra.mrb[0].mxu0 %v853
    %v2172 = vpop.f32.mrb[0].mxu0
    %v2173 = vadd.f32 %v2076, %v2172
    %v2174 = vpop.f32.mrb[0].mxu0
    %v2175 = vpop.f32.mrb[0].mxu0
    %v2176 = vadd.f32 %v2079, %v2175
    %v2177 = vpop.f32.mrb[0].mxu0
    %2178 = vmatprep.mubr.bf16.mxu0 %v870
    %2179 = vmatmul.mubr.bf16.gmra.mrb[0].mxu0 %v869
    %v2180 = vpop.f32.mrb[0].mxu0
    %v2181 = vadd.f32 %v2084, %v2180
    %v2182 = vpop.f32.mrb[0].mxu0
    %v2183 = vpop.f32.mrb[0].mxu0
    %v2184 = vadd.f32 %v2087, %v2183
    %v2185 = vpop.f32.mrb[0].mxu0
    %2186 = vmatprep.mubr.bf16.mxu0 %v886
    %2187 = vmatmul.mubr.bf16.gmra.mrb[0].mxu0 %v885
    %v2188 = vpop.f32.mrb[0].mxu0
    %v2189 = vadd.f32 %v2092, %v2188
    %v2190 = vpop.f32.mrb[0].mxu0
    %v2191 = vpop.f32.mrb[0].mxu0
    %v2192 = vadd.f32 %v2095, %v2191
    %v2193 = vpop.f32.mrb[0].mxu0
    %2194 = vmatprep.mubr.bf16.mxu0 %v902
    %2195 = vmatmul.mubr.bf16.gmra.mrb[0].mxu0 %v901
    %v2196 = vpop.f32.mrb[0].mxu0
    %v2197 = vadd.f32 %v2100, %v2196
    %v2198 = vpop.f32.mrb[0].mxu0
    %v2199 = vpop.f32.mrb[0].mxu0
    %v2200 = vadd.f32 %v2103, %v2199
    %v2201 = vpop.f32.mrb[0].mxu0
    %2202 = vmatprep.mubr.bf16.mxu0 %v918
    %2203 = vmatmul.mubr.bf16.gmra.mrb[0].mxu0 %v917
    %v2204 = vpop.f32.mrb[0].mxu0
    %v2205 = vadd.f32 %v2108, %v2204
    %v2206 = vpop.f32.mrb[0].mxu0
    %v2207 = vpop.f32.mrb[0].mxu0
    %v2208 = vadd.f32 %v2111, %v2207
    %v2209 = vpop.f32.mrb[0].mxu0
    %2210 = vdwg.mxu0
    %2211 = vmatprep.subr.bf16.mxu0 0
    %2212 = vmatpush1.bf16.msra.mxu0 %v1631
    %2213 = vmatprep.subr.bf16.mxu0 0
    %2214 = vmatpush1.bf16.msra.mxu0 %v1632
    %2215 = vmatprep.subr.bf16.mxu0 0
    %2216 = vmatpush1.bf16.msra.mxu0 %v1633
    %2217 = vmatprep.subr.bf16.mxu0 0
    %2218 = vmatpush1.bf16.msra.mxu0 %v1634
    %2219 = vmatprep.subr.bf16.mxu0 0
    %2220 = vmatpush1.bf16.msra.mxu0 %v1635
    %2221 = vmatprep.subr.bf16.mxu0 0
    %2222 = vmatpush1.bf16.msra.mxu0 %v1636
    %2223 = vmatprep.subr.bf16.mxu0 0
    %2224 = vmatpush1.bf16.msra.mxu0 %v1637
    %2225 = vmatprep.subr.bf16.mxu0 0
    %2226 = vmatpush1.bf16.msra.mxu0 %v1638
    %2227 = vmatprep.subr.bf16.mxu0 0
    %2228 = vmatpush1.bf16.msra.mxu0 %v1639
    %2229 = vmatprep.subr.bf16.mxu0 0
    %2230 = vmatpush1.bf16.msra.mxu0 %v1640
    %2231 = vmatprep.subr.bf16.mxu0 0
    %2232 = vmatpush1.bf16.msra.mxu0 %v1641
    %2233 = vmatprep.subr.bf16.mxu0 0
    %2234 = vmatpush1.bf16.msra.mxu0 %v1642
    %2235 = vmatprep.subr.bf16.mxu0 0
    %2236 = vmatpush1.bf16.msra.mxu0 %v1643
    %2237 = vmatprep.subr.bf16.mxu0 0
    %2238 = vmatpush1.bf16.msra.mxu0 %v1644
    %2239 = vmatprep.subr.bf16.mxu0 0
    %2240 = vmatpush1.bf16.msra.mxu0 %v1645
    %2241 = vmatprep.subr.bf16.mxu0 0
    %2242 = vmatpush1.bf16.msra.mxu0 %v1646
    %2243 = vmatprep.mubr.bf16.mxu0 %v808
    %2244 = vmatmul.mubr.bf16.gmra.mrb[0].mxu0 %v807
    %v2245 = vpop.f32.mrb[0].mxu0
    %v2246 = vadd.f32 %v2149, %v2245
    %v2247 = vpop.f32.mrb[0].mxu0
    %v2248 = vpop.f32.mrb[0].mxu0
    %v2249 = vadd.f32 %v2152, %v2248
    %v2250 = vpop.f32.mrb[0].mxu0
    %2251 = vmatprep.mubr.bf16.mxu0 %v824
    %2252 = vmatmul.mubr.bf16.gmra.mrb[0].mxu0 %v823
    %v2253 = vpop.f32.mrb[0].mxu0
    %v2254 = vadd.f32 %v2157, %v2253
    %v2255 = vpop.f32.mrb[0].mxu0
    %v2256 = vpop.f32.mrb[0].mxu0
    %v2257 = vadd.f32 %v2160, %v2256
    %v2258 = vpop.f32.mrb[0].mxu0
    %2259 = vmatprep.mubr.bf16.mxu0 %v840
    %2260 = vmatmul.mubr.bf16.gmra.mrb[0].mxu0 %v839
    %v2261 = vpop.f32.mrb[0].mxu0
    %v2262 = vadd.f32 %v2165, %v2261
    %v2263 = vpop.f32.mrb[0].mxu0
    %v2264 = vpop.f32.mrb[0].mxu0
    %v2265 = vadd.f32 %v2168, %v2264
    %v2266 = vpop.f32.mrb[0].mxu0
    %2267 = vmatprep.mubr.bf16.mxu0 %v856
    %2268 = vmatmul.mubr.bf16.gmra.mrb[0].mxu0 %v855
    %v2269 = vpop.f32.mrb[0].mxu0
    %v2270 = vadd.f32 %v2173, %v2269
    %v2271 = vpop.f32.mrb[0].mxu0
    %v2272 = vpop.f32.mrb[0].mxu0
    %v2273 = vadd.f32 %v2176, %v2272
    %v2274 = vpop.f32.mrb[0].mxu0
    %2275 = vmatprep.mubr.bf16.mxu0 %v872
    %2276 = vmatmul.mubr.bf16.gmra.mrb[0].mxu0 %v871
    %v2277 = vpop.f32.mrb[0].mxu0
    %v2278 = vadd.f32 %v2181, %v2277
    %v2279 = vpop.f32.mrb[0].mxu0
    %v2280 = vpop.f32.mrb[0].mxu0
    %v2281 = vadd.f32 %v2184, %v2280
    %v2282 = vpop.f32.mrb[0].mxu0
    %2283 = vmatprep.mubr.bf16.mxu0 %v888
    %2284 = vmatmul.mubr.bf16.gmra.mrb[0].mxu0 %v887
    %v2285 = vpop.f32.mrb[0].mxu0
    %v2286 = vadd.f32 %v2189, %v2285
    %v2287 = vpop.f32.mrb[0].mxu0
    %v2288 = vpop.f32.mrb[0].mxu0
    %v2289 = vadd.f32 %v2192, %v2288
    %v2290 = vpop.f32.mrb[0].mxu0
    %2291 = vmatprep.mubr.bf16.mxu0 %v904
    %2292 = vmatmul.mubr.bf16.gmra.mrb[0].mxu0 %v903
    %v2293 = vpop.f32.mrb[0].mxu0
    %v2294 = vadd.f32 %v2197, %v2293
    %v2295 = vpop.f32.mrb[0].mxu0
    %v2296 = vpop.f32.mrb[0].mxu0
    %v2297 = vadd.f32 %v2200, %v2296
    %v2298 = vpop.f32.mrb[0].mxu0
    %2299 = vmatprep.mubr.bf16.mxu0 %v920
    %2300 = vmatmul.mubr.bf16.gmra.mrb[0].mxu0 %v919
    %v2301 = vpop.f32.mrb[0].mxu0
    %v2302 = vadd.f32 %v2205, %v2301
    %v2303 = vpop.f32.mrb[0].mxu0
    %v2304 = vpop.f32.mrb[0].mxu0
    %v2305 = vadd.f32 %v2208, %v2304
    %v2306 = vpop.f32.mrb[0].mxu0
    %2307 = vdwg.mxu0
    %2308 = vmatprep.subr.bf16.mxu0 0
    %2309 = vmatpush1.bf16.msra.mxu0 %v1647
    %2310 = vmatprep.subr.bf16.mxu0 0
    %2311 = vmatpush1.bf16.msra.mxu0 %v1648
    %2312 = vmatprep.subr.bf16.mxu0 0
    %2313 = vmatpush1.bf16.msra.mxu0 %v1649
    %2314 = vmatprep.subr.bf16.mxu0 0
    %2315 = vmatpush1.bf16.msra.mxu0 %v1650
    %2316 = vmatprep.subr.bf16.mxu0 0
    %2317 = vmatpush1.bf16.msra.mxu0 %v1651
    %2318 = vmatprep.subr.bf16.mxu0 0
    %2319 = vmatpush1.bf16.msra.mxu0 %v1652
    %2320 = vmatprep.subr.bf16.mxu0 0
    %2321 = vmatpush1.bf16.msra.mxu0 %v1653
    %2322 = vmatprep.subr.bf16.mxu0 0
    %2323 = vmatpush1.bf16.msra.mxu0 %v1654
    %2324 = vmatprep.subr.bf16.mxu0 0
    %2325 = vmatpush1.bf16.msra.mxu0 %v1655
    %2326 = vmatprep.subr.bf16.mxu0 0
    %2327 = vmatpush1.bf16.msra.mxu0 %v1656
    %2328 = vmatprep.subr.bf16.mxu0 0
    %2329 = vmatpush1.bf16.msra.mxu0 %v1657
    %2330 = vmatprep.subr.bf16.mxu0 0
    %2331 = vmatpush1.bf16.msra.mxu0 %v1658
    %2332 = vmatprep.subr.bf16.mxu0 0
    %2333 = vmatpush1.bf16.msra.mxu0 %v1659
    %2334 = vmatprep.subr.bf16.mxu0 0
    %2335 = vmatpush1.bf16.msra.mxu0 %v1660
    %2336 = vmatprep.subr.bf16.mxu0 0
    %2337 = vmatpush1.bf16.msra.mxu0 %v1661
    %2338 = vmatprep.subr.bf16.mxu0 0
    %2339 = vmatpush1.bf16.msra.mxu0 %v1662
    %2340 = vmatprep.mubr.bf16.mxu0 %v810
    %2341 = vmatmul.mubr.bf16.gmra.mrb[0].mxu0 %v809
    %v2342 = vpop.f32.mrb[0].mxu0
    %v2343 = vadd.f32 %v2246, %v2342
    %v2344 = vpop.f32.mrb[0].mxu0
    %v2345 = vpop.f32.mrb[0].mxu0
    %v2346 = vadd.f32 %v2249, %v2345
    %v2347 = vpop.f32.mrb[0].mxu0
    %2348 = vmatprep.mubr.bf16.mxu0 %v826
    %2349 = vmatmul.mubr.bf16.gmra.mrb[0].mxu0 %v825
    %v2350 = vpop.f32.mrb[0].mxu0
    %v2351 = vadd.f32 %v2254, %v2350
    %v2352 = vpop.f32.mrb[0].mxu0
    %v2353 = vpop.f32.mrb[0].mxu0
    %v2354 = vadd.f32 %v2257, %v2353
    %v2355 = vpop.f32.mrb[0].mxu0
    %2356 = vmatprep.mubr.bf16.mxu0 %v842
    %2357 = vmatmul.mubr.bf16.gmra.mrb[0].mxu0 %v841
    %v2358 = vpop.f32.mrb[0].mxu0
    %v2359 = vadd.f32 %v2262, %v2358
    %v2360 = vpop.f32.mrb[0].mxu0
    %v2361 = vpop.f32.mrb[0].mxu0
    %v2362 = vadd.f32 %v2265, %v2361
    %v2363 = vpop.f32.mrb[0].mxu0
    %2364 = vmatprep.mubr.bf16.mxu0 %v858
    %2365 = vmatmul.mubr.bf16.gmra.mrb[0].mxu0 %v857
    %v2366 = vpop.f32.mrb[0].mxu0
    %v2367 = vadd.f32 %v2270, %v2366
    %v2368 = vpop.f32.mrb[0].mxu0
    %v2369 = vpop.f32.mrb[0].mxu0
    %v2370 = vadd.f32 %v2273, %v2369
    %v2371 = vpop.f32.mrb[0].mxu0
    %2372 = vmatprep.mubr.bf16.mxu0 %v874
    %2373 = vmatmul.mubr.bf16.gmra.mrb[0].mxu0 %v873
    %v2374 = vpop.f32.mrb[0].mxu0
    %v2375 = vadd.f32 %v2278, %v2374
    %v2376 = vpop.f32.mrb[0].mxu0
    %v2377 = vpop.f32.mrb[0].mxu0
    %v2378 = vadd.f32 %v2281, %v2377
    %v2379 = vpop.f32.mrb[0].mxu0
    %2380 = vmatprep.mubr.bf16.mxu0 %v890
    %2381 = vmatmul.mubr.bf16.gmra.mrb[0].mxu0 %v889
    %v2382 = vpop.f32.mrb[0].mxu0
    %v2383 = vadd.f32 %v2286, %v2382
    %v2384 = vpop.f32.mrb[0].mxu0
    %v2385 = vpop.f32.mrb[0].mxu0
    %v2386 = vadd.f32 %v2289, %v2385
    %v2387 = vpop.f32.mrb[0].mxu0
    %2388 = vmatprep.mubr.bf16.mxu0 %v906
    %2389 = vmatmul.mubr.bf16.gmra.mrb[0].mxu0 %v905
    %v2390 = vpop.f32.mrb[0].mxu0
    %v2391 = vadd.f32 %v2294, %v2390
    %v2392 = vpop.f32.mrb[0].mxu0
    %v2393 = vpop.f32.mrb[0].mxu0
    %v2394 = vadd.f32 %v2297, %v2393
    %v2395 = vpop.f32.mrb[0].mxu0
    %2396 = vmatprep.mubr.bf16.mxu0 %v922
    %2397 = vmatmul.mubr.bf16.gmra.mrb[0].mxu0 %v921
    %v2398 = vpop.f32.mrb[0].mxu0
    %v2399 = vadd.f32 %v2302, %v2398
    %v2400 = vpop.f32.mrb[0].mxu0
    %v2401 = vpop.f32.mrb[0].mxu0
    %v2402 = vadd.f32 %v2305, %v2401
    %v2403 = vpop.f32.mrb[0].mxu0
    %2404 = vdwg.mxu0
    %2405 = vmatprep.subr.bf16.mxu0 0
    %2406 = vmatpush1.bf16.msra.mxu0 %v1663
    %2407 = vmatprep.subr.bf16.mxu0 0
    %2408 = vmatpush1.bf16.msra.mxu0 %v1664
    %2409 = vmatprep.subr.bf16.mxu0 0
    %2410 = vmatpush1.bf16.msra.mxu0 %v1665
    %2411 = vmatprep.subr.bf16.mxu0 0
    %2412 = vmatpush1.bf16.msra.mxu0 %v1666
    %2413 = vmatprep.subr.bf16.mxu0 0
    %2414 = vmatpush1.bf16.msra.mxu0 %v1667
    %2415 = vmatprep.subr.bf16.mxu0 0
    %2416 = vmatpush1.bf16.msra.mxu0 %v1668
    %2417 = vmatprep.subr.bf16.mxu0 0
    %2418 = vmatpush1.bf16.msra.mxu0 %v1669
    %2419 = vmatprep.subr.bf16.mxu0 0
    %2420 = vmatpush1.bf16.msra.mxu0 %v1670
    %2421 = vmatprep.subr.bf16.mxu0 0
    %2422 = vmatpush1.bf16.msra.mxu0 %v1671
    %2423 = vmatprep.subr.bf16.mxu0 0
    %2424 = vmatpush1.bf16.msra.mxu0 %v1672
    %2425 = vmatprep.subr.bf16.mxu0 0
    %2426 = vmatpush1.bf16.msra.mxu0 %v1673
    %2427 = vmatprep.subr.bf16.mxu0 0
    %2428 = vmatpush1.bf16.msra.mxu0 %v1674
    %2429 = vmatprep.subr.bf16.mxu0 0
    %2430 = vmatpush1.bf16.msra.mxu0 %v1675
    %2431 = vmatprep.subr.bf16.mxu0 0
    %2432 = vmatpush1.bf16.msra.mxu0 %v1676
    %2433 = vmatprep.subr.bf16.mxu0 0
    %2434 = vmatpush1.bf16.msra.mxu0 %v1677
    %2435 = vmatprep.subr.bf16.mxu0 0
    %2436 = vmatpush1.bf16.msra.mxu0 %v1678
    %2437 = vmatprep.mubr.bf16.mxu0 %v812
    %2438 = vmatmul.mubr.bf16.gmra.mrb[0].mxu0 %v811
    %v2439 = vpop.f32.mrb[0].mxu0
    %v2440 = vadd.f32 %v2343, %v2439
    %v2441 = vpop.f32.mrb[0].mxu0
    %v2442 = vpop.f32.mrb[0].mxu0
    %v2443 = vadd.f32 %v2346, %v2442
    %v2444 = vpop.f32.mrb[0].mxu0
    %2445 = vmatprep.mubr.bf16.mxu0 %v828
    %2446 = vmatmul.mubr.bf16.gmra.mrb[0].mxu0 %v827
    %v2447 = vpop.f32.mrb[0].mxu0
    %v2448 = vadd.f32 %v2351, %v2447
    %v2449 = vpop.f32.mrb[0].mxu0
    %v2450 = vpop.f32.mrb[0].mxu0
    %v2451 = vadd.f32 %v2354, %v2450
    %v2452 = vpop.f32.mrb[0].mxu0
    %2453 = vmatprep.mubr.bf16.mxu0 %v844
    %2454 = vmatmul.mubr.bf16.gmra.mrb[0].mxu0 %v843
    %v2455 = vpop.f32.mrb[0].mxu0
    %v2456 = vadd.f32 %v2359, %v2455
    %v2457 = vpop.f32.mrb[0].mxu0
    %v2458 = vpop.f32.mrb[0].mxu0
    %v2459 = vadd.f32 %v2362, %v2458
    %v2460 = vpop.f32.mrb[0].mxu0
    %2461 = vmatprep.mubr.bf16.mxu0 %v860
    %2462 = vmatmul.mubr.bf16.gmra.mrb[0].mxu0 %v859
    %v2463 = vpop.f32.mrb[0].mxu0
    %v2464 = vadd.f32 %v2367, %v2463
    %v2465 = vpop.f32.mrb[0].mxu0
    %v2466 = vpop.f32.mrb[0].mxu0
    %v2467 = vadd.f32 %v2370, %v2466
    %v2468 = vpop.f32.mrb[0].mxu0
    %2469 = vmatprep.mubr.bf16.mxu0 %v876
    %2470 = vmatmul.mubr.bf16.gmra.mrb[0].mxu0 %v875
    %v2471 = vpop.f32.mrb[0].mxu0
    %v2472 = vadd.f32 %v2375, %v2471
    %v2473 = vpop.f32.mrb[0].mxu0
    %v2474 = vpop.f32.mrb[0].mxu0
    %v2475 = vadd.f32 %v2378, %v2474
    %v2476 = vpop.f32.mrb[0].mxu0
    %2477 = vmatprep.mubr.bf16.mxu0 %v892
    %2478 = vmatmul.mubr.bf16.gmra.mrb[0].mxu0 %v891
    %v2479 = vpop.f32.mrb[0].mxu0
    %v2480 = vadd.f32 %v2383, %v2479
    %v2481 = vpop.f32.mrb[0].mxu0
    %v2482 = vpop.f32.mrb[0].mxu0
    %v2483 = vadd.f32 %v2386, %v2482
    %v2484 = vpop.f32.mrb[0].mxu0
    %2485 = vmatprep.mubr.bf16.mxu0 %v908
    %2486 = vmatmul.mubr.bf16.gmra.mrb[0].mxu0 %v907
    %v2487 = vpop.f32.mrb[0].mxu0
    %v2488 = vadd.f32 %v2391, %v2487
    %v2489 = vpop.f32.mrb[0].mxu0
    %v2490 = vpop.f32.mrb[0].mxu0
    %v2491 = vadd.f32 %v2394, %v2490
    %v2492 = vpop.f32.mrb[0].mxu0
    %2493 = vmatprep.mubr.bf16.mxu0 %v924
    %2494 = vmatmul.mubr.bf16.gmra.mrb[0].mxu0 %v923
    %v2495 = vpop.f32.mrb[0].mxu0
    %v2496 = vadd.f32 %v2399, %v2495
    %v2497 = vpop.f32.mrb[0].mxu0
    %v2498 = vpop.f32.mrb[0].mxu0
    %v2499 = vadd.f32 %v2402, %v2498
    %v2500 = vpop.f32.mrb[0].mxu0
    %2501 = vdwg.mxu0
    %2502 = vmatprep.subr.bf16.mxu0 0
    %2503 = vmatpush1.bf16.msra.mxu0 %v1679
    %2504 = vmatprep.subr.bf16.mxu0 0
    %2505 = vmatpush1.bf16.msra.mxu0 %v1680
    %2506 = vmatprep.subr.bf16.mxu0 0
    %2507 = vmatpush1.bf16.msra.mxu0 %v1681
    %2508 = vmatprep.subr.bf16.mxu0 0
    %2509 = vmatpush1.bf16.msra.mxu0 %v1682
    %2510 = vmatprep.subr.bf16.mxu0 0
    %2511 = vmatpush1.bf16.msra.mxu0 %v1683
    %2512 = vmatprep.subr.bf16.mxu0 0
    %2513 = vmatpush1.bf16.msra.mxu0 %v1684
    %2514 = vmatprep.subr.bf16.mxu0 0
    %2515 = vmatpush1.bf16.msra.mxu0 %v1685
    %2516 = vmatprep.subr.bf16.mxu0 0
    %2517 = vmatpush1.bf16.msra.mxu0 %v1686
    %2518 = vmatprep.subr.bf16.mxu0 0
    %2519 = vmatpush1.bf16.msra.mxu0 %v1687
    %2520 = vmatprep.subr.bf16.mxu0 0
    %2521 = vmatpush1.bf16.msra.mxu0 %v1688
    %2522 = vmatprep.subr.bf16.mxu0 0
    %2523 = vmatpush1.bf16.msra.mxu0 %v1689
    %2524 = vmatprep.subr.bf16.mxu0 0
    %2525 = vmatpush1.bf16.msra.mxu0 %v1690
    %2526 = vmatprep.subr.bf16.mxu0 0
    %2527 = vmatpush1.bf16.msra.mxu0 %v1691
    %2528 = vmatprep.subr.bf16.mxu0 0
    %2529 = vmatpush1.bf16.msra.mxu0 %v1692
    %2530 = vmatprep.subr.bf16.mxu0 0
    %2531 = vmatpush1.bf16.msra.mxu0 %v1693
    %2532 = vmatprep.subr.bf16.mxu0 0
    %2533 = vmatpush1.bf16.msra.mxu0 %v1694
    %2534 = vmatprep.mubr.bf16.mxu0 %v814
    %2535 = vmatmul.mubr.bf16.gmra.mrb[0].mxu0 %v813
    %v2536 = vpop.f32.mrb[0].mxu0
    %v2537 = vadd.f32 %v2440, %v2536
    %v2538 = vpop.f32.mrb[0].mxu0
    %v2539 = vpop.f32.mrb[0].mxu0
    %v2540 = vadd.f32 %v2443, %v2539
    %v2541 = vpop.f32.mrb[0].mxu0
    %2542 = vmatprep.mubr.bf16.mxu0 %v830
    %2543 = vmatmul.mubr.bf16.gmra.mrb[0].mxu0 %v829
    %v2544 = vpop.f32.mrb[0].mxu0
    %v2545 = vadd.f32 %v2448, %v2544
    %v2546 = vpop.f32.mrb[0].mxu0
    %v2547 = vpop.f32.mrb[0].mxu0
    %v2548 = vadd.f32 %v2451, %v2547
    %v2549 = vpop.f32.mrb[0].mxu0
    %2550 = vmatprep.mubr.bf16.mxu0 %v846
    %2551 = vmatmul.mubr.bf16.gmra.mrb[0].mxu0 %v845
    %v2552 = vpop.f32.mrb[0].mxu0
    %v2553 = vadd.f32 %v2456, %v2552
    %v2554 = vpop.f32.mrb[0].mxu0
    %v2555 = vpop.f32.mrb[0].mxu0
    %v2556 = vadd.f32 %v2459, %v2555
    %v2557 = vpop.f32.mrb[0].mxu0
    %2558 = vmatprep.mubr.bf16.mxu0 %v862
    %2559 = vmatmul.mubr.bf16.gmra.mrb[0].mxu0 %v861
    %v2560 = vpop.f32.mrb[0].mxu0
    %v2561 = vadd.f32 %v2464, %v2560
    %v2562 = vpop.f32.mrb[0].mxu0
    %v2563 = vpop.f32.mrb[0].mxu0
    %v2564 = vadd.f32 %v2467, %v2563
    %v2565 = vpop.f32.mrb[0].mxu0
    %2566 = vmatprep.mubr.bf16.mxu0 %v878
    %2567 = vmatmul.mubr.bf16.gmra.mrb[0].mxu0 %v877
    %v2568 = vpop.f32.mrb[0].mxu0
    %v2569 = vadd.f32 %v2472, %v2568
    %v2570 = vpop.f32.mrb[0].mxu0
    %v2571 = vpop.f32.mrb[0].mxu0
    %v2572 = vadd.f32 %v2475, %v2571
    %v2573 = vpop.f32.mrb[0].mxu0
    %2574 = vmatprep.mubr.bf16.mxu0 %v894
    %2575 = vmatmul.mubr.bf16.gmra.mrb[0].mxu0 %v893
    %v2576 = vpop.f32.mrb[0].mxu0
    %v2577 = vadd.f32 %v2480, %v2576
    %v2578 = vpop.f32.mrb[0].mxu0
    %v2579 = vpop.f32.mrb[0].mxu0
    %v2580 = vadd.f32 %v2483, %v2579
    %v2581 = vpop.f32.mrb[0].mxu0
    %2582 = vmatprep.mubr.bf16.mxu0 %v910
    %2583 = vmatmul.mubr.bf16.gmra.mrb[0].mxu0 %v909
    %v2584 = vpop.f32.mrb[0].mxu0
    %v2585 = vadd.f32 %v2488, %v2584
    %v2586 = vpop.f32.mrb[0].mxu0
    %v2587 = vpop.f32.mrb[0].mxu0
    %v2588 = vadd.f32 %v2491, %v2587
    %v2589 = vpop.f32.mrb[0].mxu0
    %2590 = vmatprep.mubr.bf16.mxu0 %v926
    %2591 = vmatmul.mubr.bf16.gmra.mrb[0].mxu0 %v925
    %v2592 = vpop.f32.mrb[0].mxu0
    %v2593 = vadd.f32 %v2496, %v2592
    %v2594 = vpop.f32.mrb[0].mxu0
    %v2595 = vpop.f32.mrb[0].mxu0
    %v2596 = vadd.f32 %v2499, %v2595
    %v2597 = vpop.f32.mrb[0].mxu0
    %2598 = vdwg.mxu0
    %vm2599 = vcmask 523264
    %v2600 = vsel %vm2599, %v2537, 0.0
    %2601 = vadd.xlane.f32.xlu0 %v2600
    %v2602 = vpop.xlane.xlu0 %2601
    %v2603 = vsel %vm2599, %v2540, 0.0
    %2604 = vadd.xlane.f32.xlu0 %v2603
    %v2605 = vpop.xlane.xlu0 %2604
    %v2606 = vsel %vm2599, %v2545, 0.0
    %2607 = vadd.xlane.f32.xlu0 %v2606
    %v2608 = vpop.xlane.xlu0 %2607
    %v2609 = vsel %vm2599, %v2548, 0.0
    %2610 = vadd.xlane.f32.xlu0 %v2609
    %v2611 = vpop.xlane.xlu0 %2610
    %v2612 = vsel %vm2599, %v2553, 0.0
    %2613 = vadd.xlane.f32.xlu0 %v2612
    %v2614 = vpop.xlane.xlu0 %2613
    %v2615 = vsel %vm2599, %v2556, 0.0
    %2616 = vadd.xlane.f32.xlu0 %v2615
    %v2617 = vpop.xlane.xlu0 %2616
    %v2618 = vsel %vm2599, %v2561, 0.0
    %2619 = vadd.xlane.f32.xlu0 %v2618
    %v2620 = vpop.xlane.xlu0 %2619
    %v2621 = vsel %vm2599, %v2564, 0.0
    %2622 = vadd.xlane.f32.xlu0 %v2621
    %v2623 = vpop.xlane.xlu0 %2622
    %v2624 = vsel %vm2599, %v2569, 0.0
    %2625 = vadd.xlane.f32.xlu0 %v2624
    %v2626 = vpop.xlane.xlu0 %2625
    %v2627 = vsel %vm2599, %v2572, 0.0
    %2628 = vadd.xlane.f32.xlu0 %v2627
    %v2629 = vpop.xlane.xlu0 %2628
    %v2630 = vsel %vm2599, %v2577, 0.0
    %2631 = vadd.xlane.f32.xlu0 %v2630
    %v2632 = vpop.xlane.xlu0 %2631
    %v2633 = vsel %vm2599, %v2580, 0.0
    %2634 = vadd.xlane.f32.xlu0 %v2633
    %v2635 = vpop.xlane.xlu0 %2634
    %v2636 = vsel %vm2599, %v2585, 0.0
    %2637 = vadd.xlane.f32.xlu0 %v2636
    %v2638 = vpop.xlane.xlu0 %2637
    %v2639 = vsel %vm2599, %v2588, 0.0
    %2640 = vadd.xlane.f32.xlu0 %v2639
    %v2641 = vpop.xlane.xlu0 %2640
    %v2642 = vsel %vm2599, %v2593, 0.0
    %2643 = vadd.xlane.f32.xlu0 %v2642
    %v2644 = vpop.xlane.xlu0 %2643
    %v2645 = vsel %vm2599, %v2596, 0.0
    %2646 = vadd.xlane.f32.xlu0 %v2645
    %v2647 = vpop.xlane.xlu0 %2646
    %v2648 = vmul.f32 %v2602, 0.015625
    %v2649 = vmul.f32 %v2605, 0.015625
    %v2650 = vmul.f32 %v2608, 0.015625
    %v2651 = vmul.f32 %v2611, 0.015625
    %v2652 = vmul.f32 %v2614, 0.015625
    %v2653 = vmul.f32 %v2617, 0.015625
    %v2654 = vmul.f32 %v2620, 0.015625
    %v2655 = vmul.f32 %v2623, 0.015625
    %v2656 = vmul.f32 %v2626, 0.015625
    %v2657 = vmul.f32 %v2629, 0.015625
    %v2658 = vmul.f32 %v2632, 0.015625
    %v2659 = vmul.f32 %v2635, 0.015625
    %v2660 = vmul.f32 %v2638, 0.015625
    %v2661 = vmul.f32 %v2641, 0.015625
    %v2662 = vmul.f32 %v2644, 0.015625
    %v2663 = vmul.f32 %v2647, 0.015625
    %vm2664 = vcmask 7168
    %2665 = vst.msk [vmem:[%s4] sm:$0xff] %vm2664, %v2648
    %2666 = vst.msk [vmem:[%s4 + $0x8] sm:$0xff] %vm2664, %v2649
    %2667 = vst.msk [vmem:[%s4 + $0x10] sm:$0xff] %vm2664, %v2650
    %2668 = vst.msk [vmem:[%s4 + $0x18] sm:$0xff] %vm2664, %v2651
    %2669 = vst.msk [vmem:[%s4 + $0x20] sm:$0xff] %vm2664, %v2652
    %2670 = vst.msk [vmem:[%s4 + $0x28] sm:$0xff] %vm2664, %v2653
    %2671 = vst.msk [vmem:[%s4 + $0x30] sm:$0xff] %vm2664, %v2654
    %2672 = vst.msk [vmem:[%s4 + $0x38] sm:$0xff] %vm2664, %v2655
    %2673 = vst.msk [vmem:[%s4 + $0x40] sm:$0xff] %vm2664, %v2656
    %2674 = vst.msk [vmem:[%s4 + $0x48] sm:$0xff] %vm2664, %v2657
    %2675 = vst.msk [vmem:[%s4 + $0x50] sm:$0xff] %vm2664, %v2658
    %2676 = vst.msk [vmem:[%s4 + $0x58] sm:$0xff] %vm2664, %v2659
    %2677 = vst.msk [vmem:[%s4 + $0x60] sm:$0xff] %vm2664, %v2660
    %2678 = vst.msk [vmem:[%s4 + $0x68] sm:$0xff] %vm2664, %v2661
    %2679 = vst.msk [vmem:[%s4 + $0x70] sm:$0xff] %vm2664, %v2662
    %2680 = vst.msk [vmem:[%s4 + $0x78] sm:$0xff] %vm2664, %v2663
    %v2681 = vstv %s22
    %v2682 = vadd.f32 %v2537, %v2681
    %v2684 = vsel %vm2599, %v2682, 0
    %2686 = vmatprep.subr.mxu0 0.0
    %2687 = vmatpush1.msra.mxu0 %v151
    %2688 = vmatprep.subr.mxu0 0.0
    %2689 = vmatpush1.msra.mxu0 %v152
    %2690 = vmatprep.subr.mxu0 0.0
    %2691 = vmatpush1.msra.mxu0 %v153
    %2692 = vmatprep.subr.mxu0 0.0
    %2693 = vmatpush1.msra.mxu0 %v154
    %2694 = vmatprep.subr.mxu0 0.0
    %2695 = vmatpush1.msra.mxu0 %v155
    %2696 = vmatprep.subr.mxu0 0.0
    %2697 = vmatpush1.msra.mxu0 %v156
    %2698 = vmatprep.subr.mxu0 0.0
    %2699 = vmatpush1.msra.mxu0 %v157
    %2700 = vmatprep.subr.mxu0 0.0
    %2701 = vmatpush1.msra.mxu0 %v158
    %2702 = vmatprep.subr.mxu0 0.0
    %2703 = vmatpush1.msra.mxu0 0.0
    %2704 = vmatprep.subr.mxu0 0.0
    %2705 = vmatpush1.msra.mxu0 0.0
    %2706 = vmatprep.subr.mxu0 0.0
    %2707 = vmatpush1.msra.mxu0 0.0
    %2708 = vmatprep.subr.mxu0 0.0
    %2709 = vmatpush1.msra.mxu0 0.0
    %2710 = vmatprep.subr.mxu0 0.0
    %2711 = vmatpush1.msra.mxu0 0.0
    %2712 = vmatprep.subr.mxu0 0.0
    %2713 = vmatpush1.msra.mxu0 0.0
    %2714 = vmatprep.subr.mxu0 0.0
    %2715 = vmatpush1.msra.mxu0 0.0
    %2716 = vmatprep.subr.mxu0 0.0
    %2717 = vmatpush1.msra.mxu0 0.0
    %2718 = vmatprep.subr.mxu0 0.0
    %2719 = vmatpush1.msra.mxu0 0.0
    %2720 = vmatprep.subr.mxu0 0.0
    %2721 = vmatpush1.msra.mxu0 0.0
    %2722 = vmatprep.subr.mxu0 0.0
    %2723 = vmatpush1.msra.mxu0 0.0
    %2724 = vmatprep.subr.mxu0 0.0
    %2725 = vmatpush1.msra.mxu0 0.0
    %2726 = vmatprep.subr.mxu0 0.0
    %2727 = vmatpush1.msra.mxu0 0.0
    %2728 = vmatprep.subr.mxu0 0.0
    %2729 = vmatpush1.msra.mxu0 0.0
    %2730 = vmatprep.subr.mxu0 0.0
    %2731 = vmatpush1.msra.mxu0 0.0
    %2732 = vmatprep.subr.mxu0 0.0
    %2733 = vmatpush1.msra.mxu0 0.0
    %2734 = vmatprep.subr.mxu0 0.0
    %2735 = vmatpush1.msra.mxu0 0.0
    %2736 = vmatprep.subr.mxu0 0.0
    %2737 = vmatpush1.msra.mxu0 0.0
    %2738 = vmatprep.subr.mxu0 0.0
    %2739 = vmatpush1.msra.mxu0 0.0
    %2740 = vmatprep.subr.mxu0 0.0
    %2741 = vmatpush1.msra.mxu0 0.0
    %2742 = vmatprep.subr.mxu0 0.0
    %2743 = vmatpush1.msra.mxu0 0.0
    %2744 = vmatprep.subr.mxu0 0.0
    %2745 = vmatpush1.msra.mxu0 0.0
    %2746 = vmatprep.subr.mxu0 0.0
    %2747 = vmatpush1.msra.mxu0 0.0
    %2748 = vmatprep.subr.mxu0 0.0
    %2749 = vmatpush1.msra.mxu0 0.0
    %2750 = vmatprep.mubr.f32.mxu0 0.0
    %2751 = vmatmul.mubr.f32.gmra.mrb[0].mxu0 %v2684
    %v2752 = vpop.f32.mrb[0].mxu0
    %v2753 = vadd.f32 0.0, %v2752
    %v2754 = vpop.f32.mrb[0].mxu0
    %2755 = vdwg.mxu0
    %v2756 = vtanh.pop %v2753
    %2757 = vst [vmem:[#allocation3] sm:$0x1] %v2756
    %s2758 = scalar_lea.vmem %s0, 1024
    %v2759 = vld [vmem:[%s2758] sm:$0xf]
    %v2760 = vld [vmem:[%s2758 + $0x4] sm:$0xf]
    %v2761 = vld [vmem:[%s2758 + $0x8] sm:$0xf]
    %v2762 = vld [vmem:[%s2758 + $0xc] sm:$0xf]
    %v2763 = vld [vmem:[%s2758 + $0x10] sm:$0xf]
    %v2764 = vld [vmem:[%s2758 + $0x14] sm:$0xf]
    %v2765 = vld [vmem:[%s2758 + $0x18] sm:$0xf]
    %v2766 = vld [vmem:[%s2758 + $0x1c] sm:$0xf]
    %v2767 = vld [vmem:[%s2758 + $0x20] sm:$0xf]
    %v2768 = vld [vmem:[%s2758 + $0x24] sm:$0xf]
    %v2769 = vld [vmem:[%s2758 + $0x28] sm:$0xf]
    %v2770 = vld [vmem:[%s2758 + $0x2c] sm:$0xf]
    %v2771 = vld [vmem:[%s2758 + $0x30] sm:$0xf]
    %v2772 = vld [vmem:[%s2758 + $0x34] sm:$0xf]
    %v2773 = vld [vmem:[%s2758 + $0x38] sm:$0xf]
    %v2774 = vld [vmem:[%s2758 + $0x3c] sm:$0xf]
    %v2775 = vld [vmem:[%s2758 + $0x40] sm:$0xf]
    %v2776 = vld [vmem:[%s2758 + $0x44] sm:$0xf]
    %v2777 = vld [vmem:[%s2758 + $0x48] sm:$0xf]
    %v2778 = vld [vmem:[%s2758 + $0x4c] sm:$0xf]
    %v2779 = vld [vmem:[%s2758 + $0x50] sm:$0xf]
    %v2780 = vld [vmem:[%s2758 + $0x54] sm:$0xf]
    %v2781 = vld [vmem:[%s2758 + $0x58] sm:$0xf]
    %v2782 = vld [vmem:[%s2758 + $0x5c] sm:$0xf]
    %v2783 = vld [vmem:[%s2758 + $0x60] sm:$0xf]
    %v2784 = vld [vmem:[%s2758 + $0x64] sm:$0xf]
    %v2785 = vld [vmem:[%s2758 + $0x68] sm:$0xf]
    %v2786 = vld [vmem:[%s2758 + $0x6c] sm:$0xf]
    %v2787 = vld [vmem:[%s2758 + $0x70] sm:$0xf]
    %v2788 = vld [vmem:[%s2758 + $0x74] sm:$0xf]
    %v2789 = vld [vmem:[%s2758 + $0x78] sm:$0xf]
    %v2790 = vld [vmem:[%s2758 + $0x7c] sm:$0xf]
    %v2791 = vld [vmem:[%s2758 + $0x80] sm:$0xf]
    %v2792 = vld [vmem:[%s2758 + $0x84] sm:$0xf]
    %v2793 = vld [vmem:[%s2758 + $0x88] sm:$0xf]
    %v2794 = vld [vmem:[%s2758 + $0x8c] sm:$0xf]
    %v2795 = vld [vmem:[%s2758 + $0x90] sm:$0xf]
    %v2796 = vld [vmem:[%s2758 + $0x94] sm:$0xf]
    %v2797 = vld [vmem:[%s2758 + $0x98] sm:$0xf]
    %v2798 = vld [vmem:[%s2758 + $0x9c] sm:$0xf]
    %v2799 = vld [vmem:[%s2758 + $0xa0] sm:$0xf]
    %v2800 = vld [vmem:[%s2758 + $0xa4] sm:$0xf]
    %v2801 = vld [vmem:[%s2758 + $0xa8] sm:$0xf]
    %v2802 = vld [vmem:[%s2758 + $0xac] sm:$0xf]
    %v2803 = vld [vmem:[%s2758 + $0xb0] sm:$0xf]
    %v2804 = vld [vmem:[%s2758 + $0xb4] sm:$0xf]
    %v2805 = vld [vmem:[%s2758 + $0xb8] sm:$0xf]
    %v2806 = vld [vmem:[%s2758 + $0xbc] sm:$0xf]
    %v2807 = vld [vmem:[%s2758 + $0xc0] sm:$0xf]
    %v2808 = vld [vmem:[%s2758 + $0xc4] sm:$0xf]
    %v2809 = vld [vmem:[%s2758 + $0xc8] sm:$0xf]
    %v2810 = vld [vmem:[%s2758 + $0xcc] sm:$0xf]
    %v2811 = vld [vmem:[%s2758 + $0xd0] sm:$0xf]
    %v2812 = vld [vmem:[%s2758 + $0xd4] sm:$0xf]
    %v2813 = vld [vmem:[%s2758 + $0xd8] sm:$0xf]
    %v2814 = vld [vmem:[%s2758 + $0xdc] sm:$0xf]
    %v2815 = vld [vmem:[%s2758 + $0xe0] sm:$0xf]
    %v2816 = vld [vmem:[%s2758 + $0xe4] sm:$0xf]
    %v2817 = vld [vmem:[%s2758 + $0xe8] sm:$0xf]
    %v2818 = vld [vmem:[%s2758 + $0xec] sm:$0xf]
    %v2819 = vld [vmem:[%s2758 + $0xf0] sm:$0xf]
    %v2820 = vld [vmem:[%s2758 + $0xf4] sm:$0xf]
    %v2821 = vld [vmem:[%s2758 + $0xf8] sm:$0xf]
    %v2822 = vld [vmem:[%s2758 + $0xfc] sm:$0xf]
    %v2823 = vld [vmem:[%s2758 + $0x100] sm:$0xf]
    %v2824 = vld [vmem:[%s2758 + $0x104] sm:$0xf]
    %v2825 = vld [vmem:[%s2758 + $0x108] sm:$0xf]
    %v2826 = vld [vmem:[%s2758 + $0x10c] sm:$0xf]
    %v2827 = vld [vmem:[%s2758 + $0x110] sm:$0xf]
    %v2828 = vld [vmem:[%s2758 + $0x114] sm:$0xf]
    %v2829 = vld [vmem:[%s2758 + $0x118] sm:$0xf]
    %v2830 = vld [vmem:[%s2758 + $0x11c] sm:$0xf]
    %v2831 = vld [vmem:[%s2758 + $0x120] sm:$0xf]
    %v2832 = vld [vmem:[%s2758 + $0x124] sm:$0xf]
    %v2833 = vld [vmem:[%s2758 + $0x128] sm:$0xf]
    %v2834 = vld [vmem:[%s2758 + $0x12c] sm:$0xf]
    %v2835 = vld [vmem:[%s2758 + $0x130] sm:$0xf]
    %v2836 = vld [vmem:[%s2758 + $0x134] sm:$0xf]
    %v2837 = vld [vmem:[%s2758 + $0x138] sm:$0xf]
    %v2838 = vld [vmem:[%s2758 + $0x13c] sm:$0xf]
    %v2839 = vld [vmem:[%s2758 + $0x140] sm:$0xf]
    %v2840 = vld [vmem:[%s2758 + $0x144] sm:$0xf]
    %v2841 = vld [vmem:[%s2758 + $0x148] sm:$0xf]
    %v2842 = vld [vmem:[%s2758 + $0x14c] sm:$0xf]
    %v2843 = vld [vmem:[%s2758 + $0x150] sm:$0xf]
    %v2844 = vld [vmem:[%s2758 + $0x154] sm:$0xf]
    %v2845 = vld [vmem:[%s2758 + $0x158] sm:$0xf]
    %v2846 = vld [vmem:[%s2758 + $0x15c] sm:$0xf]
    %v2847 = vld [vmem:[%s2758 + $0x160] sm:$0xf]
    %v2848 = vld [vmem:[%s2758 + $0x164] sm:$0xf]
    %v2849 = vld [vmem:[%s2758 + $0x168] sm:$0xf]
    %v2850 = vld [vmem:[%s2758 + $0x16c] sm:$0xf]
    %v2851 = vld [vmem:[%s2758 + $0x170] sm:$0xf]
    %v2852 = vld [vmem:[%s2758 + $0x174] sm:$0xf]
    %v2853 = vld [vmem:[%s2758 + $0x178] sm:$0xf]
    %v2854 = vld [vmem:[%s2758 + $0x17c] sm:$0xf]
    %v2855 = vld [vmem:[%s2758 + $0x180] sm:$0xf]
    %v2856 = vld [vmem:[%s2758 + $0x184] sm:$0xf]
    %v2857 = vld [vmem:[%s2758 + $0x188] sm:$0xf]
    %v2858 = vld [vmem:[%s2758 + $0x18c] sm:$0xf]
    %v2859 = vld [vmem:[%s2758 + $0x190] sm:$0xf]
    %v2860 = vld [vmem:[%s2758 + $0x194] sm:$0xf]
    %v2861 = vld [vmem:[%s2758 + $0x198] sm:$0xf]
    %v2862 = vld [vmem:[%s2758 + $0x19c] sm:$0xf]
    %v2863 = vld [vmem:[%s2758 + $0x1a0] sm:$0xf]
    %v2864 = vld [vmem:[%s2758 + $0x1a4] sm:$0xf]
    %v2865 = vld [vmem:[%s2758 + $0x1a8] sm:$0xf]
    %v2866 = vld [vmem:[%s2758 + $0x1ac] sm:$0xf]
    %v2867 = vld [vmem:[%s2758 + $0x1b0] sm:$0xf]
    %v2868 = vld [vmem:[%s2758 + $0x1b4] sm:$0xf]
    %v2869 = vld [vmem:[%s2758 + $0x1b8] sm:$0xf]
    %v2870 = vld [vmem:[%s2758 + $0x1bc] sm:$0xf]
    %v2871 = vld [vmem:[%s2758 + $0x1c0] sm:$0xf]
    %v2872 = vld [vmem:[%s2758 + $0x1c4] sm:$0xf]
    %v2873 = vld [vmem:[%s2758 + $0x1c8] sm:$0xf]
    %v2874 = vld [vmem:[%s2758 + $0x1cc] sm:$0xf]
    %v2875 = vld [vmem:[%s2758 + $0x1d0] sm:$0xf]
    %v2876 = vld [vmem:[%s2758 + $0x1d4] sm:$0xf]
    %v2877 = vld [vmem:[%s2758 + $0x1d8] sm:$0xf]
    %v2878 = vld [vmem:[%s2758 + $0x1dc] sm:$0xf]
    %v2879 = vld [vmem:[%s2758 + $0x1e0] sm:$0xf]
    %v2880 = vld [vmem:[%s2758 + $0x1e4] sm:$0xf]
    %v2881 = vld [vmem:[%s2758 + $0x1e8] sm:$0xf]
    %v2882 = vld [vmem:[%s2758 + $0x1ec] sm:$0xf]
    %v2883 = vld [vmem:[%s2758 + $0x1f0] sm:$0xf]
    %v2884 = vld [vmem:[%s2758 + $0x1f4] sm:$0xf]
    %v2885 = vld [vmem:[%s2758 + $0x1f8] sm:$0xf]
    %v2886 = vld [vmem:[%s2758 + $0x1fc] sm:$0xf]
    %v2887 = vld [vmem:[%s2758 + $0x200] sm:$0xf]
    %v2888 = vld [vmem:[%s2758 + $0x204] sm:$0xf]
    %v2889 = vld [vmem:[%s2758 + $0x208] sm:$0xf]
    %v2890 = vld [vmem:[%s2758 + $0x20c] sm:$0xf]
    %v2891 = vld [vmem:[%s2758 + $0x210] sm:$0xf]
    %v2892 = vld [vmem:[%s2758 + $0x214] sm:$0xf]
    %v2893 = vld [vmem:[%s2758 + $0x218] sm:$0xf]
    %v2894 = vld [vmem:[%s2758 + $0x21c] sm:$0xf]
    %v2895 = vld [vmem:[%s2758 + $0x220] sm:$0xf]
    %v2896 = vld [vmem:[%s2758 + $0x224] sm:$0xf]
    %v2897 = vld [vmem:[%s2758 + $0x228] sm:$0xf]
    %v2898 = vld [vmem:[%s2758 + $0x22c] sm:$0xf]
    %v2899 = vld [vmem:[%s2758 + $0x230] sm:$0xf]
    %v2900 = vld [vmem:[%s2758 + $0x234] sm:$0xf]
    %v2901 = vld [vmem:[%s2758 + $0x238] sm:$0xf]
    %v2902 = vld [vmem:[%s2758 + $0x23c] sm:$0xf]
    %v2903 = vld [vmem:[%s2758 + $0x240] sm:$0xf]
    %v2904 = vld [vmem:[%s2758 + $0x244] sm:$0xf]
    %v2905 = vld [vmem:[%s2758 + $0x248] sm:$0xf]
    %v2906 = vld [vmem:[%s2758 + $0x24c] sm:$0xf]
    %v2907 = vld [vmem:[%s2758 + $0x250] sm:$0xf]
    %v2908 = vld [vmem:[%s2758 + $0x254] sm:$0xf]
    %v2909 = vld [vmem:[%s2758 + $0x258] sm:$0xf]
    %v2910 = vld [vmem:[%s2758 + $0x25c] sm:$0xf]
    %v2911 = vld [vmem:[%s2758 + $0x260] sm:$0xf]
    %v2912 = vld [vmem:[%s2758 + $0x264] sm:$0xf]
    %v2913 = vld [vmem:[%s2758 + $0x268] sm:$0xf]
    %v2914 = vld [vmem:[%s2758 + $0x26c] sm:$0xf]
    %v2915 = vld [vmem:[%s2758 + $0x270] sm:$0xf]
    %v2916 = vld [vmem:[%s2758 + $0x274] sm:$0xf]
    %v2917 = vld [vmem:[%s2758 + $0x278] sm:$0xf]
    %v2918 = vld [vmem:[%s2758 + $0x27c] sm:$0xf]
    %v2919 = vld [vmem:[%s2758 + $0x280] sm:$0xf]
    %v2920 = vld [vmem:[%s2758 + $0x284] sm:$0xf]
    %v2921 = vld [vmem:[%s2758 + $0x288] sm:$0xf]
    %v2922 = vld [vmem:[%s2758 + $0x28c] sm:$0xf]
    %v2923 = vld [vmem:[%s2758 + $0x290] sm:$0xf]
    %v2924 = vld [vmem:[%s2758 + $0x294] sm:$0xf]
    %v2925 = vld [vmem:[%s2758 + $0x298] sm:$0xf]
    %v2926 = vld [vmem:[%s2758 + $0x29c] sm:$0xf]
    %v2927 = vld [vmem:[%s2758 + $0x2a0] sm:$0xf]
    %v2928 = vld [vmem:[%s2758 + $0x2a4] sm:$0xf]
    %v2929 = vld [vmem:[%s2758 + $0x2a8] sm:$0xf]
    %v2930 = vld [vmem:[%s2758 + $0x2ac] sm:$0xf]
    %v2931 = vld [vmem:[%s2758 + $0x2b0] sm:$0xf]
    %v2932 = vld [vmem:[%s2758 + $0x2b4] sm:$0xf]
    %v2933 = vld [vmem:[%s2758 + $0x2b8] sm:$0xf]
    %v2934 = vld [vmem:[%s2758 + $0x2bc] sm:$0xf]
    %v2935 = vld [vmem:[%s2758 + $0x2c0] sm:$0xf]
    %v2936 = vld [vmem:[%s2758 + $0x2c4] sm:$0xf]
    %v2937 = vld [vmem:[%s2758 + $0x2c8] sm:$0xf]
    %v2938 = vld [vmem:[%s2758 + $0x2cc] sm:$0xf]
    %v2939 = vld [vmem:[%s2758 + $0x2d0] sm:$0xf]
    %v2940 = vld [vmem:[%s2758 + $0x2d4] sm:$0xf]
    %v2941 = vld [vmem:[%s2758 + $0x2d8] sm:$0xf]
    %v2942 = vld [vmem:[%s2758 + $0x2dc] sm:$0xf]
    %v2943 = vld [vmem:[%s2758 + $0x2e0] sm:$0xf]
    %v2944 = vld [vmem:[%s2758 + $0x2e4] sm:$0xf]
    %v2945 = vld [vmem:[%s2758 + $0x2e8] sm:$0xf]
    %v2946 = vld [vmem:[%s2758 + $0x2ec] sm:$0xf]
    %v2947 = vld [vmem:[%s2758 + $0x2f0] sm:$0xf]
    %v2948 = vld [vmem:[%s2758 + $0x2f4] sm:$0xf]
    %v2949 = vld [vmem:[%s2758 + $0x2f8] sm:$0xf]
    %v2950 = vld [vmem:[%s2758 + $0x2fc] sm:$0xf]
    %v2951 = vld [vmem:[%s2758 + $0x300] sm:$0xf]
    %v2952 = vld [vmem:[%s2758 + $0x304] sm:$0xf]
    %v2953 = vld [vmem:[%s2758 + $0x308] sm:$0xf]
    %v2954 = vld [vmem:[%s2758 + $0x30c] sm:$0xf]
    %v2955 = vld [vmem:[%s2758 + $0x310] sm:$0xf]
    %v2956 = vld [vmem:[%s2758 + $0x314] sm:$0xf]
    %v2957 = vld [vmem:[%s2758 + $0x318] sm:$0xf]
    %v2958 = vld [vmem:[%s2758 + $0x31c] sm:$0xf]
    %v2959 = vld [vmem:[%s2758 + $0x320] sm:$0xf]
    %v2960 = vld [vmem:[%s2758 + $0x324] sm:$0xf]
    %v2961 = vld [vmem:[%s2758 + $0x328] sm:$0xf]
    %v2962 = vld [vmem:[%s2758 + $0x32c] sm:$0xf]
    %v2963 = vld [vmem:[%s2758 + $0x330] sm:$0xf]
    %v2964 = vld [vmem:[%s2758 + $0x334] sm:$0xf]
    %v2965 = vld [vmem:[%s2758 + $0x338] sm:$0xf]
    %v2966 = vld [vmem:[%s2758 + $0x33c] sm:$0xf]
    %v2967 = vld [vmem:[%s2758 + $0x340] sm:$0xf]
    %v2968 = vld [vmem:[%s2758 + $0x344] sm:$0xf]
    %v2969 = vld [vmem:[%s2758 + $0x348] sm:$0xf]
    %v2970 = vld [vmem:[%s2758 + $0x34c] sm:$0xf]
    %v2971 = vld [vmem:[%s2758 + $0x350] sm:$0xf]
    %v2972 = vld [vmem:[%s2758 + $0x354] sm:$0xf]
    %v2973 = vld [vmem:[%s2758 + $0x358] sm:$0xf]
    %v2974 = vld [vmem:[%s2758 + $0x35c] sm:$0xf]
    %v2975 = vld [vmem:[%s2758 + $0x360] sm:$0xf]
    %v2976 = vld [vmem:[%s2758 + $0x364] sm:$0xf]
    %v2977 = vld [vmem:[%s2758 + $0x368] sm:$0xf]
    %v2978 = vld [vmem:[%s2758 + $0x36c] sm:$0xf]
    %v2979 = vld [vmem:[%s2758 + $0x370] sm:$0xf]
    %v2980 = vld [vmem:[%s2758 + $0x374] sm:$0xf]
    %v2981 = vld [vmem:[%s2758 + $0x378] sm:$0xf]
    %v2982 = vld [vmem:[%s2758 + $0x37c] sm:$0xf]
    %v2983 = vld [vmem:[%s2758 + $0x380] sm:$0xf]
    %v2984 = vld [vmem:[%s2758 + $0x384] sm:$0xf]
    %v2985 = vld [vmem:[%s2758 + $0x388] sm:$0xf]
    %v2986 = vld [vmem:[%s2758 + $0x38c] sm:$0xf]
    %v2987 = vld [vmem:[%s2758 + $0x390] sm:$0xf]
    %v2988 = vld [vmem:[%s2758 + $0x394] sm:$0xf]
    %v2989 = vld [vmem:[%s2758 + $0x398] sm:$0xf]
    %v2990 = vld [vmem:[%s2758 + $0x39c] sm:$0xf]
    %v2991 = vld [vmem:[%s2758 + $0x3a0] sm:$0xf]
    %v2992 = vld [vmem:[%s2758 + $0x3a4] sm:$0xf]
    %v2993 = vld [vmem:[%s2758 + $0x3a8] sm:$0xf]
    %v2994 = vld [vmem:[%s2758 + $0x3ac] sm:$0xf]
    %v2995 = vld [vmem:[%s2758 + $0x3b0] sm:$0xf]
    %v2996 = vld [vmem:[%s2758 + $0x3b4] sm:$0xf]
    %v2997 = vld [vmem:[%s2758 + $0x3b8] sm:$0xf]
    %v2998 = vld [vmem:[%s2758 + $0x3bc] sm:$0xf]
    %v2999 = vld [vmem:[%s2758 + $0x3c0] sm:$0xf]
    %v3000 = vld [vmem:[%s2758 + $0x3c4] sm:$0xf]
    %v3001 = vld [vmem:[%s2758 + $0x3c8] sm:$0xf]
    %v3002 = vld [vmem:[%s2758 + $0x3cc] sm:$0xf]
    %v3003 = vld [vmem:[%s2758 + $0x3d0] sm:$0xf]
    %v3004 = vld [vmem:[%s2758 + $0x3d4] sm:$0xf]
    %v3005 = vld [vmem:[%s2758 + $0x3d8] sm:$0xf]
    %v3006 = vld [vmem:[%s2758 + $0x3dc] sm:$0xf]
    %v3007 = vld [vmem:[%s2758 + $0x3e0] sm:$0xf]
    %v3008 = vld [vmem:[%s2758 + $0x3e4] sm:$0xf]
    %v3009 = vld [vmem:[%s2758 + $0x3e8] sm:$0xf]
    %v3010 = vld [vmem:[%s2758 + $0x3ec] sm:$0xf]
    %v3011 = vld [vmem:[%s2758 + $0x3f0] sm:$0xf]
    %v3012 = vld [vmem:[%s2758 + $0x3f4] sm:$0xf]
    %v3013 = vld [vmem:[%s2758 + $0x3f8] sm:$0xf]
    %v3014 = vld [vmem:[%s2758 + $0x3fc] sm:$0xf]
    %v3271 = vunpack.c.l.b16 %v2759
    %v3272 = vunpack.c.l.b16 %v2760
    %v3273 = vunpack.c.l.b16 %v2761
    %v3274 = vunpack.c.l.b16 %v2762
    %v3275 = vunpack.c.l.b16 %v2763
    %v3276 = vunpack.c.l.b16 %v2764
    %v3277 = vunpack.c.l.b16 %v2765
    %v3278 = vunpack.c.l.b16 %v2766
    %v3279 = vunpack.c.l.b16 %v2767
    %v3280 = vunpack.c.l.b16 %v2768
    %v3281 = vunpack.c.l.b16 %v2769
    %v3282 = vunpack.c.l.b16 %v2770
    %v3283 = vunpack.c.l.b16 %v2771
    %v3284 = vunpack.c.l.b16 %v2772
    %v3285 = vunpack.c.l.b16 %v2773
    %v3286 = vunpack.c.l.b16 %v2774
    %v3287 = vunpack.c.l.b16 %v2775
    %v3288 = vunpack.c.l.b16 %v2776
    %v3289 = vunpack.c.l.b16 %v2777
    %v3290 = vunpack.c.l.b16 %v2778
    %v3291 = vunpack.c.l.b16 %v2779
    %v3292 = vunpack.c.l.b16 %v2780
    %v3293 = vunpack.c.l.b16 %v2781
    %v3294 = vunpack.c.l.b16 %v2782
    %v3295 = vunpack.c.l.b16 %v2783
    %v3296 = vunpack.c.l.b16 %v2784
    %v3297 = vunpack.c.l.b16 %v2785
    %v3298 = vunpack.c.l.b16 %v2786
    %v3299 = vunpack.c.l.b16 %v2787
    %v3300 = vunpack.c.l.b16 %v2788
    %v3301 = vunpack.c.l.b16 %v2789
    %v3302 = vunpack.c.l.b16 %v2790
    %v3303 = vunpack.c.l.b16 %v2791
    %v3304 = vunpack.c.l.b16 %v2792
    %v3305 = vunpack.c.l.b16 %v2793
    %v3306 = vunpack.c.l.b16 %v2794
    %v3307 = vunpack.c.l.b16 %v2795
    %v3308 = vunpack.c.l.b16 %v2796
    %v3309 = vunpack.c.l.b16 %v2797
    %v3310 = vunpack.c.l.b16 %v2798
    %v3311 = vunpack.c.l.b16 %v2799
    %v3312 = vunpack.c.l.b16 %v2800
    %v3313 = vunpack.c.l.b16 %v2801
    %v3314 = vunpack.c.l.b16 %v2802
    %v3315 = vunpack.c.l.b16 %v2803
    %v3316 = vunpack.c.l.b16 %v2804
    %v3317 = vunpack.c.l.b16 %v2805
    %v3318 = vunpack.c.l.b16 %v2806
    %v3319 = vunpack.c.l.b16 %v2807
    %v3320 = vunpack.c.l.b16 %v2808
    %v3321 = vunpack.c.l.b16 %v2809
    %v3322 = vunpack.c.l.b16 %v2810
    %v3323 = vunpack.c.l.b16 %v2811
    %v3324 = vunpack.c.l.b16 %v2812
    %v3325 = vunpack.c.l.b16 %v2813
    %v3326 = vunpack.c.l.b16 %v2814
    %v3327 = vunpack.c.l.b16 %v2815
    %v3328 = vunpack.c.l.b16 %v2816
    %v3329 = vunpack.c.l.b16 %v2817
    %v3330 = vunpack.c.l.b16 %v2818
    %v3331 = vunpack.c.l.b16 %v2819
    %v3332 = vunpack.c.l.b16 %v2820
    %v3333 = vunpack.c.l.b16 %v2821
    %v3334 = vunpack.c.l.b16 %v2822
    %v3335 = vunpack.c.l.b16 %v2823
    %v3336 = vunpack.c.l.b16 %v2824
    %v3337 = vunpack.c.l.b16 %v2825
    %v3338 = vunpack.c.l.b16 %v2826
    %v3339 = vunpack.c.l.b16 %v2827
    %v3340 = vunpack.c.l.b16 %v2828
    %v3341 = vunpack.c.l.b16 %v2829
    %v3342 = vunpack.c.l.b16 %v2830
    %v3343 = vunpack.c.l.b16 %v2831
    %v3344 = vunpack.c.l.b16 %v2832
    %v3345 = vunpack.c.l.b16 %v2833
    %v3346 = vunpack.c.l.b16 %v2834
    %v3347 = vunpack.c.l.b16 %v2835
    %v3348 = vunpack.c.l.b16 %v2836
    %v3349 = vunpack.c.l.b16 %v2837
    %v3350 = vunpack.c.l.b16 %v2838
    %v3351 = vunpack.c.l.b16 %v2839
    %v3352 = vunpack.c.l.b16 %v2840
    %v3353 = vunpack.c.l.b16 %v2841
    %v3354 = vunpack.c.l.b16 %v2842
    %v3355 = vunpack.c.l.b16 %v2843
    %v3356 = vunpack.c.l.b16 %v2844
    %v3357 = vunpack.c.l.b16 %v2845
    %v3358 = vunpack.c.l.b16 %v2846
    %v3359 = vunpack.c.l.b16 %v2847
    %v3360 = vunpack.c.l.b16 %v2848
    %v3361 = vunpack.c.l.b16 %v2849
    %v3362 = vunpack.c.l.b16 %v2850
    %v3363 = vunpack.c.l.b16 %v2851
    %v3364 = vunpack.c.l.b16 %v2852
    %v3365 = vunpack.c.l.b16 %v2853
    %v3366 = vunpack.c.l.b16 %v2854
    %v3367 = vunpack.c.l.b16 %v2855
    %v3368 = vunpack.c.l.b16 %v2856
    %v3369 = vunpack.c.l.b16 %v2857
    %v3370 = vunpack.c.l.b16 %v2858
    %v3371 = vunpack.c.l.b16 %v2859
    %v3372 = vunpack.c.l.b16 %v2860
    %v3373 = vunpack.c.l.b16 %v2861
    %v3374 = vunpack.c.l.b16 %v2862
    %v3375 = vunpack.c.l.b16 %v2863
    %v3376 = vunpack.c.l.b16 %v2864
    %v3377 = vunpack.c.l.b16 %v2865
    %v3378 = vunpack.c.l.b16 %v2866
    %v3379 = vunpack.c.l.b16 %v2867
    %v3380 = vunpack.c.l.b16 %v2868
    %v3381 = vunpack.c.l.b16 %v2869
    %v3382 = vunpack.c.l.b16 %v2870
    %v3383 = vunpack.c.l.b16 %v2871
    %v3384 = vunpack.c.l.b16 %v2872
    %v3385 = vunpack.c.l.b16 %v2873
    %v3386 = vunpack.c.l.b16 %v2874
    %v3387 = vunpack.c.l.b16 %v2875
    %v3388 = vunpack.c.l.b16 %v2876
    %v3389 = vunpack.c.l.b16 %v2877
    %v3390 = vunpack.c.l.b16 %v2878
    %v3391 = vunpack.c.l.b16 %v2879
    %v3392 = vunpack.c.l.b16 %v2880
    %v3393 = vunpack.c.l.b16 %v2881
    %v3394 = vunpack.c.l.b16 %v2882
    %v3395 = vunpack.c.l.b16 %v2883
    %v3396 = vunpack.c.l.b16 %v2884
    %v3397 = vunpack.c.l.b16 %v2885
    %v3398 = vunpack.c.l.b16 %v2886
    %v3399 = vunpack.c.l.b16 %v2887
    %v3400 = vunpack.c.l.b16 %v2888
    %v3401 = vunpack.c.l.b16 %v2889
    %v3402 = vunpack.c.l.b16 %v2890
    %v3403 = vunpack.c.l.b16 %v2891
    %v3404 = vunpack.c.l.b16 %v2892
    %v3405 = vunpack.c.l.b16 %v2893
    %v3406 = vunpack.c.l.b16 %v2894
    %v3407 = vunpack.c.l.b16 %v2895
    %v3408 = vunpack.c.l.b16 %v2896
    %v3409 = vunpack.c.l.b16 %v2897
    %v3410 = vunpack.c.l.b16 %v2898
    %v3411 = vunpack.c.l.b16 %v2899
    %v3412 = vunpack.c.l.b16 %v2900
    %v3413 = vunpack.c.l.b16 %v2901
    %v3414 = vunpack.c.l.b16 %v2902
    %v3415 = vunpack.c.l.b16 %v2903
    %v3416 = vunpack.c.l.b16 %v2904
    %v3417 = vunpack.c.l.b16 %v2905
    %v3418 = vunpack.c.l.b16 %v2906
    %v3419 = vunpack.c.l.b16 %v2907
    %v3420 = vunpack.c.l.b16 %v2908
    %v3421 = vunpack.c.l.b16 %v2909
    %v3422 = vunpack.c.l.b16 %v2910
    %v3423 = vunpack.c.l.b16 %v2911
    %v3424 = vunpack.c.l.b16 %v2912
    %v3425 = vunpack.c.l.b16 %v2913
    %v3426 = vunpack.c.l.b16 %v2914
    %v3427 = vunpack.c.l.b16 %v2915
    %v3428 = vunpack.c.l.b16 %v2916
    %v3429 = vunpack.c.l.b16 %v2917
    %v3430 = vunpack.c.l.b16 %v2918
    %v3431 = vunpack.c.l.b16 %v2919
    %v3432 = vunpack.c.l.b16 %v2920
    %v3433 = vunpack.c.l.b16 %v2921
    %v3434 = vunpack.c.l.b16 %v2922
    %v3435 = vunpack.c.l.b16 %v2923
    %v3436 = vunpack.c.l.b16 %v2924
    %v3437 = vunpack.c.l.b16 %v2925
    %v3438 = vunpack.c.l.b16 %v2926
    %v3439 = vunpack.c.l.b16 %v2927
    %v3440 = vunpack.c.l.b16 %v2928
    %v3441 = vunpack.c.l.b16 %v2929
    %v3442 = vunpack.c.l.b16 %v2930
    %v3443 = vunpack.c.l.b16 %v2931
    %v3444 = vunpack.c.l.b16 %v2932
    %v3445 = vunpack.c.l.b16 %v2933
    %v3446 = vunpack.c.l.b16 %v2934
    %v3447 = vunpack.c.l.b16 %v2935
    %v3448 = vunpack.c.l.b16 %v2936
    %v3449 = vunpack.c.l.b16 %v2937
    %v3450 = vunpack.c.l.b16 %v2938
    %v3451 = vunpack.c.l.b16 %v2939
    %v3452 = vunpack.c.l.b16 %v2940
    %v3453 = vunpack.c.l.b16 %v2941
    %v3454 = vunpack.c.l.b16 %v2942
    %v3455 = vunpack.c.l.b16 %v2943
    %v3456 = vunpack.c.l.b16 %v2944
    %v3457 = vunpack.c.l.b16 %v2945
    %v3458 = vunpack.c.l.b16 %v2946
    %v3459 = vunpack.c.l.b16 %v2947
    %v3460 = vunpack.c.l.b16 %v2948
    %v3461 = vunpack.c.l.b16 %v2949
    %v3462 = vunpack.c.l.b16 %v2950
    %v3463 = vunpack.c.l.b16 %v2951
    %v3464 = vunpack.c.l.b16 %v2952
    %v3465 = vunpack.c.l.b16 %v2953
    %v3466 = vunpack.c.l.b16 %v2954
    %v3467 = vunpack.c.l.b16 %v2955
    %v3468 = vunpack.c.l.b16 %v2956
    %v3469 = vunpack.c.l.b16 %v2957
    %v3470 = vunpack.c.l.b16 %v2958
    %v3471 = vunpack.c.l.b16 %v2959
    %v3472 = vunpack.c.l.b16 %v2960
    %v3473 = vunpack.c.l.b16 %v2961
    %v3474 = vunpack.c.l.b16 %v2962
    %v3475 = vunpack.c.l.b16 %v2963
    %v3476 = vunpack.c.l.b16 %v2964
    %v3477 = vunpack.c.l.b16 %v2965
    %v3478 = vunpack.c.l.b16 %v2966
    %v3479 = vunpack.c.l.b16 %v2967
    %v3480 = vunpack.c.l.b16 %v2968
    %v3481 = vunpack.c.l.b16 %v2969
    %v3482 = vunpack.c.l.b16 %v2970
    %v3483 = vunpack.c.l.b16 %v2971
    %v3484 = vunpack.c.l.b16 %v2972
    %v3485 = vunpack.c.l.b16 %v2973
    %v3486 = vunpack.c.l.b16 %v2974
    %v3487 = vunpack.c.l.b16 %v2975
    %v3488 = vunpack.c.l.b16 %v2976
    %v3489 = vunpack.c.l.b16 %v2977
    %v3490 = vunpack.c.l.b16 %v2978
    %v3491 = vunpack.c.l.b16 %v2979
    %v3492 = vunpack.c.l.b16 %v2980
    %v3493 = vunpack.c.l.b16 %v2981
    %v3494 = vunpack.c.l.b16 %v2982
    %v3495 = vunpack.c.l.b16 %v2983
    %v3496 = vunpack.c.l.b16 %v2984
    %v3497 = vunpack.c.l.b16 %v2985
    %v3498 = vunpack.c.l.b16 %v2986
    %v3499 = vunpack.c.l.b16 %v2987
    %v3500 = vunpack.c.l.b16 %v2988
    %v3501 = vunpack.c.l.b16 %v2989
    %v3502 = vunpack.c.l.b16 %v2990
    %v3503 = vunpack.c.l.b16 %v2991
    %v3504 = vunpack.c.l.b16 %v2992
    %v3505 = vunpack.c.l.b16 %v2993
    %v3506 = vunpack.c.l.b16 %v2994
    %v3507 = vunpack.c.l.b16 %v2995
    %v3508 = vunpack.c.l.b16 %v2996
    %v3509 = vunpack.c.l.b16 %v2997
    %v3510 = vunpack.c.l.b16 %v2998
    %v3511 = vunpack.c.l.b16 %v2999
    %v3512 = vunpack.c.l.b16 %v3000
    %v3513 = vunpack.c.l.b16 %v3001
    %v3514 = vunpack.c.l.b16 %v3002
    %v3515 = vunpack.c.l.b16 %v3003
    %v3516 = vunpack.c.l.b16 %v3004
    %v3517 = vunpack.c.l.b16 %v3005
    %v3518 = vunpack.c.l.b16 %v3006
    %v3519 = vunpack.c.l.b16 %v3007
    %v3520 = vunpack.c.l.b16 %v3008
    %v3521 = vunpack.c.l.b16 %v3009
    %v3522 = vunpack.c.l.b16 %v3010
    %v3523 = vunpack.c.l.b16 %v3011
    %v3524 = vunpack.c.l.b16 %v3012
    %v3525 = vunpack.c.l.b16 %v3013
    %v3526 = vunpack.c.l.b16 %v3014
    %v3527 = vpack.c.b16 %v3272, %v3271
    %v3528 = vpack.c.b16 %v3274, %v3273
    %v3529 = vpack.c.b16 %v3276, %v3275
    %v3530 = vpack.c.b16 %v3278, %v3277
    %v3531 = vpack.c.b16 %v3280, %v3279
    %v3532 = vpack.c.b16 %v3282, %v3281
    %v3533 = vpack.c.b16 %v3284, %v3283
    %v3534 = vpack.c.b16 %v3286, %v3285
    %v3535 = vpack.c.b16 %v3288, %v3287
    %v3536 = vpack.c.b16 %v3290, %v3289
    %v3537 = vpack.c.b16 %v3292, %v3291
    %v3538 = vpack.c.b16 %v3294, %v3293
    %v3539 = vpack.c.b16 %v3296, %v3295
    %v3540 = vpack.c.b16 %v3298, %v3297
    %v3541 = vpack.c.b16 %v3300, %v3299
    %v3542 = vpack.c.b16 %v3302, %v3301
    %v3543 = vpack.c.b16 %v3304, %v3303
    %v3544 = vpack.c.b16 %v3306, %v3305
    %v3545 = vpack.c.b16 %v3308, %v3307
    %v3546 = vpack.c.b16 %v3310, %v3309
    %v3547 = vpack.c.b16 %v3312, %v3311
    %v3548 = vpack.c.b16 %v3314, %v3313
    %v3549 = vpack.c.b16 %v3316, %v3315
    %v3550 = vpack.c.b16 %v3318, %v3317
    %v3551 = vpack.c.b16 %v3320, %v3319
    %v3552 = vpack.c.b16 %v3322, %v3321
    %v3553 = vpack.c.b16 %v3324, %v3323
    %v3554 = vpack.c.b16 %v3326, %v3325
    %v3555 = vpack.c.b16 %v3328, %v3327
    %v3556 = vpack.c.b16 %v3330, %v3329
    %v3557 = vpack.c.b16 %v3332, %v3331
    %v3558 = vpack.c.b16 %v3334, %v3333
    %v3559 = vpack.c.b16 %v3336, %v3335
    %v3560 = vpack.c.b16 %v3338, %v3337
    %v3561 = vpack.c.b16 %v3340, %v3339
    %v3562 = vpack.c.b16 %v3342, %v3341
    %v3563 = vpack.c.b16 %v3344, %v3343
    %v3564 = vpack.c.b16 %v3346, %v3345
    %v3565 = vpack.c.b16 %v3348, %v3347
    %v3566 = vpack.c.b16 %v3350, %v3349
    %v3567 = vpack.c.b16 %v3352, %v3351
    %v3568 = vpack.c.b16 %v3354, %v3353
    %v3569 = vpack.c.b16 %v3356, %v3355
    %v3570 = vpack.c.b16 %v3358, %v3357
    %v3571 = vpack.c.b16 %v3360, %v3359
    %v3572 = vpack.c.b16 %v3362, %v3361
    %v3573 = vpack.c.b16 %v3364, %v3363
    %v3574 = vpack.c.b16 %v3366, %v3365
    %v3575 = vpack.c.b16 %v3368, %v3367
    %v3576 = vpack.c.b16 %v3370, %v3369
    %v3577 = vpack.c.b16 %v3372, %v3371
    %v3578 = vpack.c.b16 %v3374, %v3373
    %v3579 = vpack.c.b16 %v3376, %v3375
    %v3580 = vpack.c.b16 %v3378, %v3377
    %v3581 = vpack.c.b16 %v3380, %v3379
    %v3582 = vpack.c.b16 %v3382, %v3381
    %v3583 = vpack.c.b16 %v3384, %v3383
    %v3584 = vpack.c.b16 %v3386, %v3385
    %v3585 = vpack.c.b16 %v3388, %v3387
    %v3586 = vpack.c.b16 %v3390, %v3389
    %v3587 = vpack.c.b16 %v3392, %v3391
    %v3588 = vpack.c.b16 %v3394, %v3393
    %v3589 = vpack.c.b16 %v3396, %v3395
    %v3590 = vpack.c.b16 %v3398, %v3397
    %v3591 = vpack.c.b16 %v3400, %v3399
    %v3592 = vpack.c.b16 %v3402, %v3401
    %v3593 = vpack.c.b16 %v3404, %v3403
    %v3594 = vpack.c.b16 %v3406, %v3405
    %v3595 = vpack.c.b16 %v3408, %v3407
    %v3596 = vpack.c.b16 %v3410, %v3409
    %v3597 = vpack.c.b16 %v3412, %v3411
    %v3598 = vpack.c.b16 %v3414, %v3413
    %v3599 = vpack.c.b16 %v3416, %v3415
    %v3600 = vpack.c.b16 %v3418, %v3417
    %v3601 = vpack.c.b16 %v3420, %v3419
    %v3602 = vpack.c.b16 %v3422, %v3421
    %v3603 = vpack.c.b16 %v3424, %v3423
    %v3604 = vpack.c.b16 %v3426, %v3425
    %v3605 = vpack.c.b16 %v3428, %v3427
    %v3606 = vpack.c.b16 %v3430, %v3429
    %v3607 = vpack.c.b16 %v3432, %v3431
    %v3608 = vpack.c.b16 %v3434, %v3433
    %v3609 = vpack.c.b16 %v3436, %v3435
    %v3610 = vpack.c.b16 %v3438, %v3437
    %v3611 = vpack.c.b16 %v3440, %v3439
    %v3612 = vpack.c.b16 %v3442, %v3441
    %v3613 = vpack.c.b16 %v3444, %v3443
    %v3614 = vpack.c.b16 %v3446, %v3445
    %v3615 = vpack.c.b16 %v3448, %v3447
    %v3616 = vpack.c.b16 %v3450, %v3449
    %v3617 = vpack.c.b16 %v3452, %v3451
    %v3618 = vpack.c.b16 %v3454, %v3453
    %v3619 = vpack.c.b16 %v3456, %v3455
    %v3620 = vpack.c.b16 %v3458, %v3457
    %v3621 = vpack.c.b16 %v3460, %v3459
    %v3622 = vpack.c.b16 %v3462, %v3461
    %v3623 = vpack.c.b16 %v3464, %v3463
    %v3624 = vpack.c.b16 %v3466, %v3465
    %v3625 = vpack.c.b16 %v3468, %v3467
    %v3626 = vpack.c.b16 %v3470, %v3469
    %v3627 = vpack.c.b16 %v3472, %v3471
    %v3628 = vpack.c.b16 %v3474, %v3473
    %v3629 = vpack.c.b16 %v3476, %v3475
    %v3630 = vpack.c.b16 %v3478, %v3477
    %v3631 = vpack.c.b16 %v3480, %v3479
    %v3632 = vpack.c.b16 %v3482, %v3481
    %v3633 = vpack.c.b16 %v3484, %v3483
    %v3634 = vpack.c.b16 %v3486, %v3485
    %v3635 = vpack.c.b16 %v3488, %v3487
    %v3636 = vpack.c.b16 %v3490, %v3489
    %v3637 = vpack.c.b16 %v3492, %v3491
    %v3638 = vpack.c.b16 %v3494, %v3493
    %v3639 = vpack.c.b16 %v3496, %v3495
    %v3640 = vpack.c.b16 %v3498, %v3497
    %v3641 = vpack.c.b16 %v3500, %v3499
    %v3642 = vpack.c.b16 %v3502, %v3501
    %v3643 = vpack.c.b16 %v3504, %v3503
    %v3644 = vpack.c.b16 %v3506, %v3505
    %v3645 = vpack.c.b16 %v3508, %v3507
    %v3646 = vpack.c.b16 %v3510, %v3509
    %v3647 = vpack.c.b16 %v3512, %v3511
    %v3648 = vpack.c.b16 %v3514, %v3513
    %v3649 = vpack.c.b16 %v3516, %v3515
    %v3650 = vpack.c.b16 %v3518, %v3517
    %v3651 = vpack.c.b16 %v3520, %v3519
    %v3652 = vpack.c.b16 %v3522, %v3521
    %v3653 = vpack.c.b16 %v3524, %v3523
    %v3654 = vpack.c.b16 %v3526, %v3525
    %3783 = vmatprep.subr.bf16.mxu0 0
    %3784 = vmatpush1.bf16.msra.mxu0 %v3527
    %3785 = vmatprep.subr.bf16.mxu0 0
    %3786 = vmatpush1.bf16.msra.mxu0 %v3528
    %3787 = vmatprep.subr.bf16.mxu0 0
    %3788 = vmatpush1.bf16.msra.mxu0 %v3529
    %3789 = vmatprep.subr.bf16.mxu0 0
    %3790 = vmatpush1.bf16.msra.mxu0 %v3530
    %3791 = vmatprep.subr.bf16.mxu0 0
    %3792 = vmatpush1.bf16.msra.mxu0 %v3531
    %3793 = vmatprep.subr.bf16.mxu0 0
    %3794 = vmatpush1.bf16.msra.mxu0 %v3532
    %3795 = vmatprep.subr.bf16.mxu0 0
    %3796 = vmatpush1.bf16.msra.mxu0 %v3533
    %3797 = vmatprep.subr.bf16.mxu0 0
    %3798 = vmatpush1.bf16.msra.mxu0 %v3534
    %3799 = vmatprep.subr.bf16.mxu0 0
    %3800 = vmatpush1.bf16.msra.mxu0 %v3535
    %3801 = vmatprep.subr.bf16.mxu0 0
    %3802 = vmatpush1.bf16.msra.mxu0 %v3536
    %3803 = vmatprep.subr.bf16.mxu0 0
    %3804 = vmatpush1.bf16.msra.mxu0 %v3537
    %3805 = vmatprep.subr.bf16.mxu0 0
    %3806 = vmatpush1.bf16.msra.mxu0 %v3538
    %3807 = vmatprep.subr.bf16.mxu0 0
    %3808 = vmatpush1.bf16.msra.mxu0 %v3539
    %3809 = vmatprep.subr.bf16.mxu0 0
    %3810 = vmatpush1.bf16.msra.mxu0 %v3540
    %3811 = vmatprep.subr.bf16.mxu0 0
    %3812 = vmatpush1.bf16.msra.mxu0 %v3541
    %3813 = vmatprep.subr.bf16.mxu0 0
    %3814 = vmatpush1.bf16.msra.mxu0 %v3542
    %3815 = vmatprep.mubr.bf16.mxu0 %v800
    %3816 = vmatmul.mubr.bf16.gmra.mrb[0].mxu0 %v799
    %v3817 = vpop.f32.mrb[0].mxu0
    %v3818 = vadd.f32 0.0, %v3817
    %v3819 = vpop.f32.mrb[0].mxu0
    %v3820 = vpop.f32.mrb[0].mxu0
    %v3821 = vadd.f32 0.0, %v3820
    %v3822 = vpop.f32.mrb[0].mxu0
    %3823 = vmatprep.mubr.bf16.mxu0 %v816
    %3824 = vmatmul.mubr.bf16.gmra.mrb[0].mxu0 %v815
    %v3825 = vpop.f32.mrb[0].mxu0
    %v3826 = vadd.f32 0.0, %v3825
    %v3827 = vpop.f32.mrb[0].mxu0
    %v3828 = vpop.f32.mrb[0].mxu0
    %v3829 = vadd.f32 0.0, %v3828
    %v3830 = vpop.f32.mrb[0].mxu0
    %3831 = vmatprep.mubr.bf16.mxu0 %v832
    %3832 = vmatmul.mubr.bf16.gmra.mrb[0].mxu0 %v831
    %v3833 = vpop.f32.mrb[0].mxu0
    %v3834 = vadd.f32 0.0, %v3833
    %v3835 = vpop.f32.mrb[0].mxu0
    %v3836 = vpop.f32.mrb[0].mxu0
    %v3837 = vadd.f32 0.0, %v3836
    %v3838 = vpop.f32.mrb[0].mxu0
    %3839 = vmatprep.mubr.bf16.mxu0 %v848
    %3840 = vmatmul.mubr.bf16.gmra.mrb[0].mxu0 %v847
    %v3841 = vpop.f32.mrb[0].mxu0
    %v3842 = vadd.f32 0.0, %v3841
    %v3843 = vpop.f32.mrb[0].mxu0
    %v3844 = vpop.f32.mrb[0].mxu0
    %v3845 = vadd.f32 0.0, %v3844
    %v3846 = vpop.f32.mrb[0].mxu0
    %3847 = vmatprep.mubr.bf16.mxu0 %v864
    %3848 = vmatmul.mubr.bf16.gmra.mrb[0].mxu0 %v863
    %v3849 = vpop.f32.mrb[0].mxu0
    %v3850 = vadd.f32 0.0, %v3849
    %v3851 = vpop.f32.mrb[0].mxu0
    %v3852 = vpop.f32.mrb[0].mxu0
    %v3853 = vadd.f32 0.0, %v3852
    %v3854 = vpop.f32.mrb[0].mxu0
    %3855 = vmatprep.mubr.bf16.mxu0 %v880
    %3856 = vmatmul.mubr.bf16.gmra.mrb[0].mxu0 %v879
    %v3857 = vpop.f32.mrb[0].mxu0
    %v3858 = vadd.f32 0.0, %v3857
    %v3859 = vpop.f32.mrb[0].mxu0
    %v3860 = vpop.f32.mrb[0].mxu0
    %v3861 = vadd.f32 0.0, %v3860
    %v3862 = vpop.f32.mrb[0].mxu0
    %3863 = vmatprep.mubr.bf16.mxu0 %v896
    %3864 = vmatmul.mubr.bf16.gmra.mrb[0].mxu0 %v895
    %v3865 = vpop.f32.mrb[0].mxu0
    %v3866 = vadd.f32 0.0, %v3865
    %v3867 = vpop.f32.mrb[0].mxu0
    %v3868 = vpop.f32.mrb[0].mxu0
    %v3869 = vadd.f32 0.0, %v3868
    %v3870 = vpop.f32.mrb[0].mxu0
    %3871 = vmatprep.mubr.bf16.mxu0 %v912
    %3872 = vmatmul.mubr.bf16.gmra.mrb[0].mxu0 %v911
    %v3873 = vpop.f32.mrb[0].mxu0
    %v3874 = vadd.f32 0.0, %v3873
    %v3875 = vpop.f32.mrb[0].mxu0
    %v3876 = vpop.f32.mrb[0].mxu0
    %v3877 = vadd.f32 0.0, %v3876
    %v3878 = vpop.f32.mrb[0].mxu0
    %3879 = vdwg.mxu0
    %3880 = vmatprep.subr.bf16.mxu0 0
    %3881 = vmatpush1.bf16.msra.mxu0 %v3543
    %3882 = vmatprep.subr.bf16.mxu0 0
    %3883 = vmatpush1.bf16.msra.mxu0 %v3544
    %3884 = vmatprep.subr.bf16.mxu0 0
    %3885 = vmatpush1.bf16.msra.mxu0 %v3545
    %3886 = vmatprep.subr.bf16.mxu0 0
    %3887 = vmatpush1.bf16.msra.mxu0 %v3546
    %3888 = vmatprep.subr.bf16.mxu0 0
    %3889 = vmatpush1.bf16.msra.mxu0 %v3547
    %3890 = vmatprep.subr.bf16.mxu0 0
    %3891 = vmatpush1.bf16.msra.mxu0 %v3548
    %3892 = vmatprep.subr.bf16.mxu0 0
    %3893 = vmatpush1.bf16.msra.mxu0 %v3549
    %3894 = vmatprep.subr.bf16.mxu0 0
    %3895 = vmatpush1.bf16.msra.mxu0 %v3550
    %3896 = vmatprep.subr.bf16.mxu0 0
    %3897 = vmatpush1.bf16.msra.mxu0 %v3551
    %3898 = vmatprep.subr.bf16.mxu0 0
    %3899 = vmatpush1.bf16.msra.mxu0 %v3552
    %3900 = vmatprep.subr.bf16.mxu0 0
    %3901 = vmatpush1.bf16.msra.mxu0 %v3553
    %3902 = vmatprep.subr.bf16.mxu0 0
    %3903 = vmatpush1.bf16.msra.mxu0 %v3554
    %3904 = vmatprep.subr.bf16.mxu0 0
    %3905 = vmatpush1.bf16.msra.mxu0 %v3555
    %3906 = vmatprep.subr.bf16.mxu0 0
    %3907 = vmatpush1.bf16.msra.mxu0 %v3556
    %3908 = vmatprep.subr.bf16.mxu0 0
    %3909 = vmatpush1.bf16.msra.mxu0 %v3557
    %3910 = vmatprep.subr.bf16.mxu0 0
    %3911 = vmatpush1.bf16.msra.mxu0 %v3558
    %3912 = vmatprep.mubr.bf16.mxu0 %v802
    %3913 = vmatmul.mubr.bf16.gmra.mrb[0].mxu0 %v801
    %v3914 = vpop.f32.mrb[0].mxu0
    %v3915 = vadd.f32 %v3818, %v3914
    %v3916 = vpop.f32.mrb[0].mxu0
    %v3917 = vpop.f32.mrb[0].mxu0
    %v3918 = vadd.f32 %v3821, %v3917
    %v3919 = vpop.f32.mrb[0].mxu0
    %3920 = vmatprep.mubr.bf16.mxu0 %v818
    %3921 = vmatmul.mubr.bf16.gmra.mrb[0].mxu0 %v817
    %v3922 = vpop.f32.mrb[0].mxu0
    %v3923 = vadd.f32 %v3826, %v3922
    %v3924 = vpop.f32.mrb[0].mxu0
    %v3925 = vpop.f32.mrb[0].mxu0
    %v3926 = vadd.f32 %v3829, %v3925
    %v3927 = vpop.f32.mrb[0].mxu0
    %3928 = vmatprep.mubr.bf16.mxu0 %v834
    %3929 = vmatmul.mubr.bf16.gmra.mrb[0].mxu0 %v833
    %v3930 = vpop.f32.mrb[0].mxu0
    %v3931 = vadd.f32 %v3834, %v3930
    %v3932 = vpop.f32.mrb[0].mxu0
    %v3933 = vpop.f32.mrb[0].mxu0
    %v3934 = vadd.f32 %v3837, %v3933
    %v3935 = vpop.f32.mrb[0].mxu0
    %3936 = vmatprep.mubr.bf16.mxu0 %v850
    %3937 = vmatmul.mubr.bf16.gmra.mrb[0].mxu0 %v849
    %v3938 = vpop.f32.mrb[0].mxu0
    %v3939 = vadd.f32 %v3842, %v3938
    %v3940 = vpop.f32.mrb[0].mxu0
    %v3941 = vpop.f32.mrb[0].mxu0
    %v3942 = vadd.f32 %v3845, %v3941
    %v3943 = vpop.f32.mrb[0].mxu0
    %3944 = vmatprep.mubr.bf16.mxu0 %v866
    %3945 = vmatmul.mubr.bf16.gmra.mrb[0].mxu0 %v865
    %v3946 = vpop.f32.mrb[0].mxu0
    %v3947 = vadd.f32 %v3850, %v3946
    %v3948 = vpop.f32.mrb[0].mxu0
    %v3949 = vpop.f32.mrb[0].mxu0
    %v3950 = vadd.f32 %v3853, %v3949
    %v3951 = vpop.f32.mrb[0].mxu0
    %3952 = vmatprep.mubr.bf16.mxu0 %v882
    %3953 = vmatmul.mubr.bf16.gmra.mrb[0].mxu0 %v881
    %v3954 = vpop.f32.mrb[0].mxu0
    %v3955 = vadd.f32 %v3858, %v3954
    %v3956 = vpop.f32.mrb[0].mxu0
    %v3957 = vpop.f32.mrb[0].mxu0
    %v3958 = vadd.f32 %v3861, %v3957
    %v3959 = vpop.f32.mrb[0].mxu0
    %3960 = vmatprep.mubr.bf16.mxu0 %v898
    %3961 = vmatmul.mubr.bf16.gmra.mrb[0].mxu0 %v897
    %v3962 = vpop.f32.mrb[0].mxu0
    %v3963 = vadd.f32 %v3866, %v3962
    %v3964 = vpop.f32.mrb[0].mxu0
    %v3965 = vpop.f32.mrb[0].mxu0
    %v3966 = vadd.f32 %v3869, %v3965
    %v3967 = vpop.f32.mrb[0].mxu0
    %3968 = vmatprep.mubr.bf16.mxu0 %v914
    %3969 = vmatmul.mubr.bf16.gmra.mrb[0].mxu0 %v913
    %v3970 = vpop.f32.mrb[0].mxu0
    %v3971 = vadd.f32 %v3874, %v3970
    %v3972 = vpop.f32.mrb[0].mxu0
    %v3973 = vpop.f32.mrb[0].mxu0
    %v3974 = vadd.f32 %v3877, %v3973
    %v3975 = vpop.f32.mrb[0].mxu0
    %3976 = vdwg.mxu0
    %3977 = vmatprep.subr.bf16.mxu0 0
    %3978 = vmatpush1.bf16.msra.mxu0 %v3559
    %3979 = vmatprep.subr.bf16.mxu0 0
    %3980 = vmatpush1.bf16.msra.mxu0 %v3560
    %3981 = vmatprep.subr.bf16.mxu0 0
    %3982 = vmatpush1.bf16.msra.mxu0 %v3561
    %3983 = vmatprep.subr.bf16.mxu0 0
    %3984 = vmatpush1.bf16.msra.mxu0 %v3562
    %3985 = vmatprep.subr.bf16.mxu0 0
    %3986 = vmatpush1.bf16.msra.mxu0 %v3563
    %3987 = vmatprep.subr.bf16.mxu0 0
    %3988 = vmatpush1.bf16.msra.mxu0 %v3564
    %3989 = vmatprep.subr.bf16.mxu0 0
    %3990 = vmatpush1.bf16.msra.mxu0 %v3565
    %3991 = vmatprep.subr.bf16.mxu0 0
    %3992 = vmatpush1.bf16.msra.mxu0 %v3566
    %3993 = vmatprep.subr.bf16.mxu0 0
    %3994 = vmatpush1.bf16.msra.mxu0 %v3567
    %3995 = vmatprep.subr.bf16.mxu0 0
    %3996 = vmatpush1.bf16.msra.mxu0 %v3568
    %3997 = vmatprep.subr.bf16.mxu0 0
    %3998 = vmatpush1.bf16.msra.mxu0 %v3569
    %3999 = vmatprep.subr.bf16.mxu0 0
    %4000 = vmatpush1.bf16.msra.mxu0 %v3570
    %4001 = vmatprep.subr.bf16.mxu0 0
    %4002 = vmatpush1.bf16.msra.mxu0 %v3571
    %4003 = vmatprep.subr.bf16.mxu0 0
    %4004 = vmatpush1.bf16.msra.mxu0 %v3572
    %4005 = vmatprep.subr.bf16.mxu0 0
    %4006 = vmatpush1.bf16.msra.mxu0 %v3573
    %4007 = vmatprep.subr.bf16.mxu0 0
    %4008 = vmatpush1.bf16.msra.mxu0 %v3574
    %4009 = vmatprep.mubr.bf16.mxu0 %v804
    %4010 = vmatmul.mubr.bf16.gmra.mrb[0].mxu0 %v803
    %v4011 = vpop.f32.mrb[0].mxu0
    %v4012 = vadd.f32 %v3915, %v4011
    %v4013 = vpop.f32.mrb[0].mxu0
    %v4014 = vpop.f32.mrb[0].mxu0
    %v4015 = vadd.f32 %v3918, %v4014
    %v4016 = vpop.f32.mrb[0].mxu0
    %4017 = vmatprep.mubr.bf16.mxu0 %v820
    %4018 = vmatmul.mubr.bf16.gmra.mrb[0].mxu0 %v819
    %v4019 = vpop.f32.mrb[0].mxu0
    %v4020 = vadd.f32 %v3923, %v4019
    %v4021 = vpop.f32.mrb[0].mxu0
    %v4022 = vpop.f32.mrb[0].mxu0
    %v4023 = vadd.f32 %v3926, %v4022
    %v4024 = vpop.f32.mrb[0].mxu0
    %4025 = vmatprep.mubr.bf16.mxu0 %v836
    %4026 = vmatmul.mubr.bf16.gmra.mrb[0].mxu0 %v835
    %v4027 = vpop.f32.mrb[0].mxu0
    %v4028 = vadd.f32 %v3931, %v4027
    %v4029 = vpop.f32.mrb[0].mxu0
    %v4030 = vpop.f32.mrb[0].mxu0
    %v4031 = vadd.f32 %v3934, %v4030
    %v4032 = vpop.f32.mrb[0].mxu0
    %4033 = vmatprep.mubr.bf16.mxu0 %v852
    %4034 = vmatmul.mubr.bf16.gmra.mrb[0].mxu0 %v851
    %v4035 = vpop.f32.mrb[0].mxu0
    %v4036 = vadd.f32 %v3939, %v4035
    %v4037 = vpop.f32.mrb[0].mxu0
    %v4038 = vpop.f32.mrb[0].mxu0
    %v4039 = vadd.f32 %v3942, %v4038
    %v4040 = vpop.f32.mrb[0].mxu0
    %4041 = vmatprep.mubr.bf16.mxu0 %v868
    %4042 = vmatmul.mubr.bf16.gmra.mrb[0].mxu0 %v867
    %v4043 = vpop.f32.mrb[0].mxu0
    %v4044 = vadd.f32 %v3947, %v4043
    %v4045 = vpop.f32.mrb[0].mxu0
    %v4046 = vpop.f32.mrb[0].mxu0
    %v4047 = vadd.f32 %v3950, %v4046
    %v4048 = vpop.f32.mrb[0].mxu0
    %4049 = vmatprep.mubr.bf16.mxu0 %v884
    %4050 = vmatmul.mubr.bf16.gmra.mrb[0].mxu0 %v883
    %v4051 = vpop.f32.mrb[0].mxu0
    %v4052 = vadd.f32 %v3955, %v4051
    %v4053 = vpop.f32.mrb[0].mxu0
    %v4054 = vpop.f32.mrb[0].mxu0
    %v4055 = vadd.f32 %v3958, %v4054
    %v4056 = vpop.f32.mrb[0].mxu0
    %4057 = vmatprep.mubr.bf16.mxu0 %v900
    %4058 = vmatmul.mubr.bf16.gmra.mrb[0].mxu0 %v899
    %v4059 = vpop.f32.mrb[0].mxu0
    %v4060 = vadd.f32 %v3963, %v4059
    %v4061 = vpop.f32.mrb[0].mxu0
    %v4062 = vpop.f32.mrb[0].mxu0
    %v4063 = vadd.f32 %v3966, %v4062
    %v4064 = vpop.f32.mrb[0].mxu0
    %4065 = vmatprep.mubr.bf16.mxu0 %v916
    %4066 = vmatmul.mubr.bf16.gmra.mrb[0].mxu0 %v915
    %v4067 = vpop.f32.mrb[0].mxu0
    %v4068 = vadd.f32 %v3971, %v4067
    %v4069 = vpop.f32.mrb[0].mxu0
    %v4070 = vpop.f32.mrb[0].mxu0
    %v4071 = vadd.f32 %v3974, %v4070
    %v4072 = vpop.f32.mrb[0].mxu0
    %4073 = vdwg.mxu0
    %4074 = vmatprep.subr.bf16.mxu0 0
    %4075 = vmatpush1.bf16.msra.mxu0 %v3575
    %4076 = vmatprep.subr.bf16.mxu0 0
    %4077 = vmatpush1.bf16.msra.mxu0 %v3576
    %4078 = vmatprep.subr.bf16.mxu0 0
    %4079 = vmatpush1.bf16.msra.mxu0 %v3577
    %4080 = vmatprep.subr.bf16.mxu0 0
    %4081 = vmatpush1.bf16.msra.mxu0 %v3578
    %4082 = vmatprep.subr.bf16.mxu0 0
    %4083 = vmatpush1.bf16.msra.mxu0 %v3579
    %4084 = vmatprep.subr.bf16.mxu0 0
    %4085 = vmatpush1.bf16.msra.mxu0 %v3580
    %4086 = vmatprep.subr.bf16.mxu0 0
    %4087 = vmatpush1.bf16.msra.mxu0 %v3581
    %4088 = vmatprep.subr.bf16.mxu0 0
    %4089 = vmatpush1.bf16.msra.mxu0 %v3582
    %4090 = vmatprep.subr.bf16.mxu0 0
    %4091 = vmatpush1.bf16.msra.mxu0 %v3583
    %4092 = vmatprep.subr.bf16.mxu0 0
    %4093 = vmatpush1.bf16.msra.mxu0 %v3584
    %4094 = vmatprep.subr.bf16.mxu0 0
    %4095 = vmatpush1.bf16.msra.mxu0 %v3585
    %4096 = vmatprep.subr.bf16.mxu0 0
    %4097 = vmatpush1.bf16.msra.mxu0 %v3586
    %4098 = vmatprep.subr.bf16.mxu0 0
    %4099 = vmatpush1.bf16.msra.mxu0 %v3587
    %4100 = vmatprep.subr.bf16.mxu0 0
    %4101 = vmatpush1.bf16.msra.mxu0 %v3588
    %4102 = vmatprep.subr.bf16.mxu0 0
    %4103 = vmatpush1.bf16.msra.mxu0 %v3589
    %4104 = vmatprep.subr.bf16.mxu0 0
    %4105 = vmatpush1.bf16.msra.mxu0 %v3590
    %4106 = vmatprep.mubr.bf16.mxu0 %v806
    %4107 = vmatmul.mubr.bf16.gmra.mrb[0].mxu0 %v805
    %v4108 = vpop.f32.mrb[0].mxu0
    %v4109 = vadd.f32 %v4012, %v4108
    %v4110 = vpop.f32.mrb[0].mxu0
    %v4111 = vpop.f32.mrb[0].mxu0
    %v4112 = vadd.f32 %v4015, %v4111
    %v4113 = vpop.f32.mrb[0].mxu0
    %4114 = vmatprep.mubr.bf16.mxu0 %v822
    %4115 = vmatmul.mubr.bf16.gmra.mrb[0].mxu0 %v821
    %v4116 = vpop.f32.mrb[0].mxu0
    %v4117 = vadd.f32 %v4020, %v4116
    %v4118 = vpop.f32.mrb[0].mxu0
    %v4119 = vpop.f32.mrb[0].mxu0
    %v4120 = vadd.f32 %v4023, %v4119
    %v4121 = vpop.f32.mrb[0].mxu0
    %4122 = vmatprep.mubr.bf16.mxu0 %v838
    %4123 = vmatmul.mubr.bf16.gmra.mrb[0].mxu0 %v837
    %v4124 = vpop.f32.mrb[0].mxu0
    %v4125 = vadd.f32 %v4028, %v4124
    %v4126 = vpop.f32.mrb[0].mxu0
    %v4127 = vpop.f32.mrb[0].mxu0
    %v4128 = vadd.f32 %v4031, %v4127
    %v4129 = vpop.f32.mrb[0].mxu0
    %4130 = vmatprep.mubr.bf16.mxu0 %v854
    %4131 = vmatmul.mubr.bf16.gmra.mrb[0].mxu0 %v853
    %v4132 = vpop.f32.mrb[0].mxu0
    %v4133 = vadd.f32 %v4036, %v4132
    %v4134 = vpop.f32.mrb[0].mxu0
    %v4135 = vpop.f32.mrb[0].mxu0
    %v4136 = vadd.f32 %v4039, %v4135
    %v4137 = vpop.f32.mrb[0].mxu0
    %4138 = vmatprep.mubr.bf16.mxu0 %v870
    %4139 = vmatmul.mubr.bf16.gmra.mrb[0].mxu0 %v869
    %v4140 = vpop.f32.mrb[0].mxu0
    %v4141 = vadd.f32 %v4044, %v4140
    %v4142 = vpop.f32.mrb[0].mxu0
    %v4143 = vpop.f32.mrb[0].mxu0
    %v4144 = vadd.f32 %v4047, %v4143
    %v4145 = vpop.f32.mrb[0].mxu0
    %4146 = vmatprep.mubr.bf16.mxu0 %v886
    %4147 = vmatmul.mubr.bf16.gmra.mrb[0].mxu0 %v885
    %v4148 = vpop.f32.mrb[0].mxu0
    %v4149 = vadd.f32 %v4052, %v4148
    %v4150 = vpop.f32.mrb[0].mxu0
    %v4151 = vpop.f32.mrb[0].mxu0
    %v4152 = vadd.f32 %v4055, %v4151
    %v4153 = vpop.f32.mrb[0].mxu0
    %4154 = vmatprep.mubr.bf16.mxu0 %v902
    %4155 = vmatmul.mubr.bf16.gmra.mrb[0].mxu0 %v901
    %v4156 = vpop.f32.mrb[0].mxu0
    %v4157 = vadd.f32 %v4060, %v4156
    %v4158 = vpop.f32.mrb[0].mxu0
    %v4159 = vpop.f32.mrb[0].mxu0
    %v4160 = vadd.f32 %v4063, %v4159
    %v4161 = vpop.f32.mrb[0].mxu0
    %4162 = vmatprep.mubr.bf16.mxu0 %v918
    %4163 = vmatmul.mubr.bf16.gmra.mrb[0].mxu0 %v917
    %v4164 = vpop.f32.mrb[0].mxu0
    %v4165 = vadd.f32 %v4068, %v4164
    %v4166 = vpop.f32.mrb[0].mxu0
    %v4167 = vpop.f32.mrb[0].mxu0
    %v4168 = vadd.f32 %v4071, %v4167
    %v4169 = vpop.f32.mrb[0].mxu0
    %4170 = vdwg.mxu0
    %4171 = vmatprep.subr.bf16.mxu0 0
    %4172 = vmatpush1.bf16.msra.mxu0 %v3591
    %4173 = vmatprep.subr.bf16.mxu0 0
    %4174 = vmatpush1.bf16.msra.mxu0 %v3592
    %4175 = vmatprep.subr.bf16.mxu0 0
    %4176 = vmatpush1.bf16.msra.mxu0 %v3593
    %4177 = vmatprep.subr.bf16.mxu0 0
    %4178 = vmatpush1.bf16.msra.mxu0 %v3594
    %4179 = vmatprep.subr.bf16.mxu0 0
    %4180 = vmatpush1.bf16.msra.mxu0 %v3595
    %4181 = vmatprep.subr.bf16.mxu0 0
    %4182 = vmatpush1.bf16.msra.mxu0 %v3596
    %4183 = vmatprep.subr.bf16.mxu0 0
    %4184 = vmatpush1.bf16.msra.mxu0 %v3597
    %4185 = vmatprep.subr.bf16.mxu0 0
    %4186 = vmatpush1.bf16.msra.mxu0 %v3598
    %4187 = vmatprep.subr.bf16.mxu0 0
    %4188 = vmatpush1.bf16.msra.mxu0 %v3599
    %4189 = vmatprep.subr.bf16.mxu0 0
    %4190 = vmatpush1.bf16.msra.mxu0 %v3600
    %4191 = vmatprep.subr.bf16.mxu0 0
    %4192 = vmatpush1.bf16.msra.mxu0 %v3601
    %4193 = vmatprep.subr.bf16.mxu0 0
    %4194 = vmatpush1.bf16.msra.mxu0 %v3602
    %4195 = vmatprep.subr.bf16.mxu0 0
    %4196 = vmatpush1.bf16.msra.mxu0 %v3603
    %4197 = vmatprep.subr.bf16.mxu0 0
    %4198 = vmatpush1.bf16.msra.mxu0 %v3604
    %4199 = vmatprep.subr.bf16.mxu0 0
    %4200 = vmatpush1.bf16.msra.mxu0 %v3605
    %4201 = vmatprep.subr.bf16.mxu0 0
    %4202 = vmatpush1.bf16.msra.mxu0 %v3606
    %4203 = vmatprep.mubr.bf16.mxu0 %v808
    %4204 = vmatmul.mubr.bf16.gmra.mrb[0].mxu0 %v807
    %v4205 = vpop.f32.mrb[0].mxu0
    %v4206 = vadd.f32 %v4109, %v4205
    %v4207 = vpop.f32.mrb[0].mxu0
    %v4208 = vpop.f32.mrb[0].mxu0
    %v4209 = vadd.f32 %v4112, %v4208
    %v4210 = vpop.f32.mrb[0].mxu0
    %4211 = vmatprep.mubr.bf16.mxu0 %v824
    %4212 = vmatmul.mubr.bf16.gmra.mrb[0].mxu0 %v823
    %v4213 = vpop.f32.mrb[0].mxu0
    %v4214 = vadd.f32 %v4117, %v4213
    %v4215 = vpop.f32.mrb[0].mxu0
    %v4216 = vpop.f32.mrb[0].mxu0
    %v4217 = vadd.f32 %v4120, %v4216
    %v4218 = vpop.f32.mrb[0].mxu0
    %4219 = vmatprep.mubr.bf16.mxu0 %v840
    %4220 = vmatmul.mubr.bf16.gmra.mrb[0].mxu0 %v839
    %v4221 = vpop.f32.mrb[0].mxu0
    %v4222 = vadd.f32 %v4125, %v4221
    %v4223 = vpop.f32.mrb[0].mxu0
    %v4224 = vpop.f32.mrb[0].mxu0
    %v4225 = vadd.f32 %v4128, %v4224
    %v4226 = vpop.f32.mrb[0].mxu0
    %4227 = vmatprep.mubr.bf16.mxu0 %v856
    %4228 = vmatmul.mubr.bf16.gmra.mrb[0].mxu0 %v855
    %v4229 = vpop.f32.mrb[0].mxu0
    %v4230 = vadd.f32 %v4133, %v4229
    %v4231 = vpop.f32.mrb[0].mxu0
    %v4232 = vpop.f32.mrb[0].mxu0
    %v4233 = vadd.f32 %v4136, %v4232
    %v4234 = vpop.f32.mrb[0].mxu0
    %4235 = vmatprep.mubr.bf16.mxu0 %v872
    %4236 = vmatmul.mubr.bf16.gmra.mrb[0].mxu0 %v871
    %v4237 = vpop.f32.mrb[0].mxu0
    %v4238 = vadd.f32 %v4141, %v4237
    %v4239 = vpop.f32.mrb[0].mxu0
    %v4240 = vpop.f32.mrb[0].mxu0
    %v4241 = vadd.f32 %v4144, %v4240
    %v4242 = vpop.f32.mrb[0].mxu0
    %4243 = vmatprep.mubr.bf16.mxu0 %v888
    %4244 = vmatmul.mubr.bf16.gmra.mrb[0].mxu0 %v887
    %v4245 = vpop.f32.mrb[0].mxu0
    %v4246 = vadd.f32 %v4149, %v4245
    %v4247 = vpop.f32.mrb[0].mxu0
    %v4248 = vpop.f32.mrb[0].mxu0
    %v4249 = vadd.f32 %v4152, %v4248
    %v4250 = vpop.f32.mrb[0].mxu0
    %4251 = vmatprep.mubr.bf16.mxu0 %v904
    %4252 = vmatmul.mubr.bf16.gmra.mrb[0].mxu0 %v903
    %v4253 = vpop.f32.mrb[0].mxu0
    %v4254 = vadd.f32 %v4157, %v4253
    %v4255 = vpop.f32.mrb[0].mxu0
    %v4256 = vpop.f32.mrb[0].mxu0
    %v4257 = vadd.f32 %v4160, %v4256
    %v4258 = vpop.f32.mrb[0].mxu0
    %4259 = vmatprep.mubr.bf16.mxu0 %v920
    %4260 = vmatmul.mubr.bf16.gmra.mrb[0].mxu0 %v919
    %v4261 = vpop.f32.mrb[0].mxu0
    %v4262 = vadd.f32 %v4165, %v4261
    %v4263 = vpop.f32.mrb[0].mxu0
    %v4264 = vpop.f32.mrb[0].mxu0
    %v4265 = vadd.f32 %v4168, %v4264
    %v4266 = vpop.f32.mrb[0].mxu0
    %4267 = vdwg.mxu0
    %4268 = vmatprep.subr.bf16.mxu0 0
    %4269 = vmatpush1.bf16.msra.mxu0 %v3607
    %4270 = vmatprep.subr.bf16.mxu0 0
    %4271 = vmatpush1.bf16.msra.mxu0 %v3608
    %4272 = vmatprep.subr.bf16.mxu0 0
    %4273 = vmatpush1.bf16.msra.mxu0 %v3609
    %4274 = vmatprep.subr.bf16.mxu0 0
    %4275 = vmatpush1.bf16.msra.mxu0 %v3610
    %4276 = vmatprep.subr.bf16.mxu0 0
    %4277 = vmatpush1.bf16.msra.mxu0 %v3611
    %4278 = vmatprep.subr.bf16.mxu0 0
    %4279 = vmatpush1.bf16.msra.mxu0 %v3612
    %4280 = vmatprep.subr.bf16.mxu0 0
    %4281 = vmatpush1.bf16.msra.mxu0 %v3613
    %4282 = vmatprep.subr.bf16.mxu0 0
    %4283 = vmatpush1.bf16.msra.mxu0 %v3614
    %4284 = vmatprep.subr.bf16.mxu0 0
    %4285 = vmatpush1.bf16.msra.mxu0 %v3615
    %4286 = vmatprep.subr.bf16.mxu0 0
    %4287 = vmatpush1.bf16.msra.mxu0 %v3616
    %4288 = vmatprep.subr.bf16.mxu0 0
    %4289 = vmatpush1.bf16.msra.mxu0 %v3617
    %4290 = vmatprep.subr.bf16.mxu0 0
    %4291 = vmatpush1.bf16.msra.mxu0 %v3618
    %4292 = vmatprep.subr.bf16.mxu0 0
    %4293 = vmatpush1.bf16.msra.mxu0 %v3619
    %4294 = vmatprep.subr.bf16.mxu0 0
    %4295 = vmatpush1.bf16.msra.mxu0 %v3620
    %4296 = vmatprep.subr.bf16.mxu0 0
    %4297 = vmatpush1.bf16.msra.mxu0 %v3621
    %4298 = vmatprep.subr.bf16.mxu0 0
    %4299 = vmatpush1.bf16.msra.mxu0 %v3622
    %4300 = vmatprep.mubr.bf16.mxu0 %v810
    %4301 = vmatmul.mubr.bf16.gmra.mrb[0].mxu0 %v809
    %v4302 = vpop.f32.mrb[0].mxu0
    %v4303 = vadd.f32 %v4206, %v4302
    %v4304 = vpop.f32.mrb[0].mxu0
    %v4305 = vpop.f32.mrb[0].mxu0
    %v4306 = vadd.f32 %v4209, %v4305
    %v4307 = vpop.f32.mrb[0].mxu0
    %4308 = vmatprep.mubr.bf16.mxu0 %v826
    %4309 = vmatmul.mubr.bf16.gmra.mrb[0].mxu0 %v825
    %v4310 = vpop.f32.mrb[0].mxu0
    %v4311 = vadd.f32 %v4214, %v4310
    %v4312 = vpop.f32.mrb[0].mxu0
    %v4313 = vpop.f32.mrb[0].mxu0
    %v4314 = vadd.f32 %v4217, %v4313
    %v4315 = vpop.f32.mrb[0].mxu0
    %4316 = vmatprep.mubr.bf16.mxu0 %v842
    %4317 = vmatmul.mubr.bf16.gmra.mrb[0].mxu0 %v841
    %v4318 = vpop.f32.mrb[0].mxu0
    %v4319 = vadd.f32 %v4222, %v4318
    %v4320 = vpop.f32.mrb[0].mxu0
    %v4321 = vpop.f32.mrb[0].mxu0
    %v4322 = vadd.f32 %v4225, %v4321
    %v4323 = vpop.f32.mrb[0].mxu0
    %4324 = vmatprep.mubr.bf16.mxu0 %v858
    %4325 = vmatmul.mubr.bf16.gmra.mrb[0].mxu0 %v857
    %v4326 = vpop.f32.mrb[0].mxu0
    %v4327 = vadd.f32 %v4230, %v4326
    %v4328 = vpop.f32.mrb[0].mxu0
    %v4329 = vpop.f32.mrb[0].mxu0
    %v4330 = vadd.f32 %v4233, %v4329
    %v4331 = vpop.f32.mrb[0].mxu0
    %4332 = vmatprep.mubr.bf16.mxu0 %v874
    %4333 = vmatmul.mubr.bf16.gmra.mrb[0].mxu0 %v873
    %v4334 = vpop.f32.mrb[0].mxu0
    %v4335 = vadd.f32 %v4238, %v4334
    %v4336 = vpop.f32.mrb[0].mxu0
    %v4337 = vpop.f32.mrb[0].mxu0
    %v4338 = vadd.f32 %v4241, %v4337
    %v4339 = vpop.f32.mrb[0].mxu0
    %4340 = vmatprep.mubr.bf16.mxu0 %v890
    %4341 = vmatmul.mubr.bf16.gmra.mrb[0].mxu0 %v889
    %v4342 = vpop.f32.mrb[0].mxu0
    %v4343 = vadd.f32 %v4246, %v4342
    %v4344 = vpop.f32.mrb[0].mxu0
    %v4345 = vpop.f32.mrb[0].mxu0
    %v4346 = vadd.f32 %v4249, %v4345
    %v4347 = vpop.f32.mrb[0].mxu0
    %4348 = vmatprep.mubr.bf16.mxu0 %v906
    %4349 = vmatmul.mubr.bf16.gmra.mrb[0].mxu0 %v905
    %v4350 = vpop.f32.mrb[0].mxu0
    %v4351 = vadd.f32 %v4254, %v4350
    %v4352 = vpop.f32.mrb[0].mxu0
    %v4353 = vpop.f32.mrb[0].mxu0
    %v4354 = vadd.f32 %v4257, %v4353
    %v4355 = vpop.f32.mrb[0].mxu0
    %4356 = vmatprep.mubr.bf16.mxu0 %v922
    %4357 = vmatmul.mubr.bf16.gmra.mrb[0].mxu0 %v921
    %v4358 = vpop.f32.mrb[0].mxu0
    %v4359 = vadd.f32 %v4262, %v4358
    %v4360 = vpop.f32.mrb[0].mxu0
    %v4361 = vpop.f32.mrb[0].mxu0
    %v4362 = vadd.f32 %v4265, %v4361
    %v4363 = vpop.f32.mrb[0].mxu0
    %4364 = vdwg.mxu0
    %4365 = vmatprep.subr.bf16.mxu0 0
    %4366 = vmatpush1.bf16.msra.mxu0 %v3623
    %4367 = vmatprep.subr.bf16.mxu0 0
    %4368 = vmatpush1.bf16.msra.mxu0 %v3624
    %4369 = vmatprep.subr.bf16.mxu0 0
    %4370 = vmatpush1.bf16.msra.mxu0 %v3625
    %4371 = vmatprep.subr.bf16.mxu0 0
    %4372 = vmatpush1.bf16.msra.mxu0 %v3626
    %4373 = vmatprep.subr.bf16.mxu0 0
    %4374 = vmatpush1.bf16.msra.mxu0 %v3627
    %4375 = vmatprep.subr.bf16.mxu0 0
    %4376 = vmatpush1.bf16.msra.mxu0 %v3628
    %4377 = vmatprep.subr.bf16.mxu0 0
    %4378 = vmatpush1.bf16.msra.mxu0 %v3629
    %4379 = vmatprep.subr.bf16.mxu0 0
    %4380 = vmatpush1.bf16.msra.mxu0 %v3630
    %4381 = vmatprep.subr.bf16.mxu0 0
    %4382 = vmatpush1.bf16.msra.mxu0 %v3631
    %4383 = vmatprep.subr.bf16.mxu0 0
    %4384 = vmatpush1.bf16.msra.mxu0 %v3632
    %4385 = vmatprep.subr.bf16.mxu0 0
    %4386 = vmatpush1.bf16.msra.mxu0 %v3633
    %4387 = vmatprep.subr.bf16.mxu0 0
    %4388 = vmatpush1.bf16.msra.mxu0 %v3634
    %4389 = vmatprep.subr.bf16.mxu0 0
    %4390 = vmatpush1.bf16.msra.mxu0 %v3635
    %4391 = vmatprep.subr.bf16.mxu0 0
    %4392 = vmatpush1.bf16.msra.mxu0 %v3636
    %4393 = vmatprep.subr.bf16.mxu0 0
    %4394 = vmatpush1.bf16.msra.mxu0 %v3637
    %4395 = vmatprep.subr.bf16.mxu0 0
    %4396 = vmatpush1.bf16.msra.mxu0 %v3638
    %4397 = vmatprep.mubr.bf16.mxu0 %v812
    %4398 = vmatmul.mubr.bf16.gmra.mrb[0].mxu0 %v811
    %v4399 = vpop.f32.mrb[0].mxu0
    %v4400 = vadd.f32 %v4303, %v4399
    %v4401 = vpop.f32.mrb[0].mxu0
    %v4402 = vpop.f32.mrb[0].mxu0
    %v4403 = vadd.f32 %v4306, %v4402
    %v4404 = vpop.f32.mrb[0].mxu0
    %4405 = vmatprep.mubr.bf16.mxu0 %v828
    %4406 = vmatmul.mubr.bf16.gmra.mrb[0].mxu0 %v827
    %v4407 = vpop.f32.mrb[0].mxu0
    %v4408 = vadd.f32 %v4311, %v4407
    %v4409 = vpop.f32.mrb[0].mxu0
    %v4410 = vpop.f32.mrb[0].mxu0
    %v4411 = vadd.f32 %v4314, %v4410
    %v4412 = vpop.f32.mrb[0].mxu0
    %4413 = vmatprep.mubr.bf16.mxu0 %v844
    %4414 = vmatmul.mubr.bf16.gmra.mrb[0].mxu0 %v843
    %v4415 = vpop.f32.mrb[0].mxu0
    %v4416 = vadd.f32 %v4319, %v4415
    %v4417 = vpop.f32.mrb[0].mxu0
    %v4418 = vpop.f32.mrb[0].mxu0
    %v4419 = vadd.f32 %v4322, %v4418
    %v4420 = vpop.f32.mrb[0].mxu0
    %4421 = vmatprep.mubr.bf16.mxu0 %v860
    %4422 = vmatmul.mubr.bf16.gmra.mrb[0].mxu0 %v859
    %v4423 = vpop.f32.mrb[0].mxu0
    %v4424 = vadd.f32 %v4327, %v4423
    %v4425 = vpop.f32.mrb[0].mxu0
    %v4426 = vpop.f32.mrb[0].mxu0
    %v4427 = vadd.f32 %v4330, %v4426
    %v4428 = vpop.f32.mrb[0].mxu0
    %4429 = vmatprep.mubr.bf16.mxu0 %v876
    %4430 = vmatmul.mubr.bf16.gmra.mrb[0].mxu0 %v875
    %v4431 = vpop.f32.mrb[0].mxu0
    %v4432 = vadd.f32 %v4335, %v4431
    %v4433 = vpop.f32.mrb[0].mxu0
    %v4434 = vpop.f32.mrb[0].mxu0
    %v4435 = vadd.f32 %v4338, %v4434
    %v4436 = vpop.f32.mrb[0].mxu0
    %4437 = vmatprep.mubr.bf16.mxu0 %v892
    %4438 = vmatmul.mubr.bf16.gmra.mrb[0].mxu0 %v891
    %v4439 = vpop.f32.mrb[0].mxu0
    %v4440 = vadd.f32 %v4343, %v4439
    %v4441 = vpop.f32.mrb[0].mxu0
    %v4442 = vpop.f32.mrb[0].mxu0
    %v4443 = vadd.f32 %v4346, %v4442
    %v4444 = vpop.f32.mrb[0].mxu0
    %4445 = vmatprep.mubr.bf16.mxu0 %v908
    %4446 = vmatmul.mubr.bf16.gmra.mrb[0].mxu0 %v907
    %v4447 = vpop.f32.mrb[0].mxu0
    %v4448 = vadd.f32 %v4351, %v4447
    %v4449 = vpop.f32.mrb[0].mxu0
    %v4450 = vpop.f32.mrb[0].mxu0
    %v4451 = vadd.f32 %v4354, %v4450
    %v4452 = vpop.f32.mrb[0].mxu0
    %4453 = vmatprep.mubr.bf16.mxu0 %v924
    %4454 = vmatmul.mubr.bf16.gmra.mrb[0].mxu0 %v923
    %v4455 = vpop.f32.mrb[0].mxu0
    %v4456 = vadd.f32 %v4359, %v4455
    %v4457 = vpop.f32.mrb[0].mxu0
    %v4458 = vpop.f32.mrb[0].mxu0
    %v4459 = vadd.f32 %v4362, %v4458
    %v4460 = vpop.f32.mrb[0].mxu0
    %4461 = vdwg.mxu0
    %4462 = vmatprep.subr.bf16.mxu0 0
    %4463 = vmatpush1.bf16.msra.mxu0 %v3639
    %4464 = vmatprep.subr.bf16.mxu0 0
    %4465 = vmatpush1.bf16.msra.mxu0 %v3640
    %4466 = vmatprep.subr.bf16.mxu0 0
    %4467 = vmatpush1.bf16.msra.mxu0 %v3641
    %4468 = vmatprep.subr.bf16.mxu0 0
    %4469 = vmatpush1.bf16.msra.mxu0 %v3642
    %4470 = vmatprep.subr.bf16.mxu0 0
    %4471 = vmatpush1.bf16.msra.mxu0 %v3643
    %4472 = vmatprep.subr.bf16.mxu0 0
    %4473 = vmatpush1.bf16.msra.mxu0 %v3644
    %4474 = vmatprep.subr.bf16.mxu0 0
    %4475 = vmatpush1.bf16.msra.mxu0 %v3645
    %4476 = vmatprep.subr.bf16.mxu0 0
    %4477 = vmatpush1.bf16.msra.mxu0 %v3646
    %4478 = vmatprep.subr.bf16.mxu0 0
    %4479 = vmatpush1.bf16.msra.mxu0 %v3647
    %4480 = vmatprep.subr.bf16.mxu0 0
    %4481 = vmatpush1.bf16.msra.mxu0 %v3648
    %4482 = vmatprep.subr.bf16.mxu0 0
    %4483 = vmatpush1.bf16.msra.mxu0 %v3649
    %4484 = vmatprep.subr.bf16.mxu0 0
    %4485 = vmatpush1.bf16.msra.mxu0 %v3650
    %4486 = vmatprep.subr.bf16.mxu0 0
    %4487 = vmatpush1.bf16.msra.mxu0 %v3651
    %4488 = vmatprep.subr.bf16.mxu0 0
    %4489 = vmatpush1.bf16.msra.mxu0 %v3652
    %4490 = vmatprep.subr.bf16.mxu0 0
    %4491 = vmatpush1.bf16.msra.mxu0 %v3653
    %4492 = vmatprep.subr.bf16.mxu0 0
    %4493 = vmatpush1.bf16.msra.mxu0 %v3654
    %4494 = vmatprep.mubr.bf16.mxu0 %v814
    %4495 = vmatmul.mubr.bf16.gmra.mrb[0].mxu0 %v813
    %v4496 = vpop.f32.mrb[0].mxu0
    %v4497 = vadd.f32 %v4400, %v4496
    %v4498 = vpop.f32.mrb[0].mxu0
    %v4499 = vpop.f32.mrb[0].mxu0
    %v4500 = vadd.f32 %v4403, %v4499
    %v4501 = vpop.f32.mrb[0].mxu0
    %4502 = vmatprep.mubr.bf16.mxu0 %v830
    %4503 = vmatmul.mubr.bf16.gmra.mrb[0].mxu0 %v829
    %v4504 = vpop.f32.mrb[0].mxu0
    %v4505 = vadd.f32 %v4408, %v4504
    %v4506 = vpop.f32.mrb[0].mxu0
    %v4507 = vpop.f32.mrb[0].mxu0
    %v4508 = vadd.f32 %v4411, %v4507
    %v4509 = vpop.f32.mrb[0].mxu0
    %4510 = vmatprep.mubr.bf16.mxu0 %v846
    %4511 = vmatmul.mubr.bf16.gmra.mrb[0].mxu0 %v845
    %v4512 = vpop.f32.mrb[0].mxu0
    %v4513 = vadd.f32 %v4416, %v4512
    %v4514 = vpop.f32.mrb[0].mxu0
    %v4515 = vpop.f32.mrb[0].mxu0
    %v4516 = vadd.f32 %v4419, %v4515
    %v4517 = vpop.f32.mrb[0].mxu0
    %4518 = vmatprep.mubr.bf16.mxu0 %v862
    %4519 = vmatmul.mubr.bf16.gmra.mrb[0].mxu0 %v861
    %v4520 = vpop.f32.mrb[0].mxu0
    %v4521 = vadd.f32 %v4424, %v4520
    %v4522 = vpop.f32.mrb[0].mxu0
    %v4523 = vpop.f32.mrb[0].mxu0
    %v4524 = vadd.f32 %v4427, %v4523
    %v4525 = vpop.f32.mrb[0].mxu0
    %4526 = vmatprep.mubr.bf16.mxu0 %v878
    %4527 = vmatmul.mubr.bf16.gmra.mrb[0].mxu0 %v877
    %v4528 = vpop.f32.mrb[0].mxu0
    %v4529 = vadd.f32 %v4432, %v4528
    %v4530 = vpop.f32.mrb[0].mxu0
    %v4531 = vpop.f32.mrb[0].mxu0
    %v4532 = vadd.f32 %v4435, %v4531
    %v4533 = vpop.f32.mrb[0].mxu0
    %4534 = vmatprep.mubr.bf16.mxu0 %v894
    %4535 = vmatmul.mubr.bf16.gmra.mrb[0].mxu0 %v893
    %v4536 = vpop.f32.mrb[0].mxu0
    %v4537 = vadd.f32 %v4440, %v4536
    %v4538 = vpop.f32.mrb[0].mxu0
    %v4539 = vpop.f32.mrb[0].mxu0
    %v4540 = vadd.f32 %v4443, %v4539
    %v4541 = vpop.f32.mrb[0].mxu0
    %4542 = vmatprep.mubr.bf16.mxu0 %v910
    %4543 = vmatmul.mubr.bf16.gmra.mrb[0].mxu0 %v909
    %v4544 = vpop.f32.mrb[0].mxu0
    %v4545 = vadd.f32 %v4448, %v4544
    %v4546 = vpop.f32.mrb[0].mxu0
    %v4547 = vpop.f32.mrb[0].mxu0
    %v4548 = vadd.f32 %v4451, %v4547
    %v4549 = vpop.f32.mrb[0].mxu0
    %4550 = vmatprep.mubr.bf16.mxu0 %v926
    %4551 = vmatmul.mubr.bf16.gmra.mrb[0].mxu0 %v925
    %v4552 = vpop.f32.mrb[0].mxu0
    %v4553 = vadd.f32 %v4456, %v4552
    %v4554 = vpop.f32.mrb[0].mxu0
    %v4555 = vpop.f32.mrb[0].mxu0
    %v4556 = vadd.f32 %v4459, %v4555
    %v4557 = vpop.f32.mrb[0].mxu0
    %4558 = vdwg.mxu0
    %v4559 = vsel %vm2599, %v4497, 0.0
    %4560 = vadd.xlane.f32.xlu0 %v4559
    %v4561 = vpop.xlane.xlu0 %4560
    %v4562 = vsel %vm2599, %v4500, 0.0
    %4563 = vadd.xlane.f32.xlu0 %v4562
    %v4564 = vpop.xlane.xlu0 %4563
    %v4565 = vsel %vm2599, %v4505, 0.0
    %4566 = vadd.xlane.f32.xlu0 %v4565
    %v4567 = vpop.xlane.xlu0 %4566
    %v4568 = vsel %vm2599, %v4508, 0.0
    %4569 = vadd.xlane.f32.xlu0 %v4568
    %v4570 = vpop.xlane.xlu0 %4569
    %v4571 = vsel %vm2599, %v4513, 0.0
    %4572 = vadd.xlane.f32.xlu0 %v4571
    %v4573 = vpop.xlane.xlu0 %4572
    %v4574 = vsel %vm2599, %v4516, 0.0
    %4575 = vadd.xlane.f32.xlu0 %v4574
    %v4576 = vpop.xlane.xlu0 %4575
    %v4577 = vsel %vm2599, %v4521, 0.0
    %4578 = vadd.xlane.f32.xlu0 %v4577
    %v4579 = vpop.xlane.xlu0 %4578
    %v4580 = vsel %vm2599, %v4524, 0.0
    %4581 = vadd.xlane.f32.xlu0 %v4580
    %v4582 = vpop.xlane.xlu0 %4581
    %v4583 = vsel %vm2599, %v4529, 0.0
    %4584 = vadd.xlane.f32.xlu0 %v4583
    %v4585 = vpop.xlane.xlu0 %4584
    %v4586 = vsel %vm2599, %v4532, 0.0
    %4587 = vadd.xlane.f32.xlu0 %v4586
    %v4588 = vpop.xlane.xlu0 %4587
    %v4589 = vsel %vm2599, %v4537, 0.0
    %4590 = vadd.xlane.f32.xlu0 %v4589
    %v4591 = vpop.xlane.xlu0 %4590
    %v4592 = vsel %vm2599, %v4540, 0.0
    %4593 = vadd.xlane.f32.xlu0 %v4592
    %v4594 = vpop.xlane.xlu0 %4593
    %v4595 = vsel %vm2599, %v4545, 0.0
    %4596 = vadd.xlane.f32.xlu0 %v4595
    %v4597 = vpop.xlane.xlu0 %4596
    %v4598 = vsel %vm2599, %v4548, 0.0
    %4599 = vadd.xlane.f32.xlu0 %v4598
    %v4600 = vpop.xlane.xlu0 %4599
    %v4601 = vsel %vm2599, %v4553, 0.0
    %4602 = vadd.xlane.f32.xlu0 %v4601
    %v4603 = vpop.xlane.xlu0 %4602
    %v4604 = vsel %vm2599, %v4556, 0.0
    %4605 = vadd.xlane.f32.xlu0 %v4604
    %v4606 = vpop.xlane.xlu0 %4605
    %v4607 = vmul.f32 %v4561, 0.015625
    %v4608 = vmul.f32 %v4564, 0.015625
    %v4609 = vmul.f32 %v4567, 0.015625
    %v4610 = vmul.f32 %v4570, 0.015625
    %v4611 = vmul.f32 %v4573, 0.015625
    %v4612 = vmul.f32 %v4576, 0.015625
    %v4613 = vmul.f32 %v4579, 0.015625
    %v4614 = vmul.f32 %v4582, 0.015625
    %v4615 = vmul.f32 %v4585, 0.015625
    %v4616 = vmul.f32 %v4588, 0.015625
    %v4617 = vmul.f32 %v4591, 0.015625
    %v4618 = vmul.f32 %v4594, 0.015625
    %v4619 = vmul.f32 %v4597, 0.015625
    %v4620 = vmul.f32 %v4600, 0.015625
    %v4621 = vmul.f32 %v4603, 0.015625
    %v4622 = vmul.f32 %v4606, 0.015625
    %s4623 = scalar_lea.vmem %s4, 128
    %4624 = vst.msk [vmem:[%s4623] sm:$0xff] %vm2664, %v4607
    %4625 = vst.msk [vmem:[%s4623 + $0x8] sm:$0xff] %vm2664, %v4608
    %4626 = vst.msk [vmem:[%s4623 + $0x10] sm:$0xff] %vm2664, %v4609
    %4627 = vst.msk [vmem:[%s4623 + $0x18] sm:$0xff] %vm2664, %v4610
    %4628 = vst.msk [vmem:[%s4623 + $0x20] sm:$0xff] %vm2664, %v4611
    %4629 = vst.msk [vmem:[%s4623 + $0x28] sm:$0xff] %vm2664, %v4612
    %4630 = vst.msk [vmem:[%s4623 + $0x30] sm:$0xff] %vm2664, %v4613
    %4631 = vst.msk [vmem:[%s4623 + $0x38] sm:$0xff] %vm2664, %v4614
    %4632 = vst.msk [vmem:[%s4623 + $0x40] sm:$0xff] %vm2664, %v4615
    %4633 = vst.msk [vmem:[%s4623 + $0x48] sm:$0xff] %vm2664, %v4616
    %4634 = vst.msk [vmem:[%s4623 + $0x50] sm:$0xff] %vm2664, %v4617
    %4635 = vst.msk [vmem:[%s4623 + $0x58] sm:$0xff] %vm2664, %v4618
    %4636 = vst.msk [vmem:[%s4623 + $0x60] sm:$0xff] %vm2664, %v4619
    %4637 = vst.msk [vmem:[%s4623 + $0x68] sm:$0xff] %vm2664, %v4620
    %4638 = vst.msk [vmem:[%s4623 + $0x70] sm:$0xff] %vm2664, %v4621
    %4639 = vst.msk [vmem:[%s4623 + $0x78] sm:$0xff] %vm2664, %v4622
    %v4640 = vadd.f32 %v4497, %v2681
    %v4642 = vsel %vm2599, %v4640, 0
    %4644 = vmatprep.subr.mxu0 0.0
    %4645 = vmatpush1.msra.mxu0 %v151
    %4646 = vmatprep.subr.mxu0 0.0
    %4647 = vmatpush1.msra.mxu0 %v152
    %4648 = vmatprep.subr.mxu0 0.0
    %4649 = vmatpush1.msra.mxu0 %v153
    %4650 = vmatprep.subr.mxu0 0.0
    %4651 = vmatpush1.msra.mxu0 %v154
    %4652 = vmatprep.subr.mxu0 0.0
    %4653 = vmatpush1.msra.mxu0 %v155
    %4654 = vmatprep.subr.mxu0 0.0
    %4655 = vmatpush1.msra.mxu0 %v156
    %4656 = vmatprep.subr.mxu0 0.0
    %4657 = vmatpush1.msra.mxu0 %v157
    %4658 = vmatprep.subr.mxu0 0.0
    %4659 = vmatpush1.msra.mxu0 %v158
    %4660 = vmatprep.subr.mxu0 0.0
    %4661 = vmatpush1.msra.mxu0 0.0
    %4662 = vmatprep.subr.mxu0 0.0
    %4663 = vmatpush1.msra.mxu0 0.0
    %4664 = vmatprep.subr.mxu0 0.0
    %4665 = vmatpush1.msra.mxu0 0.0
    %4666 = vmatprep.subr.mxu0 0.0
    %4667 = vmatpush1.msra.mxu0 0.0
    %4668 = vmatprep.subr.mxu0 0.0
    %4669 = vmatpush1.msra.mxu0 0.0
    %4670 = vmatprep.subr.mxu0 0.0
    %4671 = vmatpush1.msra.mxu0 0.0
    %4672 = vmatprep.subr.mxu0 0.0
    %4673 = vmatpush1.msra.mxu0 0.0
    %4674 = vmatprep.subr.mxu0 0.0
    %4675 = vmatpush1.msra.mxu0 0.0
    %4676 = vmatprep.subr.mxu0 0.0
    %4677 = vmatpush1.msra.mxu0 0.0
    %4678 = vmatprep.subr.mxu0 0.0
    %4679 = vmatpush1.msra.mxu0 0.0
    %4680 = vmatprep.subr.mxu0 0.0
    %4681 = vmatpush1.msra.mxu0 0.0
    %4682 = vmatprep.subr.mxu0 0.0
    %4683 = vmatpush1.msra.mxu0 0.0
    %4684 = vmatprep.subr.mxu0 0.0
    %4685 = vmatpush1.msra.mxu0 0.0
    %4686 = vmatprep.subr.mxu0 0.0
    %4687 = vmatpush1.msra.mxu0 0.0
    %4688 = vmatprep.subr.mxu0 0.0
    %4689 = vmatpush1.msra.mxu0 0.0
    %4690 = vmatprep.subr.mxu0 0.0
    %4691 = vmatpush1.msra.mxu0 0.0
    %4692 = vmatprep.subr.mxu0 0.0
    %4693 = vmatpush1.msra.mxu0 0.0
    %4694 = vmatprep.subr.mxu0 0.0
    %4695 = vmatpush1.msra.mxu0 0.0
    %4696 = vmatprep.subr.mxu0 0.0
    %4697 = vmatpush1.msra.mxu0 0.0
    %4698 = vmatprep.subr.mxu0 0.0
    %4699 = vmatpush1.msra.mxu0 0.0
    %4700 = vmatprep.subr.mxu0 0.0
    %4701 = vmatpush1.msra.mxu0 0.0
    %4702 = vmatprep.subr.mxu0 0.0
    %4703 = vmatpush1.msra.mxu0 0.0
    %4704 = vmatprep.subr.mxu0 0.0
    %4705 = vmatpush1.msra.mxu0 0.0
    %4706 = vmatprep.subr.mxu0 0.0
    %4707 = vmatpush1.msra.mxu0 0.0
    %4708 = vmatprep.mubr.f32.mxu0 0.0
    %4709 = vmatmul.mubr.f32.gmra.mrb[0].mxu0 %v4642
    %v4710 = vpop.f32.mrb[0].mxu0
    %v4711 = vadd.f32 0.0, %v4710
    %v4712 = vpop.f32.mrb[0].mxu0
    %4713 = vdwg.mxu0
    %v4714 = vtanh.pop %v4711
    %s4715 = scalar_lea.vmem [#allocation3], 1
    %4716 = vst [vmem:[%s4715] sm:$0x1] %v4714
    // Predicated region
    $region18: #{tpu_custom_call.1} parent=1 // pred_check
      _
    $region19: #{tpu_custom_call.1} parent=1 // pred_check_branch
      %4718 = sbr.rel (0) target = $region21
    $region20: #{tpu_custom_call.1} parent=1 // pred_region
      _
    $region21: #{tpu_custom_call.1} parent=1 // pred_fallthru
      _
    // Predicated region
    $region22: #{tpu_custom_call.1} parent=1 // pred_check
      _
    $region23: #{tpu_custom_call.1} parent=1 // pred_check_branch
      %4720 = sbr.rel (0) target = $region25
    $region24: #{tpu_custom_call.1} parent=1 // pred_region
      %s4722 = ssub.s32 32, 32
      %4723 = vsyncadd [#allocation4], %s4722
      %s4724 = sshll.u32 [#allocation3], 4
      %s4725 = int_to_ptr.vmem [resolvable:$true] %s4724
      %4730 = dma.vmem_to_hbm [thread:$0]  %s4725, 32, %s5, [#allocation4], 16, 16, 1
    $region25: #{tpu_custom_call.1} parent=1 // pred_fallthru
      _
    // Predicated region
    $region26: #{tpu_custom_call.1} parent=1 // pred_check
      _
    $region27: #{tpu_custom_call.1} parent=1 // pred_check_branch
      %4732 = sbr.rel (0) target = $region29
    $region28: #{tpu_custom_call.1} parent=1 // pred_region
      _
    $region29: #{tpu_custom_call.1} parent=1 // pred_fallthru
      _
    // Predicated region
    $region30: #{tpu_custom_call.1} parent=1 // pred_check
      _
    $region31: #{tpu_custom_call.1} parent=1 // pred_check_branch
      %4734 = sbr.rel (0) target = $region33
    $region32: #{tpu_custom_call.1} parent=1 // pred_region
      %4735 = dma.done [#allocation4], 32
    $region33: #{tpu_custom_call.1} parent=1 // pred_fallthru
      _
    %4736 = vsyncpa [#allocation4], 1

</llo_original>
